<compile_context>
chip_gen: v6e
topology: v6e:2x2x1
jax: 0.10.0
libtpu: 0.0.40
codegen_flags: <defaults>
</compile_context>

<pallas_src>
import functools

import numpy as np
import jax
import jax.numpy as jnp
from jax import lax
from jax.experimental import pallas as pl
from jax.experimental.pallas import tpu as pltpu


def _round_up(a, m):
    return ((a + m - 1) // m) * m


def _head_kernel(x_ref, w_ref, out_ref, *, B, ZZ, Zw, Wp, L):
    """One grid step = B batch elements.

    x_ref:   (B, C+1, Lp)    bf16  flattened zero-padded search frame + interior
                                   indicator channel (Lp covers every tap's slice,
                                   multiple of 128).
    w_ref:   (B, ZZ, 3, C+1) bf16  per-batch per-tap fused weights
                                   (row 0 = cls, rows 1-2 = loc; indicator column
                                   carries the search-conv bias, centre tap also
                                   carries the loc_adjust bias; out_scale folded).
    out_ref: (B, 3, L)       f32   row-major (H, Wp) output grid, lane-dense.
    """
    for b in range(B):                        # small static batch block (<= 8)
        acc = None
        for t in range(ZZ):                   # accumulate the Zh*Zw correlation taps
            dy, dx = divmod(t, Zw)
            start = dy * Wp + dx               # static lane offset of this tap's view
            xs = x_ref[b, :, start:start + L]  # (C+1, L) bf16, in-VMEM shifted view
            wt = w_ref[b, t]                   # (3, C+1)  bf16
            d = jnp.dot(wt, xs, preferred_element_type=jnp.float32)
            acc = d if acc is None else acc + d
        out_ref[b] = acc


def siamrpn_head_forward(z, x, params, out_scale=0.001, block_batch=None,
                         vmem_limit_bytes=32 * 1024 * 1024):
    """z: (N, C, Zh, Zw), x: (N, C, H, W) in NCHW. Returns (cls, loc) in NCHW."""
    Wt, bt, Ws, bs, Wa, ba = [jnp.asarray(p, jnp.float32) for p in params]
    z = jnp.asarray(z, jnp.float32)
    x = jnp.asarray(x, jnp.float32)

    N, C, Zh, Zw = z.shape
    Nx, Cx, H, W = x.shape
    assert N == Nx and C == Cx, "xcorr requires matching batch / channels"
    assert Zh == Zw and Zh % 2 == 1, "square, odd-sized template assumed"
    pad = Zh // 2
    ZZ = Zh * Zw
    Hp, Wp = H + 2 * pad, W + 2 * pad
    C1 = C + 1                                   # data channels + interior indicator
    f32, bf16 = jnp.float32, jnp.bfloat16

    # Lane-dense geometry: every per-tap slice has length L (multiple of 128);
    # the flat padded frame is long enough for the furthest tap's slice.
    L = _round_up(H * Wp, 128)
    Lp = _round_up((Zh - 1) * Wp + (Zw - 1) + L, 128)

    # -------- per-batch fused weights (tiny tensors; folded in f32, streamed bf16) ------
    zf = z.reshape(N, C, ZZ)
    template = jnp.einsum('oc,ncz->noz', Wt, zf) + bt[None, :, None]        # (N, 2C, ZZ)
    t_r = template.reshape(N, 2, C, ZZ)
    w_loc = out_scale * jnp.einsum('ab,nbcz,cd->nzad', Wa, t_r, Ws)          # (N, ZZ, 2, C)
    aux_loc = out_scale * jnp.einsum('ab,nbcz,c->nza', Wa, t_r, bs)          # (N, ZZ, 2)
    center = pad * Zw + pad                      # centre tap: indicator == 1 everywhere valid
    aux_loc = aux_loc.at[:, center, :].add(out_scale * ba)
    w_cls = out_scale * jnp.transpose(zf, (0, 2, 1))                         # (N, ZZ, C)
    row_cls = jnp.concatenate([w_cls[:, :, None, :],
                               jnp.zeros((N, ZZ, 1, 1), f32)], axis=-1)      # (N, ZZ, 1, C+1)
    rows_loc = jnp.concatenate([w_loc, aux_loc[..., None]], axis=-1)         # (N, ZZ, 2, C+1)
    wtap = jnp.concatenate([row_cls, rows_loc], axis=2).astype(bf16)         # (N, ZZ, 3, C+1)

    # -------- streamed operand: flattened zero-padded frame + indicator channel ---------
    xpad = jnp.pad(x, ((0, 0), (0, 0), (pad, pad), (pad, pad)))              # (N, C, Hp, Wp)
    xflat = xpad.reshape(N, C, Hp * Wp)
    ind = np.zeros((Hp, Wp), np.float32)
    ind[pad:pad + H, pad:pad + W] = 1.0
    ind_flat = jnp.broadcast_to(jnp.asarray(ind.reshape(1, 1, Hp * Wp)), (N, 1, Hp * Wp))
    xall = jnp.concatenate([xflat, ind_flat], axis=1)                        # (N, C+1, Hp*Wp)
    xall = jnp.pad(xall, ((0, 0), (0, 0), (0, Lp - Hp * Wp))).astype(bf16)   # (N, C+1, Lp)

    # -------- batch blocking: >= 2 grid steps (v7x dual TC) and VMEM kept in budget -----
    if block_batch is None:
        c1_pad = _round_up(max(C1, 16), 16)          # bf16 sublane packing estimate
        lane_pad = _round_up(max(C1, 128), 128)

        def step_bytes(b):
            xb = b * c1_pad * Lp * 2                 # x block (bf16)
            wb = b * ZZ * 16 * lane_pad * 2          # (3,C+1) tiles padded to (16,lane) bf16
            ob = b * 8 * L * 4                       # (3,L) output tile padded to 8 sublanes
            return 2 * (xb + wb + ob)                # double buffered

        budget = min(vmem_limit_bytes // 2, 24 * 1024 * 1024)
        bmax = max(1, min(8, N // 2)) if N >= 2 else 1
        B = 1
        for b in range(1, bmax + 1):
            if step_bytes(b) <= budget:
                B = b
    else:
        B = max(1, int(block_batch))

    Npad = _round_up(N, B)
    if Npad != N:
        xall = jnp.pad(xall, ((0, Npad - N), (0, 0), (0, 0)))
        wtap = jnp.pad(wtap, ((0, Npad - N), (0, 0), (0, 0), (0, 0)))

    kernel = functools.partial(_head_kernel, B=B, ZZ=ZZ, Zw=Zw, Wp=Wp, L=L)

    out = pl.pallas_call(
        kernel,
        out_shape=jax.ShapeDtypeStruct((Npad, 3, L), f32),
        grid_spec=pltpu.PrefetchScalarGridSpec(
            num_scalar_prefetch=0,
            grid=(Npad // B,),
            in_specs=[
                pl.BlockSpec((B, C1, Lp), lambda n: (n, 0, 0)),
                pl.BlockSpec((B, ZZ, 3, C1), lambda n: (n, 0, 0, 0)),
            ],
            out_specs=pl.BlockSpec((B, 3, L), lambda n: (n, 0, 0)),
        ),
        compiler_params=pltpu.CompilerParams(
            dimension_semantics=("parallel",),
            vmem_limit_bytes=int(vmem_limit_bytes)),
    )(xall, wtap)

    out = out[:N, :, :H * Wp].reshape(N, 3, H, Wp)[:, :, :, :W]
    cls = out[:, 0:1]
    loc = out[:, 1:3]
    return cls, loc


# ----------------------------- pure-JAX reference -----------------------------
def _conv1x1_ref(x, w, b):
    return jnp.einsum('oc,nchw->nohw', w, x) + b[None, :, None, None]


def _rpn_fast_xcorr_ref(kernel, x):
    N, Kc, Zh, Zw = kernel.shape
    _, C, H, W = x.shape
    pk = kernel.reshape(-1, C, Zh, Zw)
    px = x.reshape(1, -1, H, W)
    p = Zh // 2
    po = lax.conv_general_dilated(
        px, pk, window_strides=(1, 1), padding=[(p, p), (p, p)],
        dimension_numbers=('NCHW', 'OIHW', 'NCHW'), feature_group_count=N)
    return po.reshape(N, -1, po.shape[2], po.shape[3])


def reference_forward(z, x, params, out_scale):
    Wt, bt, Ws, bs, Wa, ba = params
    template = _conv1x1_ref(z, Wt, bt)
    search = _conv1x1_ref(x, Ws, bs)
    cls = _rpn_fast_xcorr_ref(z, x) * out_scale
    loc = _rpn_fast_xcorr_ref(template, search)
    loc = _conv1x1_ref(loc, Wa, ba) * out_scale
    return cls, loc
# TODO(synk): self.norm = nn.BatchNorm2d(2) is defined in __init__ but never
# used in forward(), so it is intentionally not implemented.


if __name__ == "__main__":
    key = jax.random.PRNGKey(0)
    N, C, Zh, Zw, H, W = 2, 8, 5, 5, 16, 16
    out_scale = 0.001
    ks = jax.random.split(key, 8)

    z = jax.random.normal(ks[0], (N, C, Zh, Zw), jnp.float32)
    x = jax.random.normal(ks[1], (N, C, H, W), jnp.float32)
    Wt = jax.random.normal(ks[2], (2 * C, C), jnp.float32) * 0.1   # template_cls_conv
    bt = jax.random.normal(ks[3], (2 * C,), jnp.float32) * 0.05
    Ws = jax.random.normal(ks[4], (C, C), jnp.float32) * 0.1       # search_cls_conv
    bs = jax.random.normal(ks[5], (C,), jnp.float32) * 0.05
    Wa = jax.random.normal(ks[6], (2, 2), jnp.float32) * 0.1       # loc_adjust
    ba = jax.random.normal(ks[7], (2,), jnp.float32) * 0.05
    params = (Wt, bt, Ws, bs, Wa, ba)

    cls_out, loc_out = siamrpn_head_forward(z, x, params, out_scale)
    jax.block_until_ready((cls_out, loc_out))

    cls_ref, loc_ref = reference_forward(z, x, params, out_scale)
    np.testing.assert_allclose(np.asarray(cls_out), np.asarray(cls_ref),
                               rtol=2e-2, atol=2e-3)
    np.testing.assert_allclose(np.asarray(loc_out), np.asarray(loc_ref),
                               rtol=2e-2, atol=2e-3)
    print("KERNEL_OK")
</pallas_src>

<mosaic_0001>
module attributes {stable_mosaic.version = 11 : i64} {
  func.func @_head_kernel(%arg0: i32, %arg1: memref<1x9x512xbf16, #tpu.memory_space<vmem>>, %arg2: memref<1x25x3x9xbf16, #tpu.memory_space<vmem>>, %arg3: memref<1x3x384xf32, #tpu.memory_space<vmem>>) attributes {dimension_semantics = [#tpu.dimension_semantics<parallel>], iteration_bounds = array<i64: 2>, scalar_prefetch = 0 : i64, scratch_operands = 0 : i64, tpu.core_type = #tpu.core_type<tc>, window_params = [{transform_indices = @transform_0, window_bounds = array<i64: 1, 9, 512>}, {transform_indices = @transform_1, window_bounds = array<i64: 1, 25, 3, 9>}, {transform_indices = @transform_2, window_bounds = array<i64: 1, 3, 384>}]} {
    %c0 = arith.constant 0 : index
    %c0_0 = arith.constant 0 : index
    %c0_1 = arith.constant 0 : index
    %0 = vector.load %arg1[%c0, %c0_0, %c0_1] : memref<1x9x512xbf16, #tpu.memory_space<vmem>>, vector<1x9x384xbf16>
    %1 = vector.shape_cast %0 : vector<1x9x384xbf16> to vector<9x384xbf16>
    %c0_2 = arith.constant 0 : index
    %c0_3 = arith.constant 0 : index
    %c0_4 = arith.constant 0 : index
    %c0_5 = arith.constant 0 : index
    %2 = vector.load %arg2[%c0_2, %c0_3, %c0_4, %c0_5] : memref<1x25x3x9xbf16, #tpu.memory_space<vmem>>, vector<1x1x3x9xbf16>
    %3 = vector.shape_cast %2 : vector<1x1x3x9xbf16> to vector<3x9xbf16>
    %cst = arith.constant dense<0.000000e+00> : vector<3x384xf32>
    %4 = tpu.matmul %3, %1, %cst {dimension_numbers = #tpu.dot_dimension_numbers<[1], [0], [0], [1], [0, 0, 1, 1], [], []>} : vector<3x9xbf16>, vector<9x384xbf16>, vector<3x384xf32> -> vector<3x384xf32>
    %c0_6 = arith.constant 0 : index
    %c0_7 = arith.constant 0 : index
    %c1 = arith.constant 1 : index
    %5 = vector.load %arg1[%c0_6, %c0_7, %c1] : memref<1x9x512xbf16, #tpu.memory_space<vmem>>, vector<1x9x384xbf16>
    %6 = vector.shape_cast %5 : vector<1x9x384xbf16> to vector<9x384xbf16>
    %c0_8 = arith.constant 0 : index
    %c1_9 = arith.constant 1 : index
    %c0_10 = arith.constant 0 : index
    %c0_11 = arith.constant 0 : index
    %7 = vector.load %arg2[%c0_8, %c1_9, %c0_10, %c0_11] : memref<1x25x3x9xbf16, #tpu.memory_space<vmem>>, vector<1x1x3x9xbf16>
    %8 = vector.shape_cast %7 : vector<1x1x3x9xbf16> to vector<3x9xbf16>
    %cst_12 = arith.constant dense<0.000000e+00> : vector<3x384xf32>
    %9 = tpu.matmul %8, %6, %cst_12 {dimension_numbers = #tpu.dot_dimension_numbers<[1], [0], [0], [1], [0, 0, 1, 1], [], []>} : vector<3x9xbf16>, vector<9x384xbf16>, vector<3x384xf32> -> vector<3x384xf32>
    %10 = arith.addf %4, %9 : vector<3x384xf32>
    %c0_13 = arith.constant 0 : index
    %c0_14 = arith.constant 0 : index
    %c2 = arith.constant 2 : index
    %11 = vector.load %arg1[%c0_13, %c0_14, %c2] : memref<1x9x512xbf16, #tpu.memory_space<vmem>>, vector<1x9x384xbf16>
    %12 = vector.shape_cast %11 : vector<1x9x384xbf16> to vector<9x384xbf16>
    %c0_15 = arith.constant 0 : index
    %c2_16 = arith.constant 2 : index
    %c0_17 = arith.constant 0 : index
    %c0_18 = arith.constant 0 : index
    %13 = vector.load %arg2[%c0_15, %c2_16, %c0_17, %c0_18] : memref<1x25x3x9xbf16, #tpu.memory_space<vmem>>, vector<1x1x3x9xbf16>
    %14 = vector.shape_cast %13 : vector<1x1x3x9xbf16> to vector<3x9xbf16>
    %cst_19 = arith.constant dense<0.000000e+00> : vector<3x384xf32>
    %15 = tpu.matmul %14, %12, %cst_19 {dimension_numbers = #tpu.dot_dimension_numbers<[1], [0], [0], [1], [0, 0, 1, 1], [], []>} : vector<3x9xbf16>, vector<9x384xbf16>, vector<3x384xf32> -> vector<3x384xf32>
    %16 = arith.addf %10, %15 : vector<3x384xf32>
    %c0_20 = arith.constant 0 : index
    %c0_21 = arith.constant 0 : index
    %c3 = arith.constant 3 : index
    %17 = vector.load %arg1[%c0_20, %c0_21, %c3] : memref<1x9x512xbf16, #tpu.memory_space<vmem>>, vector<1x9x384xbf16>
    %18 = vector.shape_cast %17 : vector<1x9x384xbf16> to vector<9x384xbf16>
    %c0_22 = arith.constant 0 : index
    %c3_23 = arith.constant 3 : index
    %c0_24 = arith.constant 0 : index
    %c0_25 = arith.constant 0 : index
    %19 = vector.load %arg2[%c0_22, %c3_23, %c0_24, %c0_25] : memref<1x25x3x9xbf16, #tpu.memory_space<vmem>>, vector<1x1x3x9xbf16>
    %20 = vector.shape_cast %19 : vector<1x1x3x9xbf16> to vector<3x9xbf16>
    %cst_26 = arith.constant dense<0.000000e+00> : vector<3x384xf32>
    %21 = tpu.matmul %20, %18, %cst_26 {dimension_numbers = #tpu.dot_dimension_numbers<[1], [0], [0], [1], [0, 0, 1, 1], [], []>} : vector<3x9xbf16>, vector<9x384xbf16>, vector<3x384xf32> -> vector<3x384xf32>
    %22 = arith.addf %16, %21 : vector<3x384xf32>
    %c0_27 = arith.constant 0 : index
    %c0_28 = arith.constant 0 : index
    %c4 = arith.constant 4 : index
    %23 = vector.load %arg1[%c0_27, %c0_28, %c4] : memref<1x9x512xbf16, #tpu.memory_space<vmem>>, vector<1x9x384xbf16>
    %24 = vector.shape_cast %23 : vector<1x9x384xbf16> to vector<9x384xbf16>
    %c0_29 = arith.constant 0 : index
    %c4_30 = arith.constant 4 : index
    %c0_31 = arith.constant 0 : index
    %c0_32 = arith.constant 0 : index
    %25 = vector.load %arg2[%c0_29, %c4_30, %c0_31, %c0_32] : memref<1x25x3x9xbf16, #tpu.memory_space<vmem>>, vector<1x1x3x9xbf16>
    %26 = vector.shape_cast %25 : vector<1x1x3x9xbf16> to vector<3x9xbf16>
    %cst_33 = arith.constant dense<0.000000e+00> : vector<3x384xf32>
    %27 = tpu.matmul %26, %24, %cst_33 {dimension_numbers = #tpu.dot_dimension_numbers<[1], [0], [0], [1], [0, 0, 1, 1], [], []>} : vector<3x9xbf16>, vector<9x384xbf16>, vector<3x384xf32> -> vector<3x384xf32>
    %28 = arith.addf %22, %27 : vector<3x384xf32>
    %c0_34 = arith.constant 0 : index
    %c0_35 = arith.constant 0 : index
    %c20 = arith.constant 20 : index
    %29 = vector.load %arg1[%c0_34, %c0_35, %c20] : memref<1x9x512xbf16, #tpu.memory_space<vmem>>, vector<1x9x384xbf16>
    %30 = vector.shape_cast %29 : vector<1x9x384xbf16> to vector<9x384xbf16>
    %c0_36 = arith.constant 0 : index
    %c5 = arith.constant 5 : index
    %c0_37 = arith.constant 0 : index
    %c0_38 = arith.constant 0 : index
    %31 = vector.load %arg2[%c0_36, %c5, %c0_37, %c0_38] : memref<1x25x3x9xbf16, #tpu.memory_space<vmem>>, vector<1x1x3x9xbf16>
    %32 = vector.shape_cast %31 : vector<1x1x3x9xbf16> to vector<3x9xbf16>
    %cst_39 = arith.constant dense<0.000000e+00> : vector<3x384xf32>
    %33 = tpu.matmul %32, %30, %cst_39 {dimension_numbers = #tpu.dot_dimension_numbers<[1], [0], [0], [1], [0, 0, 1, 1], [], []>} : vector<3x9xbf16>, vector<9x384xbf16>, vector<3x384xf32> -> vector<3x384xf32>
    %34 = arith.addf %28, %33 : vector<3x384xf32>
    %c0_40 = arith.constant 0 : index
    %c0_41 = arith.constant 0 : index
    %c21 = arith.constant 21 : index
    %35 = vector.load %arg1[%c0_40, %c0_41, %c21] : memref<1x9x512xbf16, #tpu.memory_space<vmem>>, vector<1x9x384xbf16>
    %36 = vector.shape_cast %35 : vector<1x9x384xbf16> to vector<9x384xbf16>
    %c0_42 = arith.constant 0 : index
    %c6 = arith.constant 6 : index
    %c0_43 = arith.constant 0 : index
    %c0_44 = arith.constant 0 : index
    %37 = vector.load %arg2[%c0_42, %c6, %c0_43, %c0_44] : memref<1x25x3x9xbf16, #tpu.memory_space<vmem>>, vector<1x1x3x9xbf16>
    %38 = vector.shape_cast %37 : vector<1x1x3x9xbf16> to vector<3x9xbf16>
    %cst_45 = arith.constant dense<0.000000e+00> : vector<3x384xf32>
    %39 = tpu.matmul %38, %36, %cst_45 {dimension_numbers = #tpu.dot_dimension_numbers<[1], [0], [0], [1], [0, 0, 1, 1], [], []>} : vector<3x9xbf16>, vector<9x384xbf16>, vector<3x384xf32> -> vector<3x384xf32>
    %40 = arith.addf %34, %39 : vector<3x384xf32>
    %c0_46 = arith.constant 0 : index
    %c0_47 = arith.constant 0 : index
    %c22 = arith.constant 22 : index
    %41 = vector.load %arg1[%c0_46, %c0_47, %c22] : memref<1x9x512xbf16, #tpu.memory_space<vmem>>, vector<1x9x384xbf16>
    %42 = vector.shape_cast %41 : vector<1x9x384xbf16> to vector<9x384xbf16>
    %c0_48 = arith.constant 0 : index
    %c7 = arith.constant 7 : index
    %c0_49 = arith.constant 0 : index
    %c0_50 = arith.constant 0 : index
    %43 = vector.load %arg2[%c0_48, %c7, %c0_49, %c0_50] : memref<1x25x3x9xbf16, #tpu.memory_space<vmem>>, vector<1x1x3x9xbf16>
    %44 = vector.shape_cast %43 : vector<1x1x3x9xbf16> to vector<3x9xbf16>
    %cst_51 = arith.constant dense<0.000000e+00> : vector<3x384xf32>
    %45 = tpu.matmul %44, %42, %cst_51 {dimension_numbers = #tpu.dot_dimension_numbers<[1], [0], [0], [1], [0, 0, 1, 1], [], []>} : vector<3x9xbf16>, vector<9x384xbf16>, vector<3x384xf32> -> vector<3x384xf32>
    %46 = arith.addf %40, %45 : vector<3x384xf32>
    %c0_52 = arith.constant 0 : index
    %c0_53 = arith.constant 0 : index
    %c23 = arith.constant 23 : index
    %47 = vector.load %arg1[%c0_52, %c0_53, %c23] : memref<1x9x512xbf16, #tpu.memory_space<vmem>>, vector<1x9x384xbf16>
    %48 = vector.shape_cast %47 : vector<1x9x384xbf16> to vector<9x384xbf16>
    %c0_54 = arith.constant 0 : index
    %c8 = arith.constant 8 : index
    %c0_55 = arith.constant 0 : index
    %c0_56 = arith.constant 0 : index
    %49 = vector.load %arg2[%c0_54, %c8, %c0_55, %c0_56] : memref<1x25x3x9xbf16, #tpu.memory_space<vmem>>, vector<1x1x3x9xbf16>
    %50 = vector.shape_cast %49 : vector<1x1x3x9xbf16> to vector<3x9xbf16>
    %cst_57 = arith.constant dense<0.000000e+00> : vector<3x384xf32>
    %51 = tpu.matmul %50, %48, %cst_57 {dimension_numbers = #tpu.dot_dimension_numbers<[1], [0], [0], [1], [0, 0, 1, 1], [], []>} : vector<3x9xbf16>, vector<9x384xbf16>, vector<3x384xf32> -> vector<3x384xf32>
    %52 = arith.addf %46, %51 : vector<3x384xf32>
    %c0_58 = arith.constant 0 : index
    %c0_59 = arith.constant 0 : index
    %c24 = arith.constant 24 : index
    %53 = vector.load %arg1[%c0_58, %c0_59, %c24] : memref<1x9x512xbf16, #tpu.memory_space<vmem>>, vector<1x9x384xbf16>
    %54 = vector.shape_cast %53 : vector<1x9x384xbf16> to vector<9x384xbf16>
    %c0_60 = arith.constant 0 : index
    %c9 = arith.constant 9 : index
    %c0_61 = arith.constant 0 : index
    %c0_62 = arith.constant 0 : index
    %55 = vector.load %arg2[%c0_60, %c9, %c0_61, %c0_62] : memref<1x25x3x9xbf16, #tpu.memory_space<vmem>>, vector<1x1x3x9xbf16>
    %56 = vector.shape_cast %55 : vector<1x1x3x9xbf16> to vector<3x9xbf16>
    %cst_63 = arith.constant dense<0.000000e+00> : vector<3x384xf32>
    %57 = tpu.matmul %56, %54, %cst_63 {dimension_numbers = #tpu.dot_dimension_numbers<[1], [0], [0], [1], [0, 0, 1, 1], [], []>} : vector<3x9xbf16>, vector<9x384xbf16>, vector<3x384xf32> -> vector<3x384xf32>
    %58 = arith.addf %52, %57 : vector<3x384xf32>
    %c0_64 = arith.constant 0 : index
    %c0_65 = arith.constant 0 : index
    %c40 = arith.constant 40 : index
    %59 = vector.load %arg1[%c0_64, %c0_65, %c40] : memref<1x9x512xbf16, #tpu.memory_space<vmem>>, vector<1x9x384xbf16>
    %60 = vector.shape_cast %59 : vector<1x9x384xbf16> to vector<9x384xbf16>
    %c0_66 = arith.constant 0 : index
    %c10 = arith.constant 10 : index
    %c0_67 = arith.constant 0 : index
    %c0_68 = arith.constant 0 : index
    %61 = vector.load %arg2[%c0_66, %c10, %c0_67, %c0_68] : memref<1x25x3x9xbf16, #tpu.memory_space<vmem>>, vector<1x1x3x9xbf16>
    %62 = vector.shape_cast %61 : vector<1x1x3x9xbf16> to vector<3x9xbf16>
    %cst_69 = arith.constant dense<0.000000e+00> : vector<3x384xf32>
    %63 = tpu.matmul %62, %60, %cst_69 {dimension_numbers = #tpu.dot_dimension_numbers<[1], [0], [0], [1], [0, 0, 1, 1], [], []>} : vector<3x9xbf16>, vector<9x384xbf16>, vector<3x384xf32> -> vector<3x384xf32>
    %64 = arith.addf %58, %63 : vector<3x384xf32>
    %c0_70 = arith.constant 0 : index
    %c0_71 = arith.constant 0 : index
    %c41 = arith.constant 41 : index
    %65 = vector.load %arg1[%c0_70, %c0_71, %c41] : memref<1x9x512xbf16, #tpu.memory_space<vmem>>, vector<1x9x384xbf16>
    %66 = vector.shape_cast %65 : vector<1x9x384xbf16> to vector<9x384xbf16>
    %c0_72 = arith.constant 0 : index
    %c11 = arith.constant 11 : index
    %c0_73 = arith.constant 0 : index
    %c0_74 = arith.constant 0 : index
    %67 = vector.load %arg2[%c0_72, %c11, %c0_73, %c0_74] : memref<1x25x3x9xbf16, #tpu.memory_space<vmem>>, vector<1x1x3x9xbf16>
    %68 = vector.shape_cast %67 : vector<1x1x3x9xbf16> to vector<3x9xbf16>
    %cst_75 = arith.constant dense<0.000000e+00> : vector<3x384xf32>
    %69 = tpu.matmul %68, %66, %cst_75 {dimension_numbers = #tpu.dot_dimension_numbers<[1], [0], [0], [1], [0, 0, 1, 1], [], []>} : vector<3x9xbf16>, vector<9x384xbf16>, vector<3x384xf32> -> vector<3x384xf32>
    %70 = arith.addf %64, %69 : vector<3x384xf32>
    %c0_76 = arith.constant 0 : index
    %c0_77 = arith.constant 0 : index
    %c42 = arith.constant 42 : index
    %71 = vector.load %arg1[%c0_76, %c0_77, %c42] : memref<1x9x512xbf16, #tpu.memory_space<vmem>>, vector<1x9x384xbf16>
    %72 = vector.shape_cast %71 : vector<1x9x384xbf16> to vector<9x384xbf16>
    %c0_78 = arith.constant 0 : index
    %c12 = arith.constant 12 : index
    %c0_79 = arith.constant 0 : index
    %c0_80 = arith.constant 0 : index
    %73 = vector.load %arg2[%c0_78, %c12, %c0_79, %c0_80] : memref<1x25x3x9xbf16, #tpu.memory_space<vmem>>, vector<1x1x3x9xbf16>
    %74 = vector.shape_cast %73 : vector<1x1x3x9xbf16> to vector<3x9xbf16>
    %cst_81 = arith.constant dense<0.000000e+00> : vector<3x384xf32>
    %75 = tpu.matmul %74, %72, %cst_81 {dimension_numbers = #tpu.dot_dimension_numbers<[1], [0], [0], [1], [0, 0, 1, 1], [], []>} : vector<3x9xbf16>, vector<9x384xbf16>, vector<3x384xf32> -> vector<3x384xf32>
    %76 = arith.addf %70, %75 : vector<3x384xf32>
    %c0_82 = arith.constant 0 : index
    %c0_83 = arith.constant 0 : index
    %c43 = arith.constant 43 : index
    %77 = vector.load %arg1[%c0_82, %c0_83, %c43] : memref<1x9x512xbf16, #tpu.memory_space<vmem>>, vector<1x9x384xbf16>
    %78 = vector.shape_cast %77 : vector<1x9x384xbf16> to vector<9x384xbf16>
    %c0_84 = arith.constant 0 : index
    %c13 = arith.constant 13 : index
    %c0_85 = arith.constant 0 : index
    %c0_86 = arith.constant 0 : index
    %79 = vector.load %arg2[%c0_84, %c13, %c0_85, %c0_86] : memref<1x25x3x9xbf16, #tpu.memory_space<vmem>>, vector<1x1x3x9xbf16>
    %80 = vector.shape_cast %79 : vector<1x1x3x9xbf16> to vector<3x9xbf16>
    %cst_87 = arith.constant dense<0.000000e+00> : vector<3x384xf32>
    %81 = tpu.matmul %80, %78, %cst_87 {dimension_numbers = #tpu.dot_dimension_numbers<[1], [0], [0], [1], [0, 0, 1, 1], [], []>} : vector<3x9xbf16>, vector<9x384xbf16>, vector<3x384xf32> -> vector<3x384xf32>
    %82 = arith.addf %76, %81 : vector<3x384xf32>
    %c0_88 = arith.constant 0 : index
    %c0_89 = arith.constant 0 : index
    %c44 = arith.constant 44 : index
    %83 = vector.load %arg1[%c0_88, %c0_89, %c44] : memref<1x9x512xbf16, #tpu.memory_space<vmem>>, vector<1x9x384xbf16>
    %84 = vector.shape_cast %83 : vector<1x9x384xbf16> to vector<9x384xbf16>
    %c0_90 = arith.constant 0 : index
    %c14 = arith.constant 14 : index
    %c0_91 = arith.constant 0 : index
    %c0_92 = arith.constant 0 : index
    %85 = vector.load %arg2[%c0_90, %c14, %c0_91, %c0_92] : memref<1x25x3x9xbf16, #tpu.memory_space<vmem>>, vector<1x1x3x9xbf16>
    %86 = vector.shape_cast %85 : vector<1x1x3x9xbf16> to vector<3x9xbf16>
    %cst_93 = arith.constant dense<0.000000e+00> : vector<3x384xf32>
    %87 = tpu.matmul %86, %84, %cst_93 {dimension_numbers = #tpu.dot_dimension_numbers<[1], [0], [0], [1], [0, 0, 1, 1], [], []>} : vector<3x9xbf16>, vector<9x384xbf16>, vector<3x384xf32> -> vector<3x384xf32>
    %88 = arith.addf %82, %87 : vector<3x384xf32>
    %c0_94 = arith.constant 0 : index
    %c0_95 = arith.constant 0 : index
    %c60 = arith.constant 60 : index
    %89 = vector.load %arg1[%c0_94, %c0_95, %c60] : memref<1x9x512xbf16, #tpu.memory_space<vmem>>, vector<1x9x384xbf16>
    %90 = vector.shape_cast %89 : vector<1x9x384xbf16> to vector<9x384xbf16>
    %c0_96 = arith.constant 0 : index
    %c15 = arith.constant 15 : index
    %c0_97 = arith.constant 0 : index
    %c0_98 = arith.constant 0 : index
    %91 = vector.load %arg2[%c0_96, %c15, %c0_97, %c0_98] : memref<1x25x3x9xbf16, #tpu.memory_space<vmem>>, vector<1x1x3x9xbf16>
    %92 = vector.shape_cast %91 : vector<1x1x3x9xbf16> to vector<3x9xbf16>
    %cst_99 = arith.constant dense<0.000000e+00> : vector<3x384xf32>
    %93 = tpu.matmul %92, %90, %cst_99 {dimension_numbers = #tpu.dot_dimension_numbers<[1], [0], [0], [1], [0, 0, 1, 1], [], []>} : vector<3x9xbf16>, vector<9x384xbf16>, vector<3x384xf32> -> vector<3x384xf32>
    %94 = arith.addf %88, %93 : vector<3x384xf32>
    %c0_100 = arith.constant 0 : index
    %c0_101 = arith.constant 0 : index
    %c61 = arith.constant 61 : index
    %95 = vector.load %arg1[%c0_100, %c0_101, %c61] : memref<1x9x512xbf16, #tpu.memory_space<vmem>>, vector<1x9x384xbf16>
    %96 = vector.shape_cast %95 : vector<1x9x384xbf16> to vector<9x384xbf16>
    %c0_102 = arith.constant 0 : index
    %c16 = arith.constant 16 : index
    %c0_103 = arith.constant 0 : index
    %c0_104 = arith.constant 0 : index
    %97 = vector.load %arg2[%c0_102, %c16, %c0_103, %c0_104] : memref<1x25x3x9xbf16, #tpu.memory_space<vmem>>, vector<1x1x3x9xbf16>
    %98 = vector.shape_cast %97 : vector<1x1x3x9xbf16> to vector<3x9xbf16>
    %cst_105 = arith.constant dense<0.000000e+00> : vector<3x384xf32>
    %99 = tpu.matmul %98, %96, %cst_105 {dimension_numbers = #tpu.dot_dimension_numbers<[1], [0], [0], [1], [0, 0, 1, 1], [], []>} : vector<3x9xbf16>, vector<9x384xbf16>, vector<3x384xf32> -> vector<3x384xf32>
    %100 = arith.addf %94, %99 : vector<3x384xf32>
    %c0_106 = arith.constant 0 : index
    %c0_107 = arith.constant 0 : index
    %c62 = arith.constant 62 : index
    %101 = vector.load %arg1[%c0_106, %c0_107, %c62] : memref<1x9x512xbf16, #tpu.memory_space<vmem>>, vector<1x9x384xbf16>
    %102 = vector.shape_cast %101 : vector<1x9x384xbf16> to vector<9x384xbf16>
    %c0_108 = arith.constant 0 : index
    %c17 = arith.constant 17 : index
    %c0_109 = arith.constant 0 : index
    %c0_110 = arith.constant 0 : index
    %103 = vector.load %arg2[%c0_108, %c17, %c0_109, %c0_110] : memref<1x25x3x9xbf16, #tpu.memory_space<vmem>>, vector<1x1x3x9xbf16>
    %104 = vector.shape_cast %103 : vector<1x1x3x9xbf16> to vector<3x9xbf16>
    %cst_111 = arith.constant dense<0.000000e+00> : vector<3x384xf32>
    %105 = tpu.matmul %104, %102, %cst_111 {dimension_numbers = #tpu.dot_dimension_numbers<[1], [0], [0], [1], [0, 0, 1, 1], [], []>} : vector<3x9xbf16>, vector<9x384xbf16>, vector<3x384xf32> -> vector<3x384xf32>
    %106 = arith.addf %100, %105 : vector<3x384xf32>
    %c0_112 = arith.constant 0 : index
    %c0_113 = arith.constant 0 : index
    %c63 = arith.constant 63 : index
    %107 = vector.load %arg1[%c0_112, %c0_113, %c63] : memref<1x9x512xbf16, #tpu.memory_space<vmem>>, vector<1x9x384xbf16>
    %108 = vector.shape_cast %107 : vector<1x9x384xbf16> to vector<9x384xbf16>
    %c0_114 = arith.constant 0 : index
    %c18 = arith.constant 18 : index
    %c0_115 = arith.constant 0 : index
    %c0_116 = arith.constant 0 : index
    %109 = vector.load %arg2[%c0_114, %c18, %c0_115, %c0_116] : memref<1x25x3x9xbf16, #tpu.memory_space<vmem>>, vector<1x1x3x9xbf16>
    %110 = vector.shape_cast %109 : vector<1x1x3x9xbf16> to vector<3x9xbf16>
    %cst_117 = arith.constant dense<0.000000e+00> : vector<3x384xf32>
    %111 = tpu.matmul %110, %108, %cst_117 {dimension_numbers = #tpu.dot_dimension_numbers<[1], [0], [0], [1], [0, 0, 1, 1], [], []>} : vector<3x9xbf16>, vector<9x384xbf16>, vector<3x384xf32> -> vector<3x384xf32>
    %112 = arith.addf %106, %111 : vector<3x384xf32>
    %c0_118 = arith.constant 0 : index
    %c0_119 = arith.constant 0 : index
    %c64 = arith.constant 64 : index
    %113 = vector.load %arg1[%c0_118, %c0_119, %c64] : memref<1x9x512xbf16, #tpu.memory_space<vmem>>, vector<1x9x384xbf16>
    %114 = vector.shape_cast %113 : vector<1x9x384xbf16> to vector<9x384xbf16>
    %c0_120 = arith.constant 0 : index
    %c19 = arith.constant 19 : index
    %c0_121 = arith.constant 0 : index
    %c0_122 = arith.constant 0 : index
    %115 = vector.load %arg2[%c0_120, %c19, %c0_121, %c0_122] : memref<1x25x3x9xbf16, #tpu.memory_space<vmem>>, vector<1x1x3x9xbf16>
    %116 = vector.shape_cast %115 : vector<1x1x3x9xbf16> to vector<3x9xbf16>
    %cst_123 = arith.constant dense<0.000000e+00> : vector<3x384xf32>
    %117 = tpu.matmul %116, %114, %cst_123 {dimension_numbers = #tpu.dot_dimension_numbers<[1], [0], [0], [1], [0, 0, 1, 1], [], []>} : vector<3x9xbf16>, vector<9x384xbf16>, vector<3x384xf32> -> vector<3x384xf32>
    %118 = arith.addf %112, %117 : vector<3x384xf32>
    %c0_124 = arith.constant 0 : index
    %c0_125 = arith.constant 0 : index
    %c80 = arith.constant 80 : index
    %119 = vector.load %arg1[%c0_124, %c0_125, %c80] : memref<1x9x512xbf16, #tpu.memory_space<vmem>>, vector<1x9x384xbf16>
    %120 = vector.shape_cast %119 : vector<1x9x384xbf16> to vector<9x384xbf16>
    %c0_126 = arith.constant 0 : index
    %c20_127 = arith.constant 20 : index
    %c0_128 = arith.constant 0 : index
    %c0_129 = arith.constant 0 : index
    %121 = vector.load %arg2[%c0_126, %c20_127, %c0_128, %c0_129] : memref<1x25x3x9xbf16, #tpu.memory_space<vmem>>, vector<1x1x3x9xbf16>
    %122 = vector.shape_cast %121 : vector<1x1x3x9xbf16> to vector<3x9xbf16>
    %cst_130 = arith.constant dense<0.000000e+00> : vector<3x384xf32>
    %123 = tpu.matmul %122, %120, %cst_130 {dimension_numbers = #tpu.dot_dimension_numbers<[1], [0], [0], [1], [0, 0, 1, 1], [], []>} : vector<3x9xbf16>, vector<9x384xbf16>, vector<3x384xf32> -> vector<3x384xf32>
    %124 = arith.addf %118, %123 : vector<3x384xf32>
    %c0_131 = arith.constant 0 : index
    %c0_132 = arith.constant 0 : index
    %c81 = arith.constant 81 : index
    %125 = vector.load %arg1[%c0_131, %c0_132, %c81] : memref<1x9x512xbf16, #tpu.memory_space<vmem>>, vector<1x9x384xbf16>
    %126 = vector.shape_cast %125 : vector<1x9x384xbf16> to vector<9x384xbf16>
    %c0_133 = arith.constant 0 : index
    %c21_134 = arith.constant 21 : index
    %c0_135 = arith.constant 0 : index
    %c0_136 = arith.constant 0 : index
    %127 = vector.load %arg2[%c0_133, %c21_134, %c0_135, %c0_136] : memref<1x25x3x9xbf16, #tpu.memory_space<vmem>>, vector<1x1x3x9xbf16>
    %128 = vector.shape_cast %127 : vector<1x1x3x9xbf16> to vector<3x9xbf16>
    %cst_137 = arith.constant dense<0.000000e+00> : vector<3x384xf32>
    %129 = tpu.matmul %128, %126, %cst_137 {dimension_numbers = #tpu.dot_dimension_numbers<[1], [0], [0], [1], [0, 0, 1, 1], [], []>} : vector<3x9xbf16>, vector<9x384xbf16>, vector<3x384xf32> -> vector<3x384xf32>
    %130 = arith.addf %124, %129 : vector<3x384xf32>
    %c0_138 = arith.constant 0 : index
    %c0_139 = arith.constant 0 : index
    %c82 = arith.constant 82 : index
    %131 = vector.load %arg1[%c0_138, %c0_139, %c82] : memref<1x9x512xbf16, #tpu.memory_space<vmem>>, vector<1x9x384xbf16>
    %132 = vector.shape_cast %131 : vector<1x9x384xbf16> to vector<9x384xbf16>
    %c0_140 = arith.constant 0 : index
    %c22_141 = arith.constant 22 : index
    %c0_142 = arith.constant 0 : index
    %c0_143 = arith.constant 0 : index
    %133 = vector.load %arg2[%c0_140, %c22_141, %c0_142, %c0_143] : memref<1x25x3x9xbf16, #tpu.memory_space<vmem>>, vector<1x1x3x9xbf16>
    %134 = vector.shape_cast %133 : vector<1x1x3x9xbf16> to vector<3x9xbf16>
    %cst_144 = arith.constant dense<0.000000e+00> : vector<3x384xf32>
    %135 = tpu.matmul %134, %132, %cst_144 {dimension_numbers = #tpu.dot_dimension_numbers<[1], [0], [0], [1], [0, 0, 1, 1], [], []>} : vector<3x9xbf16>, vector<9x384xbf16>, vector<3x384xf32> -> vector<3x384xf32>
    %136 = arith.addf %130, %135 : vector<3x384xf32>
    %c0_145 = arith.constant 0 : index
    %c0_146 = arith.constant 0 : index
    %c83 = arith.constant 83 : index
    %137 = vector.load %arg1[%c0_145, %c0_146, %c83] : memref<1x9x512xbf16, #tpu.memory_space<vmem>>, vector<1x9x384xbf16>
    %138 = vector.shape_cast %137 : vector<1x9x384xbf16> to vector<9x384xbf16>
    %c0_147 = arith.constant 0 : index
    %c23_148 = arith.constant 23 : index
    %c0_149 = arith.constant 0 : index
    %c0_150 = arith.constant 0 : index
    %139 = vector.load %arg2[%c0_147, %c23_148, %c0_149, %c0_150] : memref<1x25x3x9xbf16, #tpu.memory_space<vmem>>, vector<1x1x3x9xbf16>
    %140 = vector.shape_cast %139 : vector<1x1x3x9xbf16> to vector<3x9xbf16>
    %cst_151 = arith.constant dense<0.000000e+00> : vector<3x384xf32>
    %141 = tpu.matmul %140, %138, %cst_151 {dimension_numbers = #tpu.dot_dimension_numbers<[1], [0], [0], [1], [0, 0, 1, 1], [], []>} : vector<3x9xbf16>, vector<9x384xbf16>, vector<3x384xf32> -> vector<3x384xf32>
    %142 = arith.addf %136, %141 : vector<3x384xf32>
    %c0_152 = arith.constant 0 : index
    %c0_153 = arith.constant 0 : index
    %c84 = arith.constant 84 : index
    %143 = vector.load %arg1[%c0_152, %c0_153, %c84] : memref<1x9x512xbf16, #tpu.memory_space<vmem>>, vector<1x9x384xbf16>
    %144 = vector.shape_cast %143 : vector<1x9x384xbf16> to vector<9x384xbf16>
    %c0_154 = arith.constant 0 : index
    %c24_155 = arith.constant 24 : index
    %c0_156 = arith.constant 0 : index
    %c0_157 = arith.constant 0 : index
    %145 = vector.load %arg2[%c0_154, %c24_155, %c0_156, %c0_157] : memref<1x25x3x9xbf16, #tpu.memory_space<vmem>>, vector<1x1x3x9xbf16>
    %146 = vector.shape_cast %145 : vector<1x1x3x9xbf16> to vector<3x9xbf16>
    %cst_158 = arith.constant dense<0.000000e+00> : vector<3x384xf32>
    %147 = tpu.matmul %146, %144, %cst_158 {dimension_numbers = #tpu.dot_dimension_numbers<[1], [0], [0], [1], [0, 0, 1, 1], [], []>} : vector<3x9xbf16>, vector<9x384xbf16>, vector<3x384xf32> -> vector<3x384xf32>
    %148 = arith.addf %142, %147 : vector<3x384xf32>
    %c0_159 = arith.constant 0 : index
    %c0_160 = arith.constant 0 : index
    %c0_161 = arith.constant 0 : index
    %149 = vector.load %arg3[%c0_159, %c0_160, %c0_161] : memref<1x3x384xf32, #tpu.memory_space<vmem>>, vector<1x3x384xf32>
    %150 = vector.shape_cast %149 : vector<1x3x384xf32> to vector<3x384xf32>
    %151 = vector.shape_cast %148 : vector<3x384xf32> to vector<1x3x384xf32>
    tpu.vector_store %arg3[%c0_159, %c0_160, %c0_161], %151 {strides = array<i32>} : memref<1x3x384xf32, #tpu.memory_space<vmem>>, vector<1x3x384xf32>,
    return
  }
  func.func @transform_0(%arg0: i32) -> (i32, i32, i32) {
    %c0_i32 = arith.constant 0 : i32
    %c0_i32_0 = arith.constant 0 : i32
    %c0_i32_1 = arith.constant 0 : i32
    return %arg0, %c0_i32, %c0_i32_0 : i32, i32, i32
  }
  func.func @transform_1(%arg0: i32) -> (i32, i32, i32, i32) {
    %c0_i32 = arith.constant 0 : i32
    %c0_i32_0 = arith.constant 0 : i32
    %c0_i32_1 = arith.constant 0 : i32
    %c0_i32_2 = arith.constant 0 : i32
    return %arg0, %c0_i32, %c0_i32_0, %c0_i32_1 : i32, i32, i32, i32
  }
  func.func @transform_2(%arg0: i32) -> (i32, i32, i32) {
    %c0_i32 = arith.constant 0 : i32
    %c0_i32_0 = arith.constant 0 : i32
    %c0_i32_1 = arith.constant 0 : i32
    return %arg0, %c0_i32, %c0_i32_0 : i32, i32, i32
  }
}

</mosaic_0001>

<llo_original>
// kernel: tpu_custom_call.1
$region0: #{tpu_custom_call.1}
  #allocation0 [shape = 'u32[]', space=smem, size = 0x4, offset = 0x4, fixed_abs, tag = 'smem constant byte address 0x4 - core index']
  #allocation1 [shape = 'u32[144,128]{1,0:T(1,128)}', space=vmem, size = 0x12000, scoped, tag = 'internal scratch']
  %s0 = inlined_call_operand.vmem [shape: bf16[2,9,512], index: 0, kind: input, shape index: {}]
  %s1 = inlined_call_operand.vmem [shape: bf16[2,25,3,9], index: 1, kind: input, shape index: {}]
  %s2 = inlined_call_operand.vmem [shape: f32[2,3,384], index: 2, kind: output, shape index: {}]
  %s3 = sld [smem:[#allocation0]]
  $region41: #{tpu_custom_call.1} parent=0
    _
  %s5 = ssub.s32 1, %s3
  %s6 = scalar_select 0, %s5, %s3
  loop: start=0, step=1, limit=4
  $region2: #{tpu_custom_call.1} parent=0 // loop_pre_header
    _
  $region3: #{tpu_custom_call.1} parent=0 // loop_header
    %s8 = sphi 0, %s12
    %p9 = scmp.ge.s32.totalorder %s8, 4
    %s18 = sphi 0, %s20
    %s21 = sphi 0, %s18
    %s22 = sphi 0, %s21
    %s38 = sphi 0, %s22
    %s44 = sphi 0, %s46
    %s47 = sphi 0, %s44
    %s48 = sphi 0, %s47
    %s64 = sphi 0, %s48
    %s70 = sphi 0, %s72
    %s73 = sphi 0, %s70
    %s74 = sphi 0, %s73
    %s90 = sphi 0, %s74
  $region4: #{tpu_custom_call.1} parent=0 // loop_header_branch
    %11 = sbr.rel (%p9) target = $region8
  $region5: #{tpu_custom_call.1} parent=0 // loop_body
    %s13 = ssub.s32 %s8, 1
    %s14 = ssub.s32 %s8, 2
    %s15 = sadd.s32 %s8, 1
    %s16 = ssub.s32 %s8, %s15
    %p17 = scmp.eq.s32.totalorder %s16, 0
    %s19 = sadd.s32 %s18, 1
    %s20 = scalar_select %p17, %s18, %s19
    %p23 = pneg %p17
    %p24 = scmp.eq.s32.totalorder %s8, 1
    %p25 = por %p23, %p24
    %p26 = scmp.ne.s32.totalorder %s18, %s21
    %p27 = scmp.eq.s32.totalorder %s8, 0
    %p28 = por %p26, %p27
    %p29 = scmp.ne.s32.totalorder %s18, %s21
    %p30 = scmp.eq.s32.totalorder %s13, 1
    %p31 = por %p29, %p30
    %p32 = scmp.ne.s32.totalorder %s21, %s22
    %p33 = scmp.eq.s32.totalorder %s13, 0
    %p34 = por %p32, %p33
    %p35 = scmp.ne.s32.totalorder %s21, %s22
    %p36 = scmp.eq.s32.totalorder %s14, 1
    %p37 = por %p35, %p36
    %p39 = scmp.ne.s32.totalorder %s22, %s38
    %p40 = scmp.eq.s32.totalorder %s14, 0
    %p41 = por %p39, %p40
    %s42 = ssub.s32 %s8, %s15
    %p43 = scmp.eq.s32.totalorder %s42, 0
    %s45 = sadd.s32 %s44, 1
    %s46 = scalar_select %p43, %s44, %s45
    %p49 = pneg %p43
    %p50 = scmp.eq.s32.totalorder %s8, 1
    %p51 = por %p49, %p50
    %p52 = scmp.ne.s32.totalorder %s44, %s47
    %p53 = scmp.eq.s32.totalorder %s8, 0
    %p54 = por %p52, %p53
    %p55 = scmp.ne.s32.totalorder %s44, %s47
    %p56 = scmp.eq.s32.totalorder %s13, 1
    %p57 = por %p55, %p56
    %p58 = scmp.ne.s32.totalorder %s47, %s48
    %p59 = scmp.eq.s32.totalorder %s13, 0
    %p60 = por %p58, %p59
    %p61 = scmp.ne.s32.totalorder %s47, %s48
    %p62 = scmp.eq.s32.totalorder %s14, 1
    %p63 = por %p61, %p62
    %p65 = scmp.ne.s32.totalorder %s48, %s64
    %p66 = scmp.eq.s32.totalorder %s14, 0
    %p67 = por %p65, %p66
    %s68 = ssub.s32 %s8, %s15
    %p69 = scmp.eq.s32.totalorder %s68, 0
    %s71 = sadd.s32 %s70, 1
    %s72 = scalar_select %p69, %s70, %s71
    %p75 = pneg %p69
    %p76 = scmp.eq.s32.totalorder %s8, 1
    %p77 = por %p75, %p76
    %p78 = scmp.ne.s32.totalorder %s70, %s73
    %p79 = scmp.eq.s32.totalorder %s8, 0
    %p80 = por %p78, %p79
    %p81 = scmp.ne.s32.totalorder %s70, %s73
    %p82 = scmp.eq.s32.totalorder %s13, 1
    %p83 = por %p81, %p82
    %p84 = scmp.ne.s32.totalorder %s73, %s74
    %p85 = scmp.eq.s32.totalorder %s13, 0
    %p86 = por %p84, %p85
    %p87 = scmp.ne.s32.totalorder %s73, %s74
    %p88 = scmp.eq.s32.totalorder %s14, 1
    %p89 = por %p87, %p88
    %p91 = scmp.ne.s32.totalorder %s74, %s90
    %p92 = scmp.eq.s32.totalorder %s14, 0
    %p93 = por %p91, %p92
    %p94 = scmp.le.s32.totalorder 1, %s8
    %p95 = scmp.lt.s32.totalorder %s8, 3
    %p96 = pnand %p94, %p95
    %p97 = pneg %p96
    // Predicated region
    $region9: #{tpu_custom_call.1} parent=5 // pred_check
      _
    $region10: #{tpu_custom_call.1} parent=5 // pred_check_branch
      %99 = sbr.rel (%p96) target = $region12
    $region11: #{tpu_custom_call.1} parent=5 // pred_region
      %s100 = ssub.s32 %s8, 1
    $region12: #{tpu_custom_call.1} parent=5 // pred_fallthru
      _
    %p101 = scmp.lt.s32.totalorder %s8, 2
    // Predicated region
    $region13: #{tpu_custom_call.1} parent=5 // pred_check
      %p102 = pneg %p101
    $region14: #{tpu_custom_call.1} parent=5 // pred_check_branch
      %104 = sbr.rel (%p102) target = $region16
    $region15: #{tpu_custom_call.1} parent=5 // pred_region
      // Predicated region
      $region17: #{tpu_custom_call.1} parent=15 // pred_check
        %p105 = pneg %p28
      $region18: #{tpu_custom_call.1} parent=15 // pred_check_branch
        %107 = sbr.rel (%p105) target = $region20
      $region19: #{tpu_custom_call.1} parent=15 // pred_region
        %p108 = scmp.lt.s32.totalorder %s8, 1
        %s109 = scalar_select %p108, %s8, 1
        %s110 = smul.addr %s109, 8
        %s111 = smul.addr %s110, 4
        %s112 = scalar_lea.vmem %s0, %s111
      $region20: #{tpu_custom_call.1} parent=15 // pred_fallthru
        _
      // Predicated region
      $region21: #{tpu_custom_call.1} parent=15 // pred_check
        %p113 = pneg %p54
      $region22: #{tpu_custom_call.1} parent=15 // pred_check_branch
        %115 = sbr.rel (%p113) target = $region24
      $region23: #{tpu_custom_call.1} parent=15 // pred_region
        %p116 = scmp.lt.s32.totalorder %s8, 1
        %s117 = scalar_select %p116, %s8, 1
        %s118 = smul.addr %s117, 25
        %s119 = smul.addr %s118, 2
        %s120 = scalar_lea.vmem %s1, %s119
      $region24: #{tpu_custom_call.1} parent=15 // pred_fallthru
        _
    $region16: #{tpu_custom_call.1} parent=5 // pred_fallthru
      _
    %p121 = scmp.le.s32.totalorder 1, %s8
    %p122 = scmp.lt.s32.totalorder %s8, 3
    %p123 = pnand %p121, %p122
    %p124 = pneg %p123
    // Predicated region
    $region25: #{tpu_custom_call.1} parent=5 // pred_check
      _
    $region26: #{tpu_custom_call.1} parent=5 // pred_check_branch
      %126 = sbr.rel (%p123) target = $region28
    $region27: #{tpu_custom_call.1} parent=5 // pred_region
      %s127 = ssub.s32 %s8, 1
      %p128 = scmp.lt.s32.totalorder %s13, 1
      %s129 = scalar_select %p128, %s13, 1
      %s130 = smul.addr %s129, 8
      %s131 = smul.addr %s130, 4
      %s132 = scalar_lea.vmem %s0, %s131
      %p133 = pneg %p34
      %p134 = pneg %p31
      %p135 = scmp.lt.s32.totalorder %s13, 1
      %s136 = scalar_select %p135, %s13, 1
      %s137 = smul.addr %s136, 25
      %s138 = smul.addr %s137, 2
      %s139 = scalar_lea.vmem %s1, %s138
      %p140 = pneg %p60
      %p141 = pneg %p57
      %p142 = pneg %p86
      %p143 = pneg %p83
      %p144 = scmp.lt.s32.totalorder %s13, 1
      %s145 = scalar_select %p144, %s13, 1
      %s146 = smul.addr %s145, 3
      %s147 = smul.addr %s146, 4
      %s148 = scalar_lea.vmem %s2, %s147
      %p149 = scmp.lt.s32.totalorder %s13, 1
      %s150 = scalar_select %p149, %s13, 1
      %s151 = smul.addr %s150, 8
      %s152 = smul.addr %s151, 4
      %s153 = scalar_lea.vmem %s0, %s152
      %p154 = scmp.lt.s32.totalorder %s13, 1
      %s155 = scalar_select %p154, %s13, 1
      %s156 = smul.addr %s155, 25
      %s157 = smul.addr %s156, 2
      %s158 = scalar_lea.vmem %s1, %s157
      %p159 = scmp.lt.s32.totalorder %s13, 1
      %s160 = scalar_select %p159, %s13, 1
      %s161 = smul.addr %s160, 3
      %s162 = smul.addr %s161, 4
      %s163 = scalar_lea.vmem %s2, %s162
      %v165 = vld [vmem:[%s153] sm:$0xff]
      %v166 = vld [vmem:[%s153 + $0x8] sm:$0xf]
      %v167 = vld [vmem:[%s153 + $0x10] sm:$0x11]
      %v168 = vld [vmem:[%s153 + $0x18] sm:$0x1]
      %v169 = vld [vmem:[%s158] sm:$0x3]
      %v170 = vld [vmem:[%s153 + $0x8] sm:$0xff]
      %v171 = vld [vmem:[%s153 + $0x18] sm:$0x11]
      %s172 = scalar_lea.vmem %s158, 2
      %v173 = vld [vmem:[%s172] sm:$0x3]
      %v178 = vunpack.c.l.b16 %v165
      %v179 = vunpack.c.h.b16 %v165
      %v180 = vunpack.c.l.b16 %v170
      %v181 = vunpack.c.h.b16 %v170
      %v182 = vunpack.c.l.b16 %v167
      %v183 = vunpack.c.h.b16 %v167
      %v184 = vunpack.c.l.b16 %v171
      %v185 = vunpack.c.h.b16 %v171
      %v186 = vpack.c.b16 %v182, %v178
      %v187 = vpack.c.b16 %v183, %v179
      %v188 = vpack.c.b16 %v184, %v180
      %v189 = vpack.c.b16 %v185, %v181
      %190 = vrot.lane.b32.xlu0 %v186, 127
      %v191 = vpop.permute.xlu0 %190
      %192 = vrot.lane.b32.xlu0 %v187, 127
      %v193 = vpop.permute.xlu0 %192
      %194 = vrot.lane.b32.xlu0 %v188, 127
      %v195 = vpop.permute.xlu0 %194
      %196 = vrot.lane.b32.xlu0 %v189, 127
      %v197 = vpop.permute.xlu0 %196
      %vm198 = vcmask 1039360
      %v199 = vsel %vm198, %v191, %v193
      %v200 = vsel %vm198, %v193, %v195
      %v201 = vsel %vm198, %v195, %v197
      %vm202 = vcmask 72704
      %v204 = vsel %vm202, %v173, 0
      %vm206 = vcmask 1043456
      %vm207 = vcmask 1044480
      %v208 = vsel %vm206, 4294967295, 65535
      %v209 = vsel %vm207, %v208, 0
      %v211 = vand.u32 %v199, %v209
      %v214 = vand.u32 %v200, %v209
      %v217 = vand.u32 %v201, %v209
      %219 = vmatprep.subr.bf16.mxu0 0
      %220 = vmatpush1.bf16.msra.mxu0 0
      %221 = vmatprep.subr.bf16.mxu0 0
      %222 = vmatpush1.bf16.msra.mxu0 0
      %223 = vmatprep.subr.bf16.mxu0 0
      %224 = vmatpush1.bf16.msra.mxu0 0
      %225 = vmatprep.subr.bf16.mxu0 0
      %226 = vmatpush1.bf16.msra.mxu0 0
      %227 = vmatprep.subr.bf16.mxu0 0
      %228 = vmatpush1.bf16.msra.mxu0 0
      %229 = vmatprep.subr.bf16.mxu0 0
      %230 = vmatpush1.bf16.msra.mxu0 0
      %231 = vmatprep.subr.bf16.mxu0 0
      %232 = vmatpush1.bf16.msra.mxu0 0
      %233 = vmatprep.subr.bf16.mxu0 %v214
      %234 = vmatpush1.bf16.msra.mxu0 %v211
      %235 = vmatprep.subr.bf16.mxu0 0
      %236 = vmatpush2.bf16.msra.mxu0 0
      %237 = vmatprep.subr.bf16.mxu0 0
      %238 = vmatpush2.bf16.msra.mxu0 0
      %239 = vmatprep.subr.bf16.mxu0 0
      %240 = vmatpush2.bf16.msra.mxu0 0
      %241 = vmatprep.subr.bf16.mxu0 0
      %242 = vmatpush2.bf16.msra.mxu0 0
      %243 = vmatprep.subr.bf16.mxu0 0
      %244 = vmatpush2.bf16.msra.mxu0 0
      %245 = vmatprep.subr.bf16.mxu0 0
      %246 = vmatpush2.bf16.msra.mxu0 0
      %247 = vmatprep.subr.bf16.mxu0 0
      %248 = vmatpush2.bf16.msra.mxu0 0
      %249 = vmatprep.subr.bf16.mxu0 0
      %250 = vmatpush2.bf16.msra.mxu0 0
      %251 = vmatprep.mubr.bf16.mxu0 0
      %252 = vmatmul.mubr.bf16.gmra.mxu0 %v204
      %v253 = vpop.f32.mrf.mxu0
      %v254 = vadd.f32 0.0, %v253
      %v255 = vpop.f32.mrf.mxu0
      %v256 = vadd.f32 0.0, %v255
      %v257 = vpop.f32.mrf.mxu0
      %v258 = vpop.f32.mrf.mxu0
      %259 = vdwg.mxu0
      %260 = vmatprep.subr.bf16.mxu0 0
      %261 = vmatpush1.bf16.msra.mxu0 0
      %262 = vmatprep.subr.bf16.mxu0 0
      %263 = vmatpush1.bf16.msra.mxu0 0
      %264 = vmatprep.subr.bf16.mxu0 0
      %265 = vmatpush1.bf16.msra.mxu0 0
      %266 = vmatprep.subr.bf16.mxu0 0
      %267 = vmatpush1.bf16.msra.mxu0 0
      %268 = vmatprep.subr.bf16.mxu0 0
      %269 = vmatpush1.bf16.msra.mxu0 0
      %270 = vmatprep.subr.bf16.mxu0 0
      %271 = vmatpush1.bf16.msra.mxu0 0
      %272 = vmatprep.subr.bf16.mxu0 0
      %273 = vmatpush1.bf16.msra.mxu0 0
      %274 = vmatprep.subr.bf16.mxu0 0
      %275 = vmatpush1.bf16.msra.mxu0 %v217
      %276 = vmatprep.subr.bf16.mxu0 0
      %277 = vmatpush2.bf16.msra.mxu0 0
      %278 = vmatprep.subr.bf16.mxu0 0
      %279 = vmatpush2.bf16.msra.mxu0 0
      %280 = vmatprep.subr.bf16.mxu0 0
      %281 = vmatpush2.bf16.msra.mxu0 0
      %282 = vmatprep.subr.bf16.mxu0 0
      %283 = vmatpush2.bf16.msra.mxu0 0
      %284 = vmatprep.subr.bf16.mxu0 0
      %285 = vmatpush2.bf16.msra.mxu0 0
      %286 = vmatprep.subr.bf16.mxu0 0
      %287 = vmatpush2.bf16.msra.mxu0 0
      %288 = vmatprep.subr.bf16.mxu0 0
      %289 = vmatpush2.bf16.msra.mxu0 0
      %290 = vmatprep.subr.bf16.mxu0 0
      %291 = vmatpush2.bf16.msra.mxu0 0
      %292 = vmatprep.mubr.bf16.mxu0 0
      %293 = vmatmul.mubr.bf16.gmra.mxu0 %v204
      %v294 = vpop.f32.mrf.mxu0
      %v295 = vadd.f32 0.0, %v294
      %v296 = vpop.f32.mrf.mxu0
      %v297 = vpop.f32.mrf.mxu0
      %v298 = vpop.f32.mrf.mxu0
      %299 = vdwg.mxu0
      %v302 = vunpack.c.l.b16 %v166
      %v303 = vunpack.c.l.b16 %v168
      %v304 = vpack.c.b16 %v303, %v302
      %v306 = vsel %vm202, %v169, 0
      %v309 = vand.u32 %v186, %v209
      %v312 = vand.u32 %v187, %v209
      %v315 = vand.u32 %v304, %v209
      %317 = vmatprep.subr.bf16.mxu0 0
      %318 = vmatpush1.bf16.msra.mxu0 0
      %319 = vmatprep.subr.bf16.mxu0 0
      %320 = vmatpush1.bf16.msra.mxu0 0
      %321 = vmatprep.subr.bf16.mxu0 0
      %322 = vmatpush1.bf16.msra.mxu0 0
      %323 = vmatprep.subr.bf16.mxu0 0
      %324 = vmatpush1.bf16.msra.mxu0 0
      %325 = vmatprep.subr.bf16.mxu0 0
      %326 = vmatpush1.bf16.msra.mxu0 0
      %327 = vmatprep.subr.bf16.mxu0 0
      %328 = vmatpush1.bf16.msra.mxu0 0
      %329 = vmatprep.subr.bf16.mxu0 0
      %330 = vmatpush1.bf16.msra.mxu0 0
      %331 = vmatprep.subr.bf16.mxu0 %v312
      %332 = vmatpush1.bf16.msra.mxu0 %v309
      %333 = vmatprep.subr.bf16.mxu0 0
      %334 = vmatpush2.bf16.msra.mxu0 0
      %335 = vmatprep.subr.bf16.mxu0 0
      %336 = vmatpush2.bf16.msra.mxu0 0
      %337 = vmatprep.subr.bf16.mxu0 0
      %338 = vmatpush2.bf16.msra.mxu0 0
      %339 = vmatprep.subr.bf16.mxu0 0
      %340 = vmatpush2.bf16.msra.mxu0 0
      %341 = vmatprep.subr.bf16.mxu0 0
      %342 = vmatpush2.bf16.msra.mxu0 0
      %343 = vmatprep.subr.bf16.mxu0 0
      %344 = vmatpush2.bf16.msra.mxu0 0
      %345 = vmatprep.subr.bf16.mxu0 0
      %346 = vmatpush2.bf16.msra.mxu0 0
      %347 = vmatprep.subr.bf16.mxu0 0
      %348 = vmatpush2.bf16.msra.mxu0 0
      %349 = vmatprep.mubr.bf16.mxu0 0
      %350 = vmatmul.mubr.bf16.gmra.mxu0 %v306
      %v351 = vpop.f32.mrf.mxu0
      %v352 = vadd.f32 %v254, %v351
      %v353 = vpop.f32.mrf.mxu0
      %v354 = vadd.f32 %v256, %v353
      %v355 = vpop.f32.mrf.mxu0
      %v356 = vpop.f32.mrf.mxu0
      %357 = vdwg.mxu0
      %358 = vmatprep.subr.bf16.mxu0 0
      %359 = vmatpush1.bf16.msra.mxu0 0
      %360 = vmatprep.subr.bf16.mxu0 0
      %361 = vmatpush1.bf16.msra.mxu0 0
      %362 = vmatprep.subr.bf16.mxu0 0
      %363 = vmatpush1.bf16.msra.mxu0 0
      %364 = vmatprep.subr.bf16.mxu0 0
      %365 = vmatpush1.bf16.msra.mxu0 0
      %366 = vmatprep.subr.bf16.mxu0 0
      %367 = vmatpush1.bf16.msra.mxu0 0
      %368 = vmatprep.subr.bf16.mxu0 0
      %369 = vmatpush1.bf16.msra.mxu0 0
      %370 = vmatprep.subr.bf16.mxu0 0
      %371 = vmatpush1.bf16.msra.mxu0 0
      %372 = vmatprep.subr.bf16.mxu0 0
      %373 = vmatpush1.bf16.msra.mxu0 %v315
      %374 = vmatprep.subr.bf16.mxu0 0
      %375 = vmatpush2.bf16.msra.mxu0 0
      %376 = vmatprep.subr.bf16.mxu0 0
      %377 = vmatpush2.bf16.msra.mxu0 0
      %378 = vmatprep.subr.bf16.mxu0 0
      %379 = vmatpush2.bf16.msra.mxu0 0
      %380 = vmatprep.subr.bf16.mxu0 0
      %381 = vmatpush2.bf16.msra.mxu0 0
      %382 = vmatprep.subr.bf16.mxu0 0
      %383 = vmatpush2.bf16.msra.mxu0 0
      %384 = vmatprep.subr.bf16.mxu0 0
      %385 = vmatpush2.bf16.msra.mxu0 0
      %386 = vmatprep.subr.bf16.mxu0 0
      %387 = vmatpush2.bf16.msra.mxu0 0
      %388 = vmatprep.subr.bf16.mxu0 0
      %389 = vmatpush2.bf16.msra.mxu0 0
      %390 = vmatprep.mubr.bf16.mxu0 0
      %391 = vmatmul.mubr.bf16.gmra.mxu0 %v306
      %v392 = vpop.f32.mrf.mxu0
      %v393 = vadd.f32 %v295, %v392
      %v394 = vpop.f32.mrf.mxu0
      %v395 = vpop.f32.mrf.mxu0
      %v396 = vpop.f32.mrf.mxu0
      %397 = vdwg.mxu0
      %s398 = scalar_lea.vmem %s158, 4
      %v399 = vld [vmem:[%s398] sm:$0x3]
      %400 = vrot.lane.b32.xlu0 %v186, 126
      %v401 = vpop.permute.xlu0 %400
      %402 = vrot.lane.b32.xlu0 %v187, 126
      %v403 = vpop.permute.xlu0 %402
      %404 = vrot.lane.b32.xlu0 %v188, 126
      %v405 = vpop.permute.xlu0 %404
      %406 = vrot.lane.b32.xlu0 %v189, 126
      %v407 = vpop.permute.xlu0 %406
      %vm408 = vcmask 1031168
      %v409 = vsel %vm408, %v401, %v403
      %v410 = vsel %vm408, %v403, %v405
      %v411 = vsel %vm408, %v405, %v407
      %v413 = vsel %vm202, %v399, 0
      %v416 = vand.u32 %v409, %v209
      %v419 = vand.u32 %v410, %v209
      %v422 = vand.u32 %v411, %v209
      %424 = vmatprep.subr.bf16.mxu0 0
      %425 = vmatpush1.bf16.msra.mxu0 0
      %426 = vmatprep.subr.bf16.mxu0 0
      %427 = vmatpush1.bf16.msra.mxu0 0
      %428 = vmatprep.subr.bf16.mxu0 0
      %429 = vmatpush1.bf16.msra.mxu0 0
      %430 = vmatprep.subr.bf16.mxu0 0
      %431 = vmatpush1.bf16.msra.mxu0 0
      %432 = vmatprep.subr.bf16.mxu0 0
      %433 = vmatpush1.bf16.msra.mxu0 0
      %434 = vmatprep.subr.bf16.mxu0 0
      %435 = vmatpush1.bf16.msra.mxu0 0
      %436 = vmatprep.subr.bf16.mxu0 0
      %437 = vmatpush1.bf16.msra.mxu0 0
      %438 = vmatprep.subr.bf16.mxu0 %v419
      %439 = vmatpush1.bf16.msra.mxu0 %v416
      %440 = vmatprep.subr.bf16.mxu0 0
      %441 = vmatpush2.bf16.msra.mxu0 0
      %442 = vmatprep.subr.bf16.mxu0 0
      %443 = vmatpush2.bf16.msra.mxu0 0
      %444 = vmatprep.subr.bf16.mxu0 0
      %445 = vmatpush2.bf16.msra.mxu0 0
      %446 = vmatprep.subr.bf16.mxu0 0
      %447 = vmatpush2.bf16.msra.mxu0 0
      %448 = vmatprep.subr.bf16.mxu0 0
      %449 = vmatpush2.bf16.msra.mxu0 0
      %450 = vmatprep.subr.bf16.mxu0 0
      %451 = vmatpush2.bf16.msra.mxu0 0
      %452 = vmatprep.subr.bf16.mxu0 0
      %453 = vmatpush2.bf16.msra.mxu0 0
      %454 = vmatprep.subr.bf16.mxu0 0
      %455 = vmatpush2.bf16.msra.mxu0 0
      %456 = vmatprep.mubr.bf16.mxu0 0
      %457 = vmatmul.mubr.bf16.gmra.mxu0 %v413
      %v458 = vpop.f32.mrf.mxu0
      %v459 = vadd.f32 0.0, %v458
      %v460 = vpop.f32.mrf.mxu0
      %v461 = vadd.f32 0.0, %v460
      %v462 = vpop.f32.mrf.mxu0
      %v463 = vpop.f32.mrf.mxu0
      %464 = vdwg.mxu0
      %465 = vmatprep.subr.bf16.mxu0 0
      %466 = vmatpush1.bf16.msra.mxu0 0
      %467 = vmatprep.subr.bf16.mxu0 0
      %468 = vmatpush1.bf16.msra.mxu0 0
      %469 = vmatprep.subr.bf16.mxu0 0
      %470 = vmatpush1.bf16.msra.mxu0 0
      %471 = vmatprep.subr.bf16.mxu0 0
      %472 = vmatpush1.bf16.msra.mxu0 0
      %473 = vmatprep.subr.bf16.mxu0 0
      %474 = vmatpush1.bf16.msra.mxu0 0
      %475 = vmatprep.subr.bf16.mxu0 0
      %476 = vmatpush1.bf16.msra.mxu0 0
      %477 = vmatprep.subr.bf16.mxu0 0
      %478 = vmatpush1.bf16.msra.mxu0 0
      %479 = vmatprep.subr.bf16.mxu0 0
      %480 = vmatpush1.bf16.msra.mxu0 %v422
      %481 = vmatprep.subr.bf16.mxu0 0
      %482 = vmatpush2.bf16.msra.mxu0 0
      %483 = vmatprep.subr.bf16.mxu0 0
      %484 = vmatpush2.bf16.msra.mxu0 0
      %485 = vmatprep.subr.bf16.mxu0 0
      %486 = vmatpush2.bf16.msra.mxu0 0
      %487 = vmatprep.subr.bf16.mxu0 0
      %488 = vmatpush2.bf16.msra.mxu0 0
      %489 = vmatprep.subr.bf16.mxu0 0
      %490 = vmatpush2.bf16.msra.mxu0 0
      %491 = vmatprep.subr.bf16.mxu0 0
      %492 = vmatpush2.bf16.msra.mxu0 0
      %493 = vmatprep.subr.bf16.mxu0 0
      %494 = vmatpush2.bf16.msra.mxu0 0
      %495 = vmatprep.subr.bf16.mxu0 0
      %496 = vmatpush2.bf16.msra.mxu0 0
      %497 = vmatprep.mubr.bf16.mxu0 0
      %498 = vmatmul.mubr.bf16.gmra.mxu0 %v413
      %v499 = vpop.f32.mrf.mxu0
      %v500 = vadd.f32 0.0, %v499
      %v501 = vpop.f32.mrf.mxu0
      %v502 = vpop.f32.mrf.mxu0
      %v503 = vpop.f32.mrf.mxu0
      %504 = vdwg.mxu0
      %v505 = vadd.f32 %v352, %v459
      %v506 = vadd.f32 %v354, %v461
      %v507 = vadd.f32 %v393, %v500
      %s508 = scalar_lea.vmem %s158, 6
      %v509 = vld [vmem:[%s508] sm:$0x3]
      %510 = vrot.lane.b32.xlu0 %v186, 125
      %v511 = vpop.permute.xlu0 %510
      %512 = vrot.lane.b32.xlu0 %v187, 125
      %v513 = vpop.permute.xlu0 %512
      %514 = vrot.lane.b32.xlu0 %v188, 125
      %v515 = vpop.permute.xlu0 %514
      %516 = vrot.lane.b32.xlu0 %v189, 125
      %v517 = vpop.permute.xlu0 %516
      %vm518 = vcmask 1022976
      %v519 = vsel %vm518, %v511, %v513
      %v520 = vsel %vm518, %v513, %v515
      %v521 = vsel %vm518, %v515, %v517
      %v523 = vsel %vm202, %v509, 0
      %v526 = vand.u32 %v519, %v209
      %v529 = vand.u32 %v520, %v209
      %v532 = vand.u32 %v521, %v209
      %534 = vmatprep.subr.bf16.mxu0 0
      %535 = vmatpush1.bf16.msra.mxu0 0
      %536 = vmatprep.subr.bf16.mxu0 0
      %537 = vmatpush1.bf16.msra.mxu0 0
      %538 = vmatprep.subr.bf16.mxu0 0
      %539 = vmatpush1.bf16.msra.mxu0 0
      %540 = vmatprep.subr.bf16.mxu0 0
      %541 = vmatpush1.bf16.msra.mxu0 0
      %542 = vmatprep.subr.bf16.mxu0 0
      %543 = vmatpush1.bf16.msra.mxu0 0
      %544 = vmatprep.subr.bf16.mxu0 0
      %545 = vmatpush1.bf16.msra.mxu0 0
      %546 = vmatprep.subr.bf16.mxu0 0
      %547 = vmatpush1.bf16.msra.mxu0 0
      %548 = vmatprep.subr.bf16.mxu0 %v529
      %549 = vmatpush1.bf16.msra.mxu0 %v526
      %550 = vmatprep.subr.bf16.mxu0 0
      %551 = vmatpush2.bf16.msra.mxu0 0
      %552 = vmatprep.subr.bf16.mxu0 0
      %553 = vmatpush2.bf16.msra.mxu0 0
      %554 = vmatprep.subr.bf16.mxu0 0
      %555 = vmatpush2.bf16.msra.mxu0 0
      %556 = vmatprep.subr.bf16.mxu0 0
      %557 = vmatpush2.bf16.msra.mxu0 0
      %558 = vmatprep.subr.bf16.mxu0 0
      %559 = vmatpush2.bf16.msra.mxu0 0
      %560 = vmatprep.subr.bf16.mxu0 0
      %561 = vmatpush2.bf16.msra.mxu0 0
      %562 = vmatprep.subr.bf16.mxu0 0
      %563 = vmatpush2.bf16.msra.mxu0 0
      %564 = vmatprep.subr.bf16.mxu0 0
      %565 = vmatpush2.bf16.msra.mxu0 0
      %566 = vmatprep.mubr.bf16.mxu0 0
      %567 = vmatmul.mubr.bf16.gmra.mxu0 %v523
      %v568 = vpop.f32.mrf.mxu0
      %v569 = vadd.f32 0.0, %v568
      %v570 = vpop.f32.mrf.mxu0
      %v571 = vadd.f32 0.0, %v570
      %v572 = vpop.f32.mrf.mxu0
      %v573 = vpop.f32.mrf.mxu0
      %574 = vdwg.mxu0
      %575 = vmatprep.subr.bf16.mxu0 0
      %576 = vmatpush1.bf16.msra.mxu0 0
      %577 = vmatprep.subr.bf16.mxu0 0
      %578 = vmatpush1.bf16.msra.mxu0 0
      %579 = vmatprep.subr.bf16.mxu0 0
      %580 = vmatpush1.bf16.msra.mxu0 0
      %581 = vmatprep.subr.bf16.mxu0 0
      %582 = vmatpush1.bf16.msra.mxu0 0
      %583 = vmatprep.subr.bf16.mxu0 0
      %584 = vmatpush1.bf16.msra.mxu0 0
      %585 = vmatprep.subr.bf16.mxu0 0
      %586 = vmatpush1.bf16.msra.mxu0 0
      %587 = vmatprep.subr.bf16.mxu0 0
      %588 = vmatpush1.bf16.msra.mxu0 0
      %589 = vmatprep.subr.bf16.mxu0 0
      %590 = vmatpush1.bf16.msra.mxu0 %v532
      %591 = vmatprep.subr.bf16.mxu0 0
      %592 = vmatpush2.bf16.msra.mxu0 0
      %593 = vmatprep.subr.bf16.mxu0 0
      %594 = vmatpush2.bf16.msra.mxu0 0
      %595 = vmatprep.subr.bf16.mxu0 0
      %596 = vmatpush2.bf16.msra.mxu0 0
      %597 = vmatprep.subr.bf16.mxu0 0
      %598 = vmatpush2.bf16.msra.mxu0 0
      %599 = vmatprep.subr.bf16.mxu0 0
      %600 = vmatpush2.bf16.msra.mxu0 0
      %601 = vmatprep.subr.bf16.mxu0 0
      %602 = vmatpush2.bf16.msra.mxu0 0
      %603 = vmatprep.subr.bf16.mxu0 0
      %604 = vmatpush2.bf16.msra.mxu0 0
      %605 = vmatprep.subr.bf16.mxu0 0
      %606 = vmatpush2.bf16.msra.mxu0 0
      %607 = vmatprep.mubr.bf16.mxu0 0
      %608 = vmatmul.mubr.bf16.gmra.mxu0 %v523
      %v609 = vpop.f32.mrf.mxu0
      %v610 = vadd.f32 0.0, %v609
      %v611 = vpop.f32.mrf.mxu0
      %v612 = vpop.f32.mrf.mxu0
      %v613 = vpop.f32.mrf.mxu0
      %614 = vdwg.mxu0
      %v615 = vadd.f32 %v505, %v569
      %v616 = vadd.f32 %v506, %v571
      %v617 = vadd.f32 %v507, %v610
      %s618 = scalar_lea.vmem %s158, 8
      %v619 = vld [vmem:[%s618] sm:$0x3]
      %620 = vrot.lane.b32.xlu0 %v186, 124
      %v621 = vpop.permute.xlu0 %620
      %622 = vrot.lane.b32.xlu0 %v187, 124
      %v623 = vpop.permute.xlu0 %622
      %624 = vrot.lane.b32.xlu0 %v188, 124
      %v625 = vpop.permute.xlu0 %624
      %626 = vrot.lane.b32.xlu0 %v189, 124
      %v627 = vpop.permute.xlu0 %626
      %vm628 = vcmask 1014784
      %v629 = vsel %vm628, %v621, %v623
      %v630 = vsel %vm628, %v623, %v625
      %v631 = vsel %vm628, %v625, %v627
      %v633 = vsel %vm202, %v619, 0
      %v636 = vand.u32 %v629, %v209
      %v639 = vand.u32 %v630, %v209
      %v642 = vand.u32 %v631, %v209
      %644 = vmatprep.subr.bf16.mxu0 0
      %645 = vmatpush1.bf16.msra.mxu0 0
      %646 = vmatprep.subr.bf16.mxu0 0
      %647 = vmatpush1.bf16.msra.mxu0 0
      %648 = vmatprep.subr.bf16.mxu0 0
      %649 = vmatpush1.bf16.msra.mxu0 0
      %650 = vmatprep.subr.bf16.mxu0 0
      %651 = vmatpush1.bf16.msra.mxu0 0
      %652 = vmatprep.subr.bf16.mxu0 0
      %653 = vmatpush1.bf16.msra.mxu0 0
      %654 = vmatprep.subr.bf16.mxu0 0
      %655 = vmatpush1.bf16.msra.mxu0 0
      %656 = vmatprep.subr.bf16.mxu0 0
      %657 = vmatpush1.bf16.msra.mxu0 0
      %658 = vmatprep.subr.bf16.mxu0 %v639
      %659 = vmatpush1.bf16.msra.mxu0 %v636
      %660 = vmatprep.subr.bf16.mxu0 0
      %661 = vmatpush2.bf16.msra.mxu0 0
      %662 = vmatprep.subr.bf16.mxu0 0
      %663 = vmatpush2.bf16.msra.mxu0 0
      %664 = vmatprep.subr.bf16.mxu0 0
      %665 = vmatpush2.bf16.msra.mxu0 0
      %666 = vmatprep.subr.bf16.mxu0 0
      %667 = vmatpush2.bf16.msra.mxu0 0
      %668 = vmatprep.subr.bf16.mxu0 0
      %669 = vmatpush2.bf16.msra.mxu0 0
      %670 = vmatprep.subr.bf16.mxu0 0
      %671 = vmatpush2.bf16.msra.mxu0 0
      %672 = vmatprep.subr.bf16.mxu0 0
      %673 = vmatpush2.bf16.msra.mxu0 0
      %674 = vmatprep.subr.bf16.mxu0 0
      %675 = vmatpush2.bf16.msra.mxu0 0
      %676 = vmatprep.mubr.bf16.mxu0 0
      %677 = vmatmul.mubr.bf16.gmra.mxu0 %v633
      %v678 = vpop.f32.mrf.mxu0
      %v679 = vadd.f32 0.0, %v678
      %v680 = vpop.f32.mrf.mxu0
      %v681 = vadd.f32 0.0, %v680
      %v682 = vpop.f32.mrf.mxu0
      %v683 = vpop.f32.mrf.mxu0
      %684 = vdwg.mxu0
      %685 = vmatprep.subr.bf16.mxu0 0
      %686 = vmatpush1.bf16.msra.mxu0 0
      %687 = vmatprep.subr.bf16.mxu0 0
      %688 = vmatpush1.bf16.msra.mxu0 0
      %689 = vmatprep.subr.bf16.mxu0 0
      %690 = vmatpush1.bf16.msra.mxu0 0
      %691 = vmatprep.subr.bf16.mxu0 0
      %692 = vmatpush1.bf16.msra.mxu0 0
      %693 = vmatprep.subr.bf16.mxu0 0
      %694 = vmatpush1.bf16.msra.mxu0 0
      %695 = vmatprep.subr.bf16.mxu0 0
      %696 = vmatpush1.bf16.msra.mxu0 0
      %697 = vmatprep.subr.bf16.mxu0 0
      %698 = vmatpush1.bf16.msra.mxu0 0
      %699 = vmatprep.subr.bf16.mxu0 0
      %700 = vmatpush1.bf16.msra.mxu0 %v642
      %701 = vmatprep.subr.bf16.mxu0 0
      %702 = vmatpush2.bf16.msra.mxu0 0
      %703 = vmatprep.subr.bf16.mxu0 0
      %704 = vmatpush2.bf16.msra.mxu0 0
      %705 = vmatprep.subr.bf16.mxu0 0
      %706 = vmatpush2.bf16.msra.mxu0 0
      %707 = vmatprep.subr.bf16.mxu0 0
      %708 = vmatpush2.bf16.msra.mxu0 0
      %709 = vmatprep.subr.bf16.mxu0 0
      %710 = vmatpush2.bf16.msra.mxu0 0
      %711 = vmatprep.subr.bf16.mxu0 0
      %712 = vmatpush2.bf16.msra.mxu0 0
      %713 = vmatprep.subr.bf16.mxu0 0
      %714 = vmatpush2.bf16.msra.mxu0 0
      %715 = vmatprep.subr.bf16.mxu0 0
      %716 = vmatpush2.bf16.msra.mxu0 0
      %717 = vmatprep.mubr.bf16.mxu0 0
      %718 = vmatmul.mubr.bf16.gmra.mxu0 %v633
      %v719 = vpop.f32.mrf.mxu0
      %v720 = vadd.f32 0.0, %v719
      %v721 = vpop.f32.mrf.mxu0
      %v722 = vpop.f32.mrf.mxu0
      %v723 = vpop.f32.mrf.mxu0
      %724 = vdwg.mxu0
      %v725 = vadd.f32 %v615, %v679
      %v726 = vadd.f32 %v616, %v681
      %v727 = vadd.f32 %v617, %v720
      %s728 = scalar_lea.vmem %s158, 10
      %v729 = vld [vmem:[%s728] sm:$0x3]
      %730 = vrot.lane.b32.xlu0 %v186, 108
      %v731 = vpop.permute.xlu0 %730
      %732 = vrot.lane.b32.xlu0 %v187, 108
      %v733 = vpop.permute.xlu0 %732
      %734 = vrot.lane.b32.xlu0 %v188, 108
      %v735 = vpop.permute.xlu0 %734
      %736 = vrot.lane.b32.xlu0 %v189, 108
      %v737 = vpop.permute.xlu0 %736
      %vm738 = vcmask 883712
      %v739 = vsel %vm738, %v731, %v733
      %v740 = vsel %vm738, %v733, %v735
      %v741 = vsel %vm738, %v735, %v737
      %v743 = vsel %vm202, %v729, 0
      %v746 = vand.u32 %v739, %v209
      %v749 = vand.u32 %v740, %v209
      %v752 = vand.u32 %v741, %v209
      %754 = vmatprep.subr.bf16.mxu0 0
      %755 = vmatpush1.bf16.msra.mxu0 0
      %756 = vmatprep.subr.bf16.mxu0 0
      %757 = vmatpush1.bf16.msra.mxu0 0
      %758 = vmatprep.subr.bf16.mxu0 0
      %759 = vmatpush1.bf16.msra.mxu0 0
      %760 = vmatprep.subr.bf16.mxu0 0
      %761 = vmatpush1.bf16.msra.mxu0 0
      %762 = vmatprep.subr.bf16.mxu0 0
      %763 = vmatpush1.bf16.msra.mxu0 0
      %764 = vmatprep.subr.bf16.mxu0 0
      %765 = vmatpush1.bf16.msra.mxu0 0
      %766 = vmatprep.subr.bf16.mxu0 0
      %767 = vmatpush1.bf16.msra.mxu0 0
      %768 = vmatprep.subr.bf16.mxu0 %v749
      %769 = vmatpush1.bf16.msra.mxu0 %v746
      %770 = vmatprep.subr.bf16.mxu0 0
      %771 = vmatpush2.bf16.msra.mxu0 0
      %772 = vmatprep.subr.bf16.mxu0 0
      %773 = vmatpush2.bf16.msra.mxu0 0
      %774 = vmatprep.subr.bf16.mxu0 0
      %775 = vmatpush2.bf16.msra.mxu0 0
      %776 = vmatprep.subr.bf16.mxu0 0
      %777 = vmatpush2.bf16.msra.mxu0 0
      %778 = vmatprep.subr.bf16.mxu0 0
      %779 = vmatpush2.bf16.msra.mxu0 0
      %780 = vmatprep.subr.bf16.mxu0 0
      %781 = vmatpush2.bf16.msra.mxu0 0
      %782 = vmatprep.subr.bf16.mxu0 0
      %783 = vmatpush2.bf16.msra.mxu0 0
      %784 = vmatprep.subr.bf16.mxu0 0
      %785 = vmatpush2.bf16.msra.mxu0 0
      %786 = vmatprep.mubr.bf16.mxu0 0
      %787 = vmatmul.mubr.bf16.gmra.mxu0 %v743
      %v788 = vpop.f32.mrf.mxu0
      %v789 = vadd.f32 0.0, %v788
      %v790 = vpop.f32.mrf.mxu0
      %v791 = vadd.f32 0.0, %v790
      %v792 = vpop.f32.mrf.mxu0
      %v793 = vpop.f32.mrf.mxu0
      %794 = vdwg.mxu0
      %795 = vmatprep.subr.bf16.mxu0 0
      %796 = vmatpush1.bf16.msra.mxu0 0
      %797 = vmatprep.subr.bf16.mxu0 0
      %798 = vmatpush1.bf16.msra.mxu0 0
      %799 = vmatprep.subr.bf16.mxu0 0
      %800 = vmatpush1.bf16.msra.mxu0 0
      %801 = vmatprep.subr.bf16.mxu0 0
      %802 = vmatpush1.bf16.msra.mxu0 0
      %803 = vmatprep.subr.bf16.mxu0 0
      %804 = vmatpush1.bf16.msra.mxu0 0
      %805 = vmatprep.subr.bf16.mxu0 0
      %806 = vmatpush1.bf16.msra.mxu0 0
      %807 = vmatprep.subr.bf16.mxu0 0
      %808 = vmatpush1.bf16.msra.mxu0 0
      %809 = vmatprep.subr.bf16.mxu0 0
      %810 = vmatpush1.bf16.msra.mxu0 %v752
      %811 = vmatprep.subr.bf16.mxu0 0
      %812 = vmatpush2.bf16.msra.mxu0 0
      %813 = vmatprep.subr.bf16.mxu0 0
      %814 = vmatpush2.bf16.msra.mxu0 0
      %815 = vmatprep.subr.bf16.mxu0 0
      %816 = vmatpush2.bf16.msra.mxu0 0
      %817 = vmatprep.subr.bf16.mxu0 0
      %818 = vmatpush2.bf16.msra.mxu0 0
      %819 = vmatprep.subr.bf16.mxu0 0
      %820 = vmatpush2.bf16.msra.mxu0 0
      %821 = vmatprep.subr.bf16.mxu0 0
      %822 = vmatpush2.bf16.msra.mxu0 0
      %823 = vmatprep.subr.bf16.mxu0 0
      %824 = vmatpush2.bf16.msra.mxu0 0
      %825 = vmatprep.subr.bf16.mxu0 0
      %826 = vmatpush2.bf16.msra.mxu0 0
      %827 = vmatprep.mubr.bf16.mxu0 0
      %828 = vmatmul.mubr.bf16.gmra.mxu0 %v743
      %v829 = vpop.f32.mrf.mxu0
      %v830 = vadd.f32 0.0, %v829
      %v831 = vpop.f32.mrf.mxu0
      %v832 = vpop.f32.mrf.mxu0
      %v833 = vpop.f32.mrf.mxu0
      %834 = vdwg.mxu0
      %v835 = vadd.f32 %v725, %v789
      %v836 = vadd.f32 %v726, %v791
      %v837 = vadd.f32 %v727, %v830
      %s838 = scalar_lea.vmem %s158, 12
      %v839 = vld [vmem:[%s838] sm:$0x3]
      %840 = vrot.lane.b32.xlu0 %v186, 107
      %v841 = vpop.permute.xlu0 %840
      %842 = vrot.lane.b32.xlu0 %v187, 107
      %v843 = vpop.permute.xlu0 %842
      %844 = vrot.lane.b32.xlu0 %v188, 107
      %v845 = vpop.permute.xlu0 %844
      %846 = vrot.lane.b32.xlu0 %v189, 107
      %v847 = vpop.permute.xlu0 %846
      %vm848 = vcmask 875520
      %v849 = vsel %vm848, %v841, %v843
      %v850 = vsel %vm848, %v843, %v845
      %v851 = vsel %vm848, %v845, %v847
      %v853 = vsel %vm202, %v839, 0
      %v856 = vand.u32 %v849, %v209
      %v859 = vand.u32 %v850, %v209
      %v862 = vand.u32 %v851, %v209
      %864 = vmatprep.subr.bf16.mxu0 0
      %865 = vmatpush1.bf16.msra.mxu0 0
      %866 = vmatprep.subr.bf16.mxu0 0
      %867 = vmatpush1.bf16.msra.mxu0 0
      %868 = vmatprep.subr.bf16.mxu0 0
      %869 = vmatpush1.bf16.msra.mxu0 0
      %870 = vmatprep.subr.bf16.mxu0 0
      %871 = vmatpush1.bf16.msra.mxu0 0
      %872 = vmatprep.subr.bf16.mxu0 0
      %873 = vmatpush1.bf16.msra.mxu0 0
      %874 = vmatprep.subr.bf16.mxu0 0
      %875 = vmatpush1.bf16.msra.mxu0 0
      %876 = vmatprep.subr.bf16.mxu0 0
      %877 = vmatpush1.bf16.msra.mxu0 0
      %878 = vmatprep.subr.bf16.mxu0 %v859
      %879 = vmatpush1.bf16.msra.mxu0 %v856
      %880 = vmatprep.subr.bf16.mxu0 0
      %881 = vmatpush2.bf16.msra.mxu0 0
      %882 = vmatprep.subr.bf16.mxu0 0
      %883 = vmatpush2.bf16.msra.mxu0 0
      %884 = vmatprep.subr.bf16.mxu0 0
      %885 = vmatpush2.bf16.msra.mxu0 0
      %886 = vmatprep.subr.bf16.mxu0 0
      %887 = vmatpush2.bf16.msra.mxu0 0
      %888 = vmatprep.subr.bf16.mxu0 0
      %889 = vmatpush2.bf16.msra.mxu0 0
      %890 = vmatprep.subr.bf16.mxu0 0
      %891 = vmatpush2.bf16.msra.mxu0 0
      %892 = vmatprep.subr.bf16.mxu0 0
      %893 = vmatpush2.bf16.msra.mxu0 0
      %894 = vmatprep.subr.bf16.mxu0 0
      %895 = vmatpush2.bf16.msra.mxu0 0
      %896 = vmatprep.mubr.bf16.mxu0 0
      %897 = vmatmul.mubr.bf16.gmra.mxu0 %v853
      %v898 = vpop.f32.mrf.mxu0
      %v899 = vadd.f32 0.0, %v898
      %v900 = vpop.f32.mrf.mxu0
      %v901 = vadd.f32 0.0, %v900
      %v902 = vpop.f32.mrf.mxu0
      %v903 = vpop.f32.mrf.mxu0
      %904 = vdwg.mxu0
      %905 = vmatprep.subr.bf16.mxu0 0
      %906 = vmatpush1.bf16.msra.mxu0 0
      %907 = vmatprep.subr.bf16.mxu0 0
      %908 = vmatpush1.bf16.msra.mxu0 0
      %909 = vmatprep.subr.bf16.mxu0 0
      %910 = vmatpush1.bf16.msra.mxu0 0
      %911 = vmatprep.subr.bf16.mxu0 0
      %912 = vmatpush1.bf16.msra.mxu0 0
      %913 = vmatprep.subr.bf16.mxu0 0
      %914 = vmatpush1.bf16.msra.mxu0 0
      %915 = vmatprep.subr.bf16.mxu0 0
      %916 = vmatpush1.bf16.msra.mxu0 0
      %917 = vmatprep.subr.bf16.mxu0 0
      %918 = vmatpush1.bf16.msra.mxu0 0
      %919 = vmatprep.subr.bf16.mxu0 0
      %920 = vmatpush1.bf16.msra.mxu0 %v862
      %921 = vmatprep.subr.bf16.mxu0 0
      %922 = vmatpush2.bf16.msra.mxu0 0
      %923 = vmatprep.subr.bf16.mxu0 0
      %924 = vmatpush2.bf16.msra.mxu0 0
      %925 = vmatprep.subr.bf16.mxu0 0
      %926 = vmatpush2.bf16.msra.mxu0 0
      %927 = vmatprep.subr.bf16.mxu0 0
      %928 = vmatpush2.bf16.msra.mxu0 0
      %929 = vmatprep.subr.bf16.mxu0 0
      %930 = vmatpush2.bf16.msra.mxu0 0
      %931 = vmatprep.subr.bf16.mxu0 0
      %932 = vmatpush2.bf16.msra.mxu0 0
      %933 = vmatprep.subr.bf16.mxu0 0
      %934 = vmatpush2.bf16.msra.mxu0 0
      %935 = vmatprep.subr.bf16.mxu0 0
      %936 = vmatpush2.bf16.msra.mxu0 0
      %937 = vmatprep.mubr.bf16.mxu0 0
      %938 = vmatmul.mubr.bf16.gmra.mxu0 %v853
      %v939 = vpop.f32.mrf.mxu0
      %v940 = vadd.f32 0.0, %v939
      %v941 = vpop.f32.mrf.mxu0
      %v942 = vpop.f32.mrf.mxu0
      %v943 = vpop.f32.mrf.mxu0
      %944 = vdwg.mxu0
      %v945 = vadd.f32 %v835, %v899
      %v946 = vadd.f32 %v836, %v901
      %v947 = vadd.f32 %v837, %v940
      %s948 = scalar_lea.vmem %s158, 14
      %v949 = vld [vmem:[%s948] sm:$0x3]
      %950 = vrot.lane.b32.xlu0 %v186, 106
      %v951 = vpop.permute.xlu0 %950
      %952 = vrot.lane.b32.xlu0 %v187, 106
      %v953 = vpop.permute.xlu0 %952
      %954 = vrot.lane.b32.xlu0 %v188, 106
      %v955 = vpop.permute.xlu0 %954
      %956 = vrot.lane.b32.xlu0 %v189, 106
      %v957 = vpop.permute.xlu0 %956
      %vm958 = vcmask 867328
      %v959 = vsel %vm958, %v951, %v953
      %v960 = vsel %vm958, %v953, %v955
      %v961 = vsel %vm958, %v955, %v957
      %v963 = vsel %vm202, %v949, 0
      %v966 = vand.u32 %v959, %v209
      %v969 = vand.u32 %v960, %v209
      %v972 = vand.u32 %v961, %v209
      %974 = vmatprep.subr.bf16.mxu0 0
      %975 = vmatpush1.bf16.msra.mxu0 0
      %976 = vmatprep.subr.bf16.mxu0 0
      %977 = vmatpush1.bf16.msra.mxu0 0
      %978 = vmatprep.subr.bf16.mxu0 0
      %979 = vmatpush1.bf16.msra.mxu0 0
      %980 = vmatprep.subr.bf16.mxu0 0
      %981 = vmatpush1.bf16.msra.mxu0 0
      %982 = vmatprep.subr.bf16.mxu0 0
      %983 = vmatpush1.bf16.msra.mxu0 0
      %984 = vmatprep.subr.bf16.mxu0 0
      %985 = vmatpush1.bf16.msra.mxu0 0
      %986 = vmatprep.subr.bf16.mxu0 0
      %987 = vmatpush1.bf16.msra.mxu0 0
      %988 = vmatprep.subr.bf16.mxu0 %v969
      %989 = vmatpush1.bf16.msra.mxu0 %v966
      %990 = vmatprep.subr.bf16.mxu0 0
      %991 = vmatpush2.bf16.msra.mxu0 0
      %992 = vmatprep.subr.bf16.mxu0 0
      %993 = vmatpush2.bf16.msra.mxu0 0
      %994 = vmatprep.subr.bf16.mxu0 0
      %995 = vmatpush2.bf16.msra.mxu0 0
      %996 = vmatprep.subr.bf16.mxu0 0
      %997 = vmatpush2.bf16.msra.mxu0 0
      %998 = vmatprep.subr.bf16.mxu0 0
      %999 = vmatpush2.bf16.msra.mxu0 0
      %1000 = vmatprep.subr.bf16.mxu0 0
      %1001 = vmatpush2.bf16.msra.mxu0 0
      %1002 = vmatprep.subr.bf16.mxu0 0
      %1003 = vmatpush2.bf16.msra.mxu0 0
      %1004 = vmatprep.subr.bf16.mxu0 0
      %1005 = vmatpush2.bf16.msra.mxu0 0
      %1006 = vmatprep.mubr.bf16.mxu0 0
      %1007 = vmatmul.mubr.bf16.gmra.mxu0 %v963
      %v1008 = vpop.f32.mrf.mxu0
      %v1009 = vadd.f32 0.0, %v1008
      %v1010 = vpop.f32.mrf.mxu0
      %v1011 = vadd.f32 0.0, %v1010
      %v1012 = vpop.f32.mrf.mxu0
      %v1013 = vpop.f32.mrf.mxu0
      %1014 = vdwg.mxu0
      %1015 = vmatprep.subr.bf16.mxu0 0
      %1016 = vmatpush1.bf16.msra.mxu0 0
      %1017 = vmatprep.subr.bf16.mxu0 0
      %1018 = vmatpush1.bf16.msra.mxu0 0
      %1019 = vmatprep.subr.bf16.mxu0 0
      %1020 = vmatpush1.bf16.msra.mxu0 0
      %1021 = vmatprep.subr.bf16.mxu0 0
      %1022 = vmatpush1.bf16.msra.mxu0 0
      %1023 = vmatprep.subr.bf16.mxu0 0
      %1024 = vmatpush1.bf16.msra.mxu0 0
      %1025 = vmatprep.subr.bf16.mxu0 0
      %1026 = vmatpush1.bf16.msra.mxu0 0
      %1027 = vmatprep.subr.bf16.mxu0 0
      %1028 = vmatpush1.bf16.msra.mxu0 0
      %1029 = vmatprep.subr.bf16.mxu0 0
      %1030 = vmatpush1.bf16.msra.mxu0 %v972
      %1031 = vmatprep.subr.bf16.mxu0 0
      %1032 = vmatpush2.bf16.msra.mxu0 0
      %1033 = vmatprep.subr.bf16.mxu0 0
      %1034 = vmatpush2.bf16.msra.mxu0 0
      %1035 = vmatprep.subr.bf16.mxu0 0
      %1036 = vmatpush2.bf16.msra.mxu0 0
      %1037 = vmatprep.subr.bf16.mxu0 0
      %1038 = vmatpush2.bf16.msra.mxu0 0
      %1039 = vmatprep.subr.bf16.mxu0 0
      %1040 = vmatpush2.bf16.msra.mxu0 0
      %1041 = vmatprep.subr.bf16.mxu0 0
      %1042 = vmatpush2.bf16.msra.mxu0 0
      %1043 = vmatprep.subr.bf16.mxu0 0
      %1044 = vmatpush2.bf16.msra.mxu0 0
      %1045 = vmatprep.subr.bf16.mxu0 0
      %1046 = vmatpush2.bf16.msra.mxu0 0
      %1047 = vmatprep.mubr.bf16.mxu0 0
      %1048 = vmatmul.mubr.bf16.gmra.mxu0 %v963
      %v1049 = vpop.f32.mrf.mxu0
      %v1050 = vadd.f32 0.0, %v1049
      %v1051 = vpop.f32.mrf.mxu0
      %v1052 = vpop.f32.mrf.mxu0
      %v1053 = vpop.f32.mrf.mxu0
      %1054 = vdwg.mxu0
      %v1055 = vadd.f32 %v945, %v1009
      %v1056 = vadd.f32 %v946, %v1011
      %v1057 = vadd.f32 %v947, %v1050
      %s1058 = scalar_lea.vmem %s158, 16
      %v1059 = vld [vmem:[%s1058] sm:$0x3]
      %1060 = vrot.lane.b32.xlu0 %v186, 105
      %v1061 = vpop.permute.xlu0 %1060
      %1062 = vrot.lane.b32.xlu0 %v187, 105
      %v1063 = vpop.permute.xlu0 %1062
      %1064 = vrot.lane.b32.xlu0 %v188, 105
      %v1065 = vpop.permute.xlu0 %1064
      %1066 = vrot.lane.b32.xlu0 %v189, 105
      %v1067 = vpop.permute.xlu0 %1066
      %vm1068 = vcmask 859136
      %v1069 = vsel %vm1068, %v1061, %v1063
      %v1070 = vsel %vm1068, %v1063, %v1065
      %v1071 = vsel %vm1068, %v1065, %v1067
      %v1073 = vsel %vm202, %v1059, 0
      %v1076 = vand.u32 %v1069, %v209
      %v1079 = vand.u32 %v1070, %v209
      %v1082 = vand.u32 %v1071, %v209
      %1084 = vmatprep.subr.bf16.mxu0 0
      %1085 = vmatpush1.bf16.msra.mxu0 0
      %1086 = vmatprep.subr.bf16.mxu0 0
      %1087 = vmatpush1.bf16.msra.mxu0 0
      %1088 = vmatprep.subr.bf16.mxu0 0
      %1089 = vmatpush1.bf16.msra.mxu0 0
      %1090 = vmatprep.subr.bf16.mxu0 0
      %1091 = vmatpush1.bf16.msra.mxu0 0
      %1092 = vmatprep.subr.bf16.mxu0 0
      %1093 = vmatpush1.bf16.msra.mxu0 0
      %1094 = vmatprep.subr.bf16.mxu0 0
      %1095 = vmatpush1.bf16.msra.mxu0 0
      %1096 = vmatprep.subr.bf16.mxu0 0
      %1097 = vmatpush1.bf16.msra.mxu0 0
      %1098 = vmatprep.subr.bf16.mxu0 %v1079
      %1099 = vmatpush1.bf16.msra.mxu0 %v1076
      %1100 = vmatprep.subr.bf16.mxu0 0
      %1101 = vmatpush2.bf16.msra.mxu0 0
      %1102 = vmatprep.subr.bf16.mxu0 0
      %1103 = vmatpush2.bf16.msra.mxu0 0
      %1104 = vmatprep.subr.bf16.mxu0 0
      %1105 = vmatpush2.bf16.msra.mxu0 0
      %1106 = vmatprep.subr.bf16.mxu0 0
      %1107 = vmatpush2.bf16.msra.mxu0 0
      %1108 = vmatprep.subr.bf16.mxu0 0
      %1109 = vmatpush2.bf16.msra.mxu0 0
      %1110 = vmatprep.subr.bf16.mxu0 0
      %1111 = vmatpush2.bf16.msra.mxu0 0
      %1112 = vmatprep.subr.bf16.mxu0 0
      %1113 = vmatpush2.bf16.msra.mxu0 0
      %1114 = vmatprep.subr.bf16.mxu0 0
      %1115 = vmatpush2.bf16.msra.mxu0 0
      %1116 = vmatprep.mubr.bf16.mxu0 0
      %1117 = vmatmul.mubr.bf16.gmra.mxu0 %v1073
      %v1118 = vpop.f32.mrf.mxu0
      %v1119 = vadd.f32 0.0, %v1118
      %v1120 = vpop.f32.mrf.mxu0
      %v1121 = vadd.f32 0.0, %v1120
      %v1122 = vpop.f32.mrf.mxu0
      %v1123 = vpop.f32.mrf.mxu0
      %1124 = vdwg.mxu0
      %1125 = vmatprep.subr.bf16.mxu0 0
      %1126 = vmatpush1.bf16.msra.mxu0 0
      %1127 = vmatprep.subr.bf16.mxu0 0
      %1128 = vmatpush1.bf16.msra.mxu0 0
      %1129 = vmatprep.subr.bf16.mxu0 0
      %1130 = vmatpush1.bf16.msra.mxu0 0
      %1131 = vmatprep.subr.bf16.mxu0 0
      %1132 = vmatpush1.bf16.msra.mxu0 0
      %1133 = vmatprep.subr.bf16.mxu0 0
      %1134 = vmatpush1.bf16.msra.mxu0 0
      %1135 = vmatprep.subr.bf16.mxu0 0
      %1136 = vmatpush1.bf16.msra.mxu0 0
      %1137 = vmatprep.subr.bf16.mxu0 0
      %1138 = vmatpush1.bf16.msra.mxu0 0
      %1139 = vmatprep.subr.bf16.mxu0 0
      %1140 = vmatpush1.bf16.msra.mxu0 %v1082
      %1141 = vmatprep.subr.bf16.mxu0 0
      %1142 = vmatpush2.bf16.msra.mxu0 0
      %1143 = vmatprep.subr.bf16.mxu0 0
      %1144 = vmatpush2.bf16.msra.mxu0 0
      %1145 = vmatprep.subr.bf16.mxu0 0
      %1146 = vmatpush2.bf16.msra.mxu0 0
      %1147 = vmatprep.subr.bf16.mxu0 0
      %1148 = vmatpush2.bf16.msra.mxu0 0
      %1149 = vmatprep.subr.bf16.mxu0 0
      %1150 = vmatpush2.bf16.msra.mxu0 0
      %1151 = vmatprep.subr.bf16.mxu0 0
      %1152 = vmatpush2.bf16.msra.mxu0 0
      %1153 = vmatprep.subr.bf16.mxu0 0
      %1154 = vmatpush2.bf16.msra.mxu0 0
      %1155 = vmatprep.subr.bf16.mxu0 0
      %1156 = vmatpush2.bf16.msra.mxu0 0
      %1157 = vmatprep.mubr.bf16.mxu0 0
      %1158 = vmatmul.mubr.bf16.gmra.mxu0 %v1073
      %v1159 = vpop.f32.mrf.mxu0
      %v1160 = vadd.f32 0.0, %v1159
      %v1161 = vpop.f32.mrf.mxu0
      %v1162 = vpop.f32.mrf.mxu0
      %v1163 = vpop.f32.mrf.mxu0
      %1164 = vdwg.mxu0
      %v1165 = vadd.f32 %v1055, %v1119
      %v1166 = vadd.f32 %v1056, %v1121
      %v1167 = vadd.f32 %v1057, %v1160
      %s1168 = scalar_lea.vmem %s158, 18
      %v1169 = vld [vmem:[%s1168] sm:$0x3]
      %1170 = vrot.lane.b32.xlu0 %v186, 104
      %v1171 = vpop.permute.xlu0 %1170
      %1172 = vrot.lane.b32.xlu0 %v187, 104
      %v1173 = vpop.permute.xlu0 %1172
      %1174 = vrot.lane.b32.xlu0 %v188, 104
      %v1175 = vpop.permute.xlu0 %1174
      %1176 = vrot.lane.b32.xlu0 %v189, 104
      %v1177 = vpop.permute.xlu0 %1176
      %vm1178 = vcmask 850944
      %v1179 = vsel %vm1178, %v1171, %v1173
      %v1180 = vsel %vm1178, %v1173, %v1175
      %v1181 = vsel %vm1178, %v1175, %v1177
      %v1183 = vsel %vm202, %v1169, 0
      %v1186 = vand.u32 %v1179, %v209
      %v1189 = vand.u32 %v1180, %v209
      %v1192 = vand.u32 %v1181, %v209
      %1194 = vmatprep.subr.bf16.mxu0 0
      %1195 = vmatpush1.bf16.msra.mxu0 0
      %1196 = vmatprep.subr.bf16.mxu0 0
      %1197 = vmatpush1.bf16.msra.mxu0 0
      %1198 = vmatprep.subr.bf16.mxu0 0
      %1199 = vmatpush1.bf16.msra.mxu0 0
      %1200 = vmatprep.subr.bf16.mxu0 0
      %1201 = vmatpush1.bf16.msra.mxu0 0
      %1202 = vmatprep.subr.bf16.mxu0 0
      %1203 = vmatpush1.bf16.msra.mxu0 0
      %1204 = vmatprep.subr.bf16.mxu0 0
      %1205 = vmatpush1.bf16.msra.mxu0 0
      %1206 = vmatprep.subr.bf16.mxu0 0
      %1207 = vmatpush1.bf16.msra.mxu0 0
      %1208 = vmatprep.subr.bf16.mxu0 %v1189
      %1209 = vmatpush1.bf16.msra.mxu0 %v1186
      %1210 = vmatprep.subr.bf16.mxu0 0
      %1211 = vmatpush2.bf16.msra.mxu0 0
      %1212 = vmatprep.subr.bf16.mxu0 0
      %1213 = vmatpush2.bf16.msra.mxu0 0
      %1214 = vmatprep.subr.bf16.mxu0 0
      %1215 = vmatpush2.bf16.msra.mxu0 0
      %1216 = vmatprep.subr.bf16.mxu0 0
      %1217 = vmatpush2.bf16.msra.mxu0 0
      %1218 = vmatprep.subr.bf16.mxu0 0
      %1219 = vmatpush2.bf16.msra.mxu0 0
      %1220 = vmatprep.subr.bf16.mxu0 0
      %1221 = vmatpush2.bf16.msra.mxu0 0
      %1222 = vmatprep.subr.bf16.mxu0 0
      %1223 = vmatpush2.bf16.msra.mxu0 0
      %1224 = vmatprep.subr.bf16.mxu0 0
      %1225 = vmatpush2.bf16.msra.mxu0 0
      %1226 = vmatprep.mubr.bf16.mxu0 0
      %1227 = vmatmul.mubr.bf16.gmra.mxu0 %v1183
      %v1228 = vpop.f32.mrf.mxu0
      %v1229 = vadd.f32 0.0, %v1228
      %v1230 = vpop.f32.mrf.mxu0
      %v1231 = vadd.f32 0.0, %v1230
      %v1232 = vpop.f32.mrf.mxu0
      %v1233 = vpop.f32.mrf.mxu0
      %1234 = vdwg.mxu0
      %1235 = vmatprep.subr.bf16.mxu0 0
      %1236 = vmatpush1.bf16.msra.mxu0 0
      %1237 = vmatprep.subr.bf16.mxu0 0
      %1238 = vmatpush1.bf16.msra.mxu0 0
      %1239 = vmatprep.subr.bf16.mxu0 0
      %1240 = vmatpush1.bf16.msra.mxu0 0
      %1241 = vmatprep.subr.bf16.mxu0 0
      %1242 = vmatpush1.bf16.msra.mxu0 0
      %1243 = vmatprep.subr.bf16.mxu0 0
      %1244 = vmatpush1.bf16.msra.mxu0 0
      %1245 = vmatprep.subr.bf16.mxu0 0
      %1246 = vmatpush1.bf16.msra.mxu0 0
      %1247 = vmatprep.subr.bf16.mxu0 0
      %1248 = vmatpush1.bf16.msra.mxu0 0
      %1249 = vmatprep.subr.bf16.mxu0 0
      %1250 = vmatpush1.bf16.msra.mxu0 %v1192
      %1251 = vmatprep.subr.bf16.mxu0 0
      %1252 = vmatpush2.bf16.msra.mxu0 0
      %1253 = vmatprep.subr.bf16.mxu0 0
      %1254 = vmatpush2.bf16.msra.mxu0 0
      %1255 = vmatprep.subr.bf16.mxu0 0
      %1256 = vmatpush2.bf16.msra.mxu0 0
      %1257 = vmatprep.subr.bf16.mxu0 0
      %1258 = vmatpush2.bf16.msra.mxu0 0
      %1259 = vmatprep.subr.bf16.mxu0 0
      %1260 = vmatpush2.bf16.msra.mxu0 0
      %1261 = vmatprep.subr.bf16.mxu0 0
      %1262 = vmatpush2.bf16.msra.mxu0 0
      %1263 = vmatprep.subr.bf16.mxu0 0
      %1264 = vmatpush2.bf16.msra.mxu0 0
      %1265 = vmatprep.subr.bf16.mxu0 0
      %1266 = vmatpush2.bf16.msra.mxu0 0
      %1267 = vmatprep.mubr.bf16.mxu0 0
      %1268 = vmatmul.mubr.bf16.gmra.mxu0 %v1183
      %v1269 = vpop.f32.mrf.mxu0
      %v1270 = vadd.f32 0.0, %v1269
      %v1271 = vpop.f32.mrf.mxu0
      %v1272 = vpop.f32.mrf.mxu0
      %v1273 = vpop.f32.mrf.mxu0
      %1274 = vdwg.mxu0
      %v1275 = vadd.f32 %v1165, %v1229
      %v1276 = vadd.f32 %v1166, %v1231
      %v1277 = vadd.f32 %v1167, %v1270
      %s1278 = scalar_lea.vmem %s158, 20
      %v1279 = vld [vmem:[%s1278] sm:$0x3]
      %1280 = vrot.lane.b32.xlu0 %v186, 88
      %v1281 = vpop.permute.xlu0 %1280
      %1282 = vrot.lane.b32.xlu0 %v187, 88
      %v1283 = vpop.permute.xlu0 %1282
      %1284 = vrot.lane.b32.xlu0 %v188, 88
      %v1285 = vpop.permute.xlu0 %1284
      %1286 = vrot.lane.b32.xlu0 %v189, 88
      %v1287 = vpop.permute.xlu0 %1286
      %vm1288 = vcmask 719872
      %v1289 = vsel %vm1288, %v1281, %v1283
      %v1290 = vsel %vm1288, %v1283, %v1285
      %v1291 = vsel %vm1288, %v1285, %v1287
      %v1293 = vsel %vm202, %v1279, 0
      %v1296 = vand.u32 %v1289, %v209
      %v1299 = vand.u32 %v1290, %v209
      %v1302 = vand.u32 %v1291, %v209
      %1304 = vmatprep.subr.bf16.mxu0 0
      %1305 = vmatpush1.bf16.msra.mxu0 0
      %1306 = vmatprep.subr.bf16.mxu0 0
      %1307 = vmatpush1.bf16.msra.mxu0 0
      %1308 = vmatprep.subr.bf16.mxu0 0
      %1309 = vmatpush1.bf16.msra.mxu0 0
      %1310 = vmatprep.subr.bf16.mxu0 0
      %1311 = vmatpush1.bf16.msra.mxu0 0
      %1312 = vmatprep.subr.bf16.mxu0 0
      %1313 = vmatpush1.bf16.msra.mxu0 0
      %1314 = vmatprep.subr.bf16.mxu0 0
      %1315 = vmatpush1.bf16.msra.mxu0 0
      %1316 = vmatprep.subr.bf16.mxu0 0
      %1317 = vmatpush1.bf16.msra.mxu0 0
      %1318 = vmatprep.subr.bf16.mxu0 %v1299
      %1319 = vmatpush1.bf16.msra.mxu0 %v1296
      %1320 = vmatprep.subr.bf16.mxu0 0
      %1321 = vmatpush2.bf16.msra.mxu0 0
      %1322 = vmatprep.subr.bf16.mxu0 0
      %1323 = vmatpush2.bf16.msra.mxu0 0
      %1324 = vmatprep.subr.bf16.mxu0 0
      %1325 = vmatpush2.bf16.msra.mxu0 0
      %1326 = vmatprep.subr.bf16.mxu0 0
      %1327 = vmatpush2.bf16.msra.mxu0 0
      %1328 = vmatprep.subr.bf16.mxu0 0
      %1329 = vmatpush2.bf16.msra.mxu0 0
      %1330 = vmatprep.subr.bf16.mxu0 0
      %1331 = vmatpush2.bf16.msra.mxu0 0
      %1332 = vmatprep.subr.bf16.mxu0 0
      %1333 = vmatpush2.bf16.msra.mxu0 0
      %1334 = vmatprep.subr.bf16.mxu0 0
      %1335 = vmatpush2.bf16.msra.mxu0 0
      %1336 = vmatprep.mubr.bf16.mxu0 0
      %1337 = vmatmul.mubr.bf16.gmra.mxu0 %v1293
      %v1338 = vpop.f32.mrf.mxu0
      %v1339 = vadd.f32 0.0, %v1338
      %v1340 = vpop.f32.mrf.mxu0
      %v1341 = vadd.f32 0.0, %v1340
      %v1342 = vpop.f32.mrf.mxu0
      %v1343 = vpop.f32.mrf.mxu0
      %1344 = vdwg.mxu0
      %1345 = vmatprep.subr.bf16.mxu0 0
      %1346 = vmatpush1.bf16.msra.mxu0 0
      %1347 = vmatprep.subr.bf16.mxu0 0
      %1348 = vmatpush1.bf16.msra.mxu0 0
      %1349 = vmatprep.subr.bf16.mxu0 0
      %1350 = vmatpush1.bf16.msra.mxu0 0
      %1351 = vmatprep.subr.bf16.mxu0 0
      %1352 = vmatpush1.bf16.msra.mxu0 0
      %1353 = vmatprep.subr.bf16.mxu0 0
      %1354 = vmatpush1.bf16.msra.mxu0 0
      %1355 = vmatprep.subr.bf16.mxu0 0
      %1356 = vmatpush1.bf16.msra.mxu0 0
      %1357 = vmatprep.subr.bf16.mxu0 0
      %1358 = vmatpush1.bf16.msra.mxu0 0
      %1359 = vmatprep.subr.bf16.mxu0 0
      %1360 = vmatpush1.bf16.msra.mxu0 %v1302
      %1361 = vmatprep.subr.bf16.mxu0 0
      %1362 = vmatpush2.bf16.msra.mxu0 0
      %1363 = vmatprep.subr.bf16.mxu0 0
      %1364 = vmatpush2.bf16.msra.mxu0 0
      %1365 = vmatprep.subr.bf16.mxu0 0
      %1366 = vmatpush2.bf16.msra.mxu0 0
      %1367 = vmatprep.subr.bf16.mxu0 0
      %1368 = vmatpush2.bf16.msra.mxu0 0
      %1369 = vmatprep.subr.bf16.mxu0 0
      %1370 = vmatpush2.bf16.msra.mxu0 0
      %1371 = vmatprep.subr.bf16.mxu0 0
      %1372 = vmatpush2.bf16.msra.mxu0 0
      %1373 = vmatprep.subr.bf16.mxu0 0
      %1374 = vmatpush2.bf16.msra.mxu0 0
      %1375 = vmatprep.subr.bf16.mxu0 0
      %1376 = vmatpush2.bf16.msra.mxu0 0
      %1377 = vmatprep.mubr.bf16.mxu0 0
      %1378 = vmatmul.mubr.bf16.gmra.mxu0 %v1293
      %v1379 = vpop.f32.mrf.mxu0
      %v1380 = vadd.f32 0.0, %v1379
      %v1381 = vpop.f32.mrf.mxu0
      %v1382 = vpop.f32.mrf.mxu0
      %v1383 = vpop.f32.mrf.mxu0
      %1384 = vdwg.mxu0
      %v1385 = vadd.f32 %v1275, %v1339
      %v1386 = vadd.f32 %v1276, %v1341
      %v1387 = vadd.f32 %v1277, %v1380
      %s1388 = scalar_lea.vmem %s158, 22
      %v1389 = vld [vmem:[%s1388] sm:$0x3]
      %1390 = vrot.lane.b32.xlu0 %v186, 87
      %v1391 = vpop.permute.xlu0 %1390
      %1392 = vrot.lane.b32.xlu0 %v187, 87
      %v1393 = vpop.permute.xlu0 %1392
      %1394 = vrot.lane.b32.xlu0 %v188, 87
      %v1395 = vpop.permute.xlu0 %1394
      %1396 = vrot.lane.b32.xlu0 %v189, 87
      %v1397 = vpop.permute.xlu0 %1396
      %vm1398 = vcmask 711680
      %v1399 = vsel %vm1398, %v1391, %v1393
      %v1400 = vsel %vm1398, %v1393, %v1395
      %v1401 = vsel %vm1398, %v1395, %v1397
      %v1403 = vsel %vm202, %v1389, 0
      %v1406 = vand.u32 %v1399, %v209
      %v1409 = vand.u32 %v1400, %v209
      %v1412 = vand.u32 %v1401, %v209
      %1414 = vmatprep.subr.bf16.mxu0 0
      %1415 = vmatpush1.bf16.msra.mxu0 0
      %1416 = vmatprep.subr.bf16.mxu0 0
      %1417 = vmatpush1.bf16.msra.mxu0 0
      %1418 = vmatprep.subr.bf16.mxu0 0
      %1419 = vmatpush1.bf16.msra.mxu0 0
      %1420 = vmatprep.subr.bf16.mxu0 0
      %1421 = vmatpush1.bf16.msra.mxu0 0
      %1422 = vmatprep.subr.bf16.mxu0 0
      %1423 = vmatpush1.bf16.msra.mxu0 0
      %1424 = vmatprep.subr.bf16.mxu0 0
      %1425 = vmatpush1.bf16.msra.mxu0 0
      %1426 = vmatprep.subr.bf16.mxu0 0
      %1427 = vmatpush1.bf16.msra.mxu0 0
      %1428 = vmatprep.subr.bf16.mxu0 %v1409
      %1429 = vmatpush1.bf16.msra.mxu0 %v1406
      %1430 = vmatprep.subr.bf16.mxu0 0
      %1431 = vmatpush2.bf16.msra.mxu0 0
      %1432 = vmatprep.subr.bf16.mxu0 0
      %1433 = vmatpush2.bf16.msra.mxu0 0
      %1434 = vmatprep.subr.bf16.mxu0 0
      %1435 = vmatpush2.bf16.msra.mxu0 0
      %1436 = vmatprep.subr.bf16.mxu0 0
      %1437 = vmatpush2.bf16.msra.mxu0 0
      %1438 = vmatprep.subr.bf16.mxu0 0
      %1439 = vmatpush2.bf16.msra.mxu0 0
      %1440 = vmatprep.subr.bf16.mxu0 0
      %1441 = vmatpush2.bf16.msra.mxu0 0
      %1442 = vmatprep.subr.bf16.mxu0 0
      %1443 = vmatpush2.bf16.msra.mxu0 0
      %1444 = vmatprep.subr.bf16.mxu0 0
      %1445 = vmatpush2.bf16.msra.mxu0 0
      %1446 = vmatprep.mubr.bf16.mxu0 0
      %1447 = vmatmul.mubr.bf16.gmra.mxu0 %v1403
      %v1448 = vpop.f32.mrf.mxu0
      %v1449 = vadd.f32 0.0, %v1448
      %v1450 = vpop.f32.mrf.mxu0
      %v1451 = vadd.f32 0.0, %v1450
      %v1452 = vpop.f32.mrf.mxu0
      %v1453 = vpop.f32.mrf.mxu0
      %1454 = vdwg.mxu0
      %1455 = vmatprep.subr.bf16.mxu0 0
      %1456 = vmatpush1.bf16.msra.mxu0 0
      %1457 = vmatprep.subr.bf16.mxu0 0
      %1458 = vmatpush1.bf16.msra.mxu0 0
      %1459 = vmatprep.subr.bf16.mxu0 0
      %1460 = vmatpush1.bf16.msra.mxu0 0
      %1461 = vmatprep.subr.bf16.mxu0 0
      %1462 = vmatpush1.bf16.msra.mxu0 0
      %1463 = vmatprep.subr.bf16.mxu0 0
      %1464 = vmatpush1.bf16.msra.mxu0 0
      %1465 = vmatprep.subr.bf16.mxu0 0
      %1466 = vmatpush1.bf16.msra.mxu0 0
      %1467 = vmatprep.subr.bf16.mxu0 0
      %1468 = vmatpush1.bf16.msra.mxu0 0
      %1469 = vmatprep.subr.bf16.mxu0 0
      %1470 = vmatpush1.bf16.msra.mxu0 %v1412
      %1471 = vmatprep.subr.bf16.mxu0 0
      %1472 = vmatpush2.bf16.msra.mxu0 0
      %1473 = vmatprep.subr.bf16.mxu0 0
      %1474 = vmatpush2.bf16.msra.mxu0 0
      %1475 = vmatprep.subr.bf16.mxu0 0
      %1476 = vmatpush2.bf16.msra.mxu0 0
      %1477 = vmatprep.subr.bf16.mxu0 0
      %1478 = vmatpush2.bf16.msra.mxu0 0
      %1479 = vmatprep.subr.bf16.mxu0 0
      %1480 = vmatpush2.bf16.msra.mxu0 0
      %1481 = vmatprep.subr.bf16.mxu0 0
      %1482 = vmatpush2.bf16.msra.mxu0 0
      %1483 = vmatprep.subr.bf16.mxu0 0
      %1484 = vmatpush2.bf16.msra.mxu0 0
      %1485 = vmatprep.subr.bf16.mxu0 0
      %1486 = vmatpush2.bf16.msra.mxu0 0
      %1487 = vmatprep.mubr.bf16.mxu0 0
      %1488 = vmatmul.mubr.bf16.gmra.mxu0 %v1403
      %v1489 = vpop.f32.mrf.mxu0
      %v1490 = vadd.f32 0.0, %v1489
      %v1491 = vpop.f32.mrf.mxu0
      %v1492 = vpop.f32.mrf.mxu0
      %v1493 = vpop.f32.mrf.mxu0
      %1494 = vdwg.mxu0
      %v1495 = vadd.f32 %v1385, %v1449
      %v1496 = vadd.f32 %v1386, %v1451
      %v1497 = vadd.f32 %v1387, %v1490
      %s1498 = scalar_lea.vmem %s158, 24
      %v1499 = vld [vmem:[%s1498] sm:$0x3]
      %1500 = vrot.lane.b32.xlu0 %v186, 86
      %v1501 = vpop.permute.xlu0 %1500
      %1502 = vrot.lane.b32.xlu0 %v187, 86
      %v1503 = vpop.permute.xlu0 %1502
      %1504 = vrot.lane.b32.xlu0 %v188, 86
      %v1505 = vpop.permute.xlu0 %1504
      %1506 = vrot.lane.b32.xlu0 %v189, 86
      %v1507 = vpop.permute.xlu0 %1506
      %vm1508 = vcmask 703488
      %v1509 = vsel %vm1508, %v1501, %v1503
      %v1510 = vsel %vm1508, %v1503, %v1505
      %v1511 = vsel %vm1508, %v1505, %v1507
      %v1513 = vsel %vm202, %v1499, 0
      %v1516 = vand.u32 %v1509, %v209
      %v1519 = vand.u32 %v1510, %v209
      %v1522 = vand.u32 %v1511, %v209
      %1524 = vmatprep.subr.bf16.mxu0 0
      %1525 = vmatpush1.bf16.msra.mxu0 0
      %1526 = vmatprep.subr.bf16.mxu0 0
      %1527 = vmatpush1.bf16.msra.mxu0 0
      %1528 = vmatprep.subr.bf16.mxu0 0
      %1529 = vmatpush1.bf16.msra.mxu0 0
      %1530 = vmatprep.subr.bf16.mxu0 0
      %1531 = vmatpush1.bf16.msra.mxu0 0
      %1532 = vmatprep.subr.bf16.mxu0 0
      %1533 = vmatpush1.bf16.msra.mxu0 0
      %1534 = vmatprep.subr.bf16.mxu0 0
      %1535 = vmatpush1.bf16.msra.mxu0 0
      %1536 = vmatprep.subr.bf16.mxu0 0
      %1537 = vmatpush1.bf16.msra.mxu0 0
      %1538 = vmatprep.subr.bf16.mxu0 %v1519
      %1539 = vmatpush1.bf16.msra.mxu0 %v1516
      %1540 = vmatprep.subr.bf16.mxu0 0
      %1541 = vmatpush2.bf16.msra.mxu0 0
      %1542 = vmatprep.subr.bf16.mxu0 0
      %1543 = vmatpush2.bf16.msra.mxu0 0
      %1544 = vmatprep.subr.bf16.mxu0 0
      %1545 = vmatpush2.bf16.msra.mxu0 0
      %1546 = vmatprep.subr.bf16.mxu0 0
      %1547 = vmatpush2.bf16.msra.mxu0 0
      %1548 = vmatprep.subr.bf16.mxu0 0
      %1549 = vmatpush2.bf16.msra.mxu0 0
      %1550 = vmatprep.subr.bf16.mxu0 0
      %1551 = vmatpush2.bf16.msra.mxu0 0
      %1552 = vmatprep.subr.bf16.mxu0 0
      %1553 = vmatpush2.bf16.msra.mxu0 0
      %1554 = vmatprep.subr.bf16.mxu0 0
      %1555 = vmatpush2.bf16.msra.mxu0 0
      %1556 = vmatprep.mubr.bf16.mxu0 0
      %1557 = vmatmul.mubr.bf16.gmra.mxu0 %v1513
      %v1558 = vpop.f32.mrf.mxu0
      %v1559 = vadd.f32 0.0, %v1558
      %v1560 = vpop.f32.mrf.mxu0
      %v1561 = vadd.f32 0.0, %v1560
      %v1562 = vpop.f32.mrf.mxu0
      %v1563 = vpop.f32.mrf.mxu0
      %1564 = vdwg.mxu0
      %1565 = vmatprep.subr.bf16.mxu0 0
      %1566 = vmatpush1.bf16.msra.mxu0 0
      %1567 = vmatprep.subr.bf16.mxu0 0
      %1568 = vmatpush1.bf16.msra.mxu0 0
      %1569 = vmatprep.subr.bf16.mxu0 0
      %1570 = vmatpush1.bf16.msra.mxu0 0
      %1571 = vmatprep.subr.bf16.mxu0 0
      %1572 = vmatpush1.bf16.msra.mxu0 0
      %1573 = vmatprep.subr.bf16.mxu0 0
      %1574 = vmatpush1.bf16.msra.mxu0 0
      %1575 = vmatprep.subr.bf16.mxu0 0
      %1576 = vmatpush1.bf16.msra.mxu0 0
      %1577 = vmatprep.subr.bf16.mxu0 0
      %1578 = vmatpush1.bf16.msra.mxu0 0
      %1579 = vmatprep.subr.bf16.mxu0 0
      %1580 = vmatpush1.bf16.msra.mxu0 %v1522
      %1581 = vmatprep.subr.bf16.mxu0 0
      %1582 = vmatpush2.bf16.msra.mxu0 0
      %1583 = vmatprep.subr.bf16.mxu0 0
      %1584 = vmatpush2.bf16.msra.mxu0 0
      %1585 = vmatprep.subr.bf16.mxu0 0
      %1586 = vmatpush2.bf16.msra.mxu0 0
      %1587 = vmatprep.subr.bf16.mxu0 0
      %1588 = vmatpush2.bf16.msra.mxu0 0
      %1589 = vmatprep.subr.bf16.mxu0 0
      %1590 = vmatpush2.bf16.msra.mxu0 0
      %1591 = vmatprep.subr.bf16.mxu0 0
      %1592 = vmatpush2.bf16.msra.mxu0 0
      %1593 = vmatprep.subr.bf16.mxu0 0
      %1594 = vmatpush2.bf16.msra.mxu0 0
      %1595 = vmatprep.subr.bf16.mxu0 0
      %1596 = vmatpush2.bf16.msra.mxu0 0
      %1597 = vmatprep.mubr.bf16.mxu0 0
      %1598 = vmatmul.mubr.bf16.gmra.mxu0 %v1513
      %v1599 = vpop.f32.mrf.mxu0
      %v1600 = vadd.f32 0.0, %v1599
      %v1601 = vpop.f32.mrf.mxu0
      %v1602 = vpop.f32.mrf.mxu0
      %v1603 = vpop.f32.mrf.mxu0
      %1604 = vdwg.mxu0
      %v1605 = vadd.f32 %v1495, %v1559
      %v1606 = vadd.f32 %v1496, %v1561
      %v1607 = vadd.f32 %v1497, %v1600
      %s1608 = scalar_lea.vmem %s158, 26
      %v1609 = vld [vmem:[%s1608] sm:$0x3]
      %1610 = vrot.lane.b32.xlu0 %v186, 85
      %v1611 = vpop.permute.xlu0 %1610
      %1612 = vrot.lane.b32.xlu0 %v187, 85
      %v1613 = vpop.permute.xlu0 %1612
      %1614 = vrot.lane.b32.xlu0 %v188, 85
      %v1615 = vpop.permute.xlu0 %1614
      %1616 = vrot.lane.b32.xlu0 %v189, 85
      %v1617 = vpop.permute.xlu0 %1616
      %vm1618 = vcmask 695296
      %v1619 = vsel %vm1618, %v1611, %v1613
      %v1620 = vsel %vm1618, %v1613, %v1615
      %v1621 = vsel %vm1618, %v1615, %v1617
      %v1623 = vsel %vm202, %v1609, 0
      %v1626 = vand.u32 %v1619, %v209
      %v1629 = vand.u32 %v1620, %v209
      %v1632 = vand.u32 %v1621, %v209
      %1634 = vmatprep.subr.bf16.mxu0 0
      %1635 = vmatpush1.bf16.msra.mxu0 0
      %1636 = vmatprep.subr.bf16.mxu0 0
      %1637 = vmatpush1.bf16.msra.mxu0 0
      %1638 = vmatprep.subr.bf16.mxu0 0
      %1639 = vmatpush1.bf16.msra.mxu0 0
      %1640 = vmatprep.subr.bf16.mxu0 0
      %1641 = vmatpush1.bf16.msra.mxu0 0
      %1642 = vmatprep.subr.bf16.mxu0 0
      %1643 = vmatpush1.bf16.msra.mxu0 0
      %1644 = vmatprep.subr.bf16.mxu0 0
      %1645 = vmatpush1.bf16.msra.mxu0 0
      %1646 = vmatprep.subr.bf16.mxu0 0
      %1647 = vmatpush1.bf16.msra.mxu0 0
      %1648 = vmatprep.subr.bf16.mxu0 %v1629
      %1649 = vmatpush1.bf16.msra.mxu0 %v1626
      %1650 = vmatprep.subr.bf16.mxu0 0
      %1651 = vmatpush2.bf16.msra.mxu0 0
      %1652 = vmatprep.subr.bf16.mxu0 0
      %1653 = vmatpush2.bf16.msra.mxu0 0
      %1654 = vmatprep.subr.bf16.mxu0 0
      %1655 = vmatpush2.bf16.msra.mxu0 0
      %1656 = vmatprep.subr.bf16.mxu0 0
      %1657 = vmatpush2.bf16.msra.mxu0 0
      %1658 = vmatprep.subr.bf16.mxu0 0
      %1659 = vmatpush2.bf16.msra.mxu0 0
      %1660 = vmatprep.subr.bf16.mxu0 0
      %1661 = vmatpush2.bf16.msra.mxu0 0
      %1662 = vmatprep.subr.bf16.mxu0 0
      %1663 = vmatpush2.bf16.msra.mxu0 0
      %1664 = vmatprep.subr.bf16.mxu0 0
      %1665 = vmatpush2.bf16.msra.mxu0 0
      %1666 = vmatprep.mubr.bf16.mxu0 0
      %1667 = vmatmul.mubr.bf16.gmra.mxu0 %v1623
      %v1668 = vpop.f32.mrf.mxu0
      %v1669 = vadd.f32 0.0, %v1668
      %v1670 = vpop.f32.mrf.mxu0
      %v1671 = vadd.f32 0.0, %v1670
      %v1672 = vpop.f32.mrf.mxu0
      %v1673 = vpop.f32.mrf.mxu0
      %1674 = vdwg.mxu0
      %1675 = vmatprep.subr.bf16.mxu0 0
      %1676 = vmatpush1.bf16.msra.mxu0 0
      %1677 = vmatprep.subr.bf16.mxu0 0
      %1678 = vmatpush1.bf16.msra.mxu0 0
      %1679 = vmatprep.subr.bf16.mxu0 0
      %1680 = vmatpush1.bf16.msra.mxu0 0
      %1681 = vmatprep.subr.bf16.mxu0 0
      %1682 = vmatpush1.bf16.msra.mxu0 0
      %1683 = vmatprep.subr.bf16.mxu0 0
      %1684 = vmatpush1.bf16.msra.mxu0 0
      %1685 = vmatprep.subr.bf16.mxu0 0
      %1686 = vmatpush1.bf16.msra.mxu0 0
      %1687 = vmatprep.subr.bf16.mxu0 0
      %1688 = vmatpush1.bf16.msra.mxu0 0
      %1689 = vmatprep.subr.bf16.mxu0 0
      %1690 = vmatpush1.bf16.msra.mxu0 %v1632
      %1691 = vmatprep.subr.bf16.mxu0 0
      %1692 = vmatpush2.bf16.msra.mxu0 0
      %1693 = vmatprep.subr.bf16.mxu0 0
      %1694 = vmatpush2.bf16.msra.mxu0 0
      %1695 = vmatprep.subr.bf16.mxu0 0
      %1696 = vmatpush2.bf16.msra.mxu0 0
      %1697 = vmatprep.subr.bf16.mxu0 0
      %1698 = vmatpush2.bf16.msra.mxu0 0
      %1699 = vmatprep.subr.bf16.mxu0 0
      %1700 = vmatpush2.bf16.msra.mxu0 0
      %1701 = vmatprep.subr.bf16.mxu0 0
      %1702 = vmatpush2.bf16.msra.mxu0 0
      %1703 = vmatprep.subr.bf16.mxu0 0
      %1704 = vmatpush2.bf16.msra.mxu0 0
      %1705 = vmatprep.subr.bf16.mxu0 0
      %1706 = vmatpush2.bf16.msra.mxu0 0
      %1707 = vmatprep.mubr.bf16.mxu0 0
      %1708 = vmatmul.mubr.bf16.gmra.mxu0 %v1623
      %v1709 = vpop.f32.mrf.mxu0
      %v1710 = vadd.f32 0.0, %v1709
      %v1711 = vpop.f32.mrf.mxu0
      %v1712 = vpop.f32.mrf.mxu0
      %v1713 = vpop.f32.mrf.mxu0
      %1714 = vdwg.mxu0
      %v1715 = vadd.f32 %v1605, %v1669
      %v1716 = vadd.f32 %v1606, %v1671
      %v1717 = vadd.f32 %v1607, %v1710
      %s1718 = scalar_lea.vmem %s158, 28
      %v1719 = vld [vmem:[%s1718] sm:$0x3]
      %1720 = vrot.lane.b32.xlu0 %v186, 84
      %v1721 = vpop.permute.xlu0 %1720
      %1722 = vrot.lane.b32.xlu0 %v187, 84
      %v1723 = vpop.permute.xlu0 %1722
      %1724 = vrot.lane.b32.xlu0 %v188, 84
      %v1725 = vpop.permute.xlu0 %1724
      %1726 = vrot.lane.b32.xlu0 %v189, 84
      %v1727 = vpop.permute.xlu0 %1726
      %vm1728 = vcmask 687104
      %v1729 = vsel %vm1728, %v1721, %v1723
      %v1730 = vsel %vm1728, %v1723, %v1725
      %v1731 = vsel %vm1728, %v1725, %v1727
      %v1733 = vsel %vm202, %v1719, 0
      %v1736 = vand.u32 %v1729, %v209
      %v1739 = vand.u32 %v1730, %v209
      %v1742 = vand.u32 %v1731, %v209
      %1744 = vmatprep.subr.bf16.mxu0 0
      %1745 = vmatpush1.bf16.msra.mxu0 0
      %1746 = vmatprep.subr.bf16.mxu0 0
      %1747 = vmatpush1.bf16.msra.mxu0 0
      %1748 = vmatprep.subr.bf16.mxu0 0
      %1749 = vmatpush1.bf16.msra.mxu0 0
      %1750 = vmatprep.subr.bf16.mxu0 0
      %1751 = vmatpush1.bf16.msra.mxu0 0
      %1752 = vmatprep.subr.bf16.mxu0 0
      %1753 = vmatpush1.bf16.msra.mxu0 0
      %1754 = vmatprep.subr.bf16.mxu0 0
      %1755 = vmatpush1.bf16.msra.mxu0 0
      %1756 = vmatprep.subr.bf16.mxu0 0
      %1757 = vmatpush1.bf16.msra.mxu0 0
      %1758 = vmatprep.subr.bf16.mxu0 %v1739
      %1759 = vmatpush1.bf16.msra.mxu0 %v1736
      %1760 = vmatprep.subr.bf16.mxu0 0
      %1761 = vmatpush2.bf16.msra.mxu0 0
      %1762 = vmatprep.subr.bf16.mxu0 0
      %1763 = vmatpush2.bf16.msra.mxu0 0
      %1764 = vmatprep.subr.bf16.mxu0 0
      %1765 = vmatpush2.bf16.msra.mxu0 0
      %1766 = vmatprep.subr.bf16.mxu0 0
      %1767 = vmatpush2.bf16.msra.mxu0 0
      %1768 = vmatprep.subr.bf16.mxu0 0
      %1769 = vmatpush2.bf16.msra.mxu0 0
      %1770 = vmatprep.subr.bf16.mxu0 0
      %1771 = vmatpush2.bf16.msra.mxu0 0
      %1772 = vmatprep.subr.bf16.mxu0 0
      %1773 = vmatpush2.bf16.msra.mxu0 0
      %1774 = vmatprep.subr.bf16.mxu0 0
      %1775 = vmatpush2.bf16.msra.mxu0 0
      %1776 = vmatprep.mubr.bf16.mxu0 0
      %1777 = vmatmul.mubr.bf16.gmra.mxu0 %v1733
      %v1778 = vpop.f32.mrf.mxu0
      %v1779 = vadd.f32 0.0, %v1778
      %v1780 = vpop.f32.mrf.mxu0
      %v1781 = vadd.f32 0.0, %v1780
      %v1782 = vpop.f32.mrf.mxu0
      %v1783 = vpop.f32.mrf.mxu0
      %1784 = vdwg.mxu0
      %1785 = vmatprep.subr.bf16.mxu0 0
      %1786 = vmatpush1.bf16.msra.mxu0 0
      %1787 = vmatprep.subr.bf16.mxu0 0
      %1788 = vmatpush1.bf16.msra.mxu0 0
      %1789 = vmatprep.subr.bf16.mxu0 0
      %1790 = vmatpush1.bf16.msra.mxu0 0
      %1791 = vmatprep.subr.bf16.mxu0 0
      %1792 = vmatpush1.bf16.msra.mxu0 0
      %1793 = vmatprep.subr.bf16.mxu0 0
      %1794 = vmatpush1.bf16.msra.mxu0 0
      %1795 = vmatprep.subr.bf16.mxu0 0
      %1796 = vmatpush1.bf16.msra.mxu0 0
      %1797 = vmatprep.subr.bf16.mxu0 0
      %1798 = vmatpush1.bf16.msra.mxu0 0
      %1799 = vmatprep.subr.bf16.mxu0 0
      %1800 = vmatpush1.bf16.msra.mxu0 %v1742
      %1801 = vmatprep.subr.bf16.mxu0 0
      %1802 = vmatpush2.bf16.msra.mxu0 0
      %1803 = vmatprep.subr.bf16.mxu0 0
      %1804 = vmatpush2.bf16.msra.mxu0 0
      %1805 = vmatprep.subr.bf16.mxu0 0
      %1806 = vmatpush2.bf16.msra.mxu0 0
      %1807 = vmatprep.subr.bf16.mxu0 0
      %1808 = vmatpush2.bf16.msra.mxu0 0
      %1809 = vmatprep.subr.bf16.mxu0 0
      %1810 = vmatpush2.bf16.msra.mxu0 0
      %1811 = vmatprep.subr.bf16.mxu0 0
      %1812 = vmatpush2.bf16.msra.mxu0 0
      %1813 = vmatprep.subr.bf16.mxu0 0
      %1814 = vmatpush2.bf16.msra.mxu0 0
      %1815 = vmatprep.subr.bf16.mxu0 0
      %1816 = vmatpush2.bf16.msra.mxu0 0
      %1817 = vmatprep.mubr.bf16.mxu0 0
      %1818 = vmatmul.mubr.bf16.gmra.mxu0 %v1733
      %v1819 = vpop.f32.mrf.mxu0
      %v1820 = vadd.f32 0.0, %v1819
      %v1821 = vpop.f32.mrf.mxu0
      %v1822 = vpop.f32.mrf.mxu0
      %v1823 = vpop.f32.mrf.mxu0
      %1824 = vdwg.mxu0
      %v1825 = vadd.f32 %v1715, %v1779
      %v1826 = vadd.f32 %v1716, %v1781
      %v1827 = vadd.f32 %v1717, %v1820
      %s1828 = scalar_lea.vmem %s158, 30
      %v1829 = vld [vmem:[%s1828] sm:$0x3]
      %1830 = vrot.lane.b32.xlu0 %v186, 68
      %v1831 = vpop.permute.xlu0 %1830
      %1832 = vrot.lane.b32.xlu0 %v187, 68
      %v1833 = vpop.permute.xlu0 %1832
      %1834 = vrot.lane.b32.xlu0 %v188, 68
      %v1835 = vpop.permute.xlu0 %1834
      %1836 = vrot.lane.b32.xlu0 %v189, 68
      %v1837 = vpop.permute.xlu0 %1836
      %vm1838 = vcmask 556032
      %v1839 = vsel %vm1838, %v1831, %v1833
      %v1840 = vsel %vm1838, %v1833, %v1835
      %v1841 = vsel %vm1838, %v1835, %v1837
      %v1843 = vsel %vm202, %v1829, 0
      %v1846 = vand.u32 %v1839, %v209
      %v1849 = vand.u32 %v1840, %v209
      %v1852 = vand.u32 %v1841, %v209
      %1854 = vmatprep.subr.bf16.mxu0 0
      %1855 = vmatpush1.bf16.msra.mxu0 0
      %1856 = vmatprep.subr.bf16.mxu0 0
      %1857 = vmatpush1.bf16.msra.mxu0 0
      %1858 = vmatprep.subr.bf16.mxu0 0
      %1859 = vmatpush1.bf16.msra.mxu0 0
      %1860 = vmatprep.subr.bf16.mxu0 0
      %1861 = vmatpush1.bf16.msra.mxu0 0
      %1862 = vmatprep.subr.bf16.mxu0 0
      %1863 = vmatpush1.bf16.msra.mxu0 0
      %1864 = vmatprep.subr.bf16.mxu0 0
      %1865 = vmatpush1.bf16.msra.mxu0 0
      %1866 = vmatprep.subr.bf16.mxu0 0
      %1867 = vmatpush1.bf16.msra.mxu0 0
      %1868 = vmatprep.subr.bf16.mxu0 %v1849
      %1869 = vmatpush1.bf16.msra.mxu0 %v1846
      %1870 = vmatprep.subr.bf16.mxu0 0
      %1871 = vmatpush2.bf16.msra.mxu0 0
      %1872 = vmatprep.subr.bf16.mxu0 0
      %1873 = vmatpush2.bf16.msra.mxu0 0
      %1874 = vmatprep.subr.bf16.mxu0 0
      %1875 = vmatpush2.bf16.msra.mxu0 0
      %1876 = vmatprep.subr.bf16.mxu0 0
      %1877 = vmatpush2.bf16.msra.mxu0 0
      %1878 = vmatprep.subr.bf16.mxu0 0
      %1879 = vmatpush2.bf16.msra.mxu0 0
      %1880 = vmatprep.subr.bf16.mxu0 0
      %1881 = vmatpush2.bf16.msra.mxu0 0
      %1882 = vmatprep.subr.bf16.mxu0 0
      %1883 = vmatpush2.bf16.msra.mxu0 0
      %1884 = vmatprep.subr.bf16.mxu0 0
      %1885 = vmatpush2.bf16.msra.mxu0 0
      %1886 = vmatprep.mubr.bf16.mxu0 0
      %1887 = vmatmul.mubr.bf16.gmra.mxu0 %v1843
      %v1888 = vpop.f32.mrf.mxu0
      %v1889 = vadd.f32 0.0, %v1888
      %v1890 = vpop.f32.mrf.mxu0
      %v1891 = vadd.f32 0.0, %v1890
      %v1892 = vpop.f32.mrf.mxu0
      %v1893 = vpop.f32.mrf.mxu0
      %1894 = vdwg.mxu0
      %1895 = vmatprep.subr.bf16.mxu0 0
      %1896 = vmatpush1.bf16.msra.mxu0 0
      %1897 = vmatprep.subr.bf16.mxu0 0
      %1898 = vmatpush1.bf16.msra.mxu0 0
      %1899 = vmatprep.subr.bf16.mxu0 0
      %1900 = vmatpush1.bf16.msra.mxu0 0
      %1901 = vmatprep.subr.bf16.mxu0 0
      %1902 = vmatpush1.bf16.msra.mxu0 0
      %1903 = vmatprep.subr.bf16.mxu0 0
      %1904 = vmatpush1.bf16.msra.mxu0 0
      %1905 = vmatprep.subr.bf16.mxu0 0
      %1906 = vmatpush1.bf16.msra.mxu0 0
      %1907 = vmatprep.subr.bf16.mxu0 0
      %1908 = vmatpush1.bf16.msra.mxu0 0
      %1909 = vmatprep.subr.bf16.mxu0 0
      %1910 = vmatpush1.bf16.msra.mxu0 %v1852
      %1911 = vmatprep.subr.bf16.mxu0 0
      %1912 = vmatpush2.bf16.msra.mxu0 0
      %1913 = vmatprep.subr.bf16.mxu0 0
      %1914 = vmatpush2.bf16.msra.mxu0 0
      %1915 = vmatprep.subr.bf16.mxu0 0
      %1916 = vmatpush2.bf16.msra.mxu0 0
      %1917 = vmatprep.subr.bf16.mxu0 0
      %1918 = vmatpush2.bf16.msra.mxu0 0
      %1919 = vmatprep.subr.bf16.mxu0 0
      %1920 = vmatpush2.bf16.msra.mxu0 0
      %1921 = vmatprep.subr.bf16.mxu0 0
      %1922 = vmatpush2.bf16.msra.mxu0 0
      %1923 = vmatprep.subr.bf16.mxu0 0
      %1924 = vmatpush2.bf16.msra.mxu0 0
      %1925 = vmatprep.subr.bf16.mxu0 0
      %1926 = vmatpush2.bf16.msra.mxu0 0
      %1927 = vmatprep.mubr.bf16.mxu0 0
      %1928 = vmatmul.mubr.bf16.gmra.mxu0 %v1843
      %v1929 = vpop.f32.mrf.mxu0
      %v1930 = vadd.f32 0.0, %v1929
      %v1931 = vpop.f32.mrf.mxu0
      %v1932 = vpop.f32.mrf.mxu0
      %v1933 = vpop.f32.mrf.mxu0
      %1934 = vdwg.mxu0
      %v1935 = vadd.f32 %v1825, %v1889
      %v1936 = vadd.f32 %v1826, %v1891
      %v1937 = vadd.f32 %v1827, %v1930
      %s1938 = scalar_lea.vmem %s158, 32
      %v1939 = vld [vmem:[%s1938] sm:$0x3]
      %1940 = vrot.lane.b32.xlu0 %v186, 67
      %v1941 = vpop.permute.xlu0 %1940
      %1942 = vrot.lane.b32.xlu0 %v187, 67
      %v1943 = vpop.permute.xlu0 %1942
      %1944 = vrot.lane.b32.xlu0 %v188, 67
      %v1945 = vpop.permute.xlu0 %1944
      %1946 = vrot.lane.b32.xlu0 %v189, 67
      %v1947 = vpop.permute.xlu0 %1946
      %vm1948 = vcmask 547840
      %v1949 = vsel %vm1948, %v1941, %v1943
      %v1950 = vsel %vm1948, %v1943, %v1945
      %v1951 = vsel %vm1948, %v1945, %v1947
      %v1953 = vsel %vm202, %v1939, 0
      %v1956 = vand.u32 %v1949, %v209
      %v1959 = vand.u32 %v1950, %v209
      %v1962 = vand.u32 %v1951, %v209
      %1964 = vmatprep.subr.bf16.mxu0 0
      %1965 = vmatpush1.bf16.msra.mxu0 0
      %1966 = vmatprep.subr.bf16.mxu0 0
      %1967 = vmatpush1.bf16.msra.mxu0 0
      %1968 = vmatprep.subr.bf16.mxu0 0
      %1969 = vmatpush1.bf16.msra.mxu0 0
      %1970 = vmatprep.subr.bf16.mxu0 0
      %1971 = vmatpush1.bf16.msra.mxu0 0
      %1972 = vmatprep.subr.bf16.mxu0 0
      %1973 = vmatpush1.bf16.msra.mxu0 0
      %1974 = vmatprep.subr.bf16.mxu0 0
      %1975 = vmatpush1.bf16.msra.mxu0 0
      %1976 = vmatprep.subr.bf16.mxu0 0
      %1977 = vmatpush1.bf16.msra.mxu0 0
      %1978 = vmatprep.subr.bf16.mxu0 %v1959
      %1979 = vmatpush1.bf16.msra.mxu0 %v1956
      %1980 = vmatprep.subr.bf16.mxu0 0
      %1981 = vmatpush2.bf16.msra.mxu0 0
      %1982 = vmatprep.subr.bf16.mxu0 0
      %1983 = vmatpush2.bf16.msra.mxu0 0
      %1984 = vmatprep.subr.bf16.mxu0 0
      %1985 = vmatpush2.bf16.msra.mxu0 0
      %1986 = vmatprep.subr.bf16.mxu0 0
      %1987 = vmatpush2.bf16.msra.mxu0 0
      %1988 = vmatprep.subr.bf16.mxu0 0
      %1989 = vmatpush2.bf16.msra.mxu0 0
      %1990 = vmatprep.subr.bf16.mxu0 0
      %1991 = vmatpush2.bf16.msra.mxu0 0
      %1992 = vmatprep.subr.bf16.mxu0 0
      %1993 = vmatpush2.bf16.msra.mxu0 0
      %1994 = vmatprep.subr.bf16.mxu0 0
      %1995 = vmatpush2.bf16.msra.mxu0 0
      %1996 = vmatprep.mubr.bf16.mxu0 0
      %1997 = vmatmul.mubr.bf16.gmra.mxu0 %v1953
      %v1998 = vpop.f32.mrf.mxu0
      %v1999 = vadd.f32 0.0, %v1998
      %v2000 = vpop.f32.mrf.mxu0
      %v2001 = vadd.f32 0.0, %v2000
      %v2002 = vpop.f32.mrf.mxu0
      %v2003 = vpop.f32.mrf.mxu0
      %2004 = vdwg.mxu0
      %2005 = vmatprep.subr.bf16.mxu0 0
      %2006 = vmatpush1.bf16.msra.mxu0 0
      %2007 = vmatprep.subr.bf16.mxu0 0
      %2008 = vmatpush1.bf16.msra.mxu0 0
      %2009 = vmatprep.subr.bf16.mxu0 0
      %2010 = vmatpush1.bf16.msra.mxu0 0
      %2011 = vmatprep.subr.bf16.mxu0 0
      %2012 = vmatpush1.bf16.msra.mxu0 0
      %2013 = vmatprep.subr.bf16.mxu0 0
      %2014 = vmatpush1.bf16.msra.mxu0 0
      %2015 = vmatprep.subr.bf16.mxu0 0
      %2016 = vmatpush1.bf16.msra.mxu0 0
      %2017 = vmatprep.subr.bf16.mxu0 0
      %2018 = vmatpush1.bf16.msra.mxu0 0
      %2019 = vmatprep.subr.bf16.mxu0 0
      %2020 = vmatpush1.bf16.msra.mxu0 %v1962
      %2021 = vmatprep.subr.bf16.mxu0 0
      %2022 = vmatpush2.bf16.msra.mxu0 0
      %2023 = vmatprep.subr.bf16.mxu0 0
      %2024 = vmatpush2.bf16.msra.mxu0 0
      %2025 = vmatprep.subr.bf16.mxu0 0
      %2026 = vmatpush2.bf16.msra.mxu0 0
      %2027 = vmatprep.subr.bf16.mxu0 0
      %2028 = vmatpush2.bf16.msra.mxu0 0
      %2029 = vmatprep.subr.bf16.mxu0 0
      %2030 = vmatpush2.bf16.msra.mxu0 0
      %2031 = vmatprep.subr.bf16.mxu0 0
      %2032 = vmatpush2.bf16.msra.mxu0 0
      %2033 = vmatprep.subr.bf16.mxu0 0
      %2034 = vmatpush2.bf16.msra.mxu0 0
      %2035 = vmatprep.subr.bf16.mxu0 0
      %2036 = vmatpush2.bf16.msra.mxu0 0
      %2037 = vmatprep.mubr.bf16.mxu0 0
      %2038 = vmatmul.mubr.bf16.gmra.mxu0 %v1953
      %v2039 = vpop.f32.mrf.mxu0
      %v2040 = vadd.f32 0.0, %v2039
      %v2041 = vpop.f32.mrf.mxu0
      %v2042 = vpop.f32.mrf.mxu0
      %v2043 = vpop.f32.mrf.mxu0
      %2044 = vdwg.mxu0
      %v2045 = vadd.f32 %v1935, %v1999
      %v2046 = vadd.f32 %v1936, %v2001
      %v2047 = vadd.f32 %v1937, %v2040
      %s2048 = scalar_lea.vmem %s158, 34
      %v2049 = vld [vmem:[%s2048] sm:$0x3]
      %2050 = vrot.lane.b32.xlu0 %v186, 66
      %v2051 = vpop.permute.xlu0 %2050
      %2052 = vrot.lane.b32.xlu0 %v187, 66
      %v2053 = vpop.permute.xlu0 %2052
      %2054 = vrot.lane.b32.xlu0 %v188, 66
      %v2055 = vpop.permute.xlu0 %2054
      %2056 = vrot.lane.b32.xlu0 %v189, 66
      %v2057 = vpop.permute.xlu0 %2056
      %vm2058 = vcmask 539648
      %v2059 = vsel %vm2058, %v2051, %v2053
      %v2060 = vsel %vm2058, %v2053, %v2055
      %v2061 = vsel %vm2058, %v2055, %v2057
      %v2063 = vsel %vm202, %v2049, 0
      %v2066 = vand.u32 %v2059, %v209
      %v2069 = vand.u32 %v2060, %v209
      %v2072 = vand.u32 %v2061, %v209
      %2074 = vmatprep.subr.bf16.mxu0 0
      %2075 = vmatpush1.bf16.msra.mxu0 0
      %2076 = vmatprep.subr.bf16.mxu0 0
      %2077 = vmatpush1.bf16.msra.mxu0 0
      %2078 = vmatprep.subr.bf16.mxu0 0
      %2079 = vmatpush1.bf16.msra.mxu0 0
      %2080 = vmatprep.subr.bf16.mxu0 0
      %2081 = vmatpush1.bf16.msra.mxu0 0
      %2082 = vmatprep.subr.bf16.mxu0 0
      %2083 = vmatpush1.bf16.msra.mxu0 0
      %2084 = vmatprep.subr.bf16.mxu0 0
      %2085 = vmatpush1.bf16.msra.mxu0 0
      %2086 = vmatprep.subr.bf16.mxu0 0
      %2087 = vmatpush1.bf16.msra.mxu0 0
      %2088 = vmatprep.subr.bf16.mxu0 %v2069
      %2089 = vmatpush1.bf16.msra.mxu0 %v2066
      %2090 = vmatprep.subr.bf16.mxu0 0
      %2091 = vmatpush2.bf16.msra.mxu0 0
      %2092 = vmatprep.subr.bf16.mxu0 0
      %2093 = vmatpush2.bf16.msra.mxu0 0
      %2094 = vmatprep.subr.bf16.mxu0 0
      %2095 = vmatpush2.bf16.msra.mxu0 0
      %2096 = vmatprep.subr.bf16.mxu0 0
      %2097 = vmatpush2.bf16.msra.mxu0 0
      %2098 = vmatprep.subr.bf16.mxu0 0
      %2099 = vmatpush2.bf16.msra.mxu0 0
      %2100 = vmatprep.subr.bf16.mxu0 0
      %2101 = vmatpush2.bf16.msra.mxu0 0
      %2102 = vmatprep.subr.bf16.mxu0 0
      %2103 = vmatpush2.bf16.msra.mxu0 0
      %2104 = vmatprep.subr.bf16.mxu0 0
      %2105 = vmatpush2.bf16.msra.mxu0 0
      %2106 = vmatprep.mubr.bf16.mxu0 0
      %2107 = vmatmul.mubr.bf16.gmra.mxu0 %v2063
      %v2108 = vpop.f32.mrf.mxu0
      %v2109 = vadd.f32 0.0, %v2108
      %v2110 = vpop.f32.mrf.mxu0
      %v2111 = vadd.f32 0.0, %v2110
      %v2112 = vpop.f32.mrf.mxu0
      %v2113 = vpop.f32.mrf.mxu0
      %2114 = vdwg.mxu0
      %2115 = vmatprep.subr.bf16.mxu0 0
      %2116 = vmatpush1.bf16.msra.mxu0 0
      %2117 = vmatprep.subr.bf16.mxu0 0
      %2118 = vmatpush1.bf16.msra.mxu0 0
      %2119 = vmatprep.subr.bf16.mxu0 0
      %2120 = vmatpush1.bf16.msra.mxu0 0
      %2121 = vmatprep.subr.bf16.mxu0 0
      %2122 = vmatpush1.bf16.msra.mxu0 0
      %2123 = vmatprep.subr.bf16.mxu0 0
      %2124 = vmatpush1.bf16.msra.mxu0 0
      %2125 = vmatprep.subr.bf16.mxu0 0
      %2126 = vmatpush1.bf16.msra.mxu0 0
      %2127 = vmatprep.subr.bf16.mxu0 0
      %2128 = vmatpush1.bf16.msra.mxu0 0
      %2129 = vmatprep.subr.bf16.mxu0 0
      %2130 = vmatpush1.bf16.msra.mxu0 %v2072
      %2131 = vmatprep.subr.bf16.mxu0 0
      %2132 = vmatpush2.bf16.msra.mxu0 0
      %2133 = vmatprep.subr.bf16.mxu0 0
      %2134 = vmatpush2.bf16.msra.mxu0 0
      %2135 = vmatprep.subr.bf16.mxu0 0
      %2136 = vmatpush2.bf16.msra.mxu0 0
      %2137 = vmatprep.subr.bf16.mxu0 0
      %2138 = vmatpush2.bf16.msra.mxu0 0
      %2139 = vmatprep.subr.bf16.mxu0 0
      %2140 = vmatpush2.bf16.msra.mxu0 0
      %2141 = vmatprep.subr.bf16.mxu0 0
      %2142 = vmatpush2.bf16.msra.mxu0 0
      %2143 = vmatprep.subr.bf16.mxu0 0
      %2144 = vmatpush2.bf16.msra.mxu0 0
      %2145 = vmatprep.subr.bf16.mxu0 0
      %2146 = vmatpush2.bf16.msra.mxu0 0
      %2147 = vmatprep.mubr.bf16.mxu0 0
      %2148 = vmatmul.mubr.bf16.gmra.mxu0 %v2063
      %v2149 = vpop.f32.mrf.mxu0
      %v2150 = vadd.f32 0.0, %v2149
      %v2151 = vpop.f32.mrf.mxu0
      %v2152 = vpop.f32.mrf.mxu0
      %v2153 = vpop.f32.mrf.mxu0
      %2154 = vdwg.mxu0
      %v2155 = vadd.f32 %v2045, %v2109
      %v2156 = vadd.f32 %v2046, %v2111
      %v2157 = vadd.f32 %v2047, %v2150
      %s2158 = scalar_lea.vmem %s158, 36
      %v2159 = vld [vmem:[%s2158] sm:$0x3]
      %2160 = vrot.lane.b32.xlu0 %v186, 65
      %v2161 = vpop.permute.xlu0 %2160
      %2162 = vrot.lane.b32.xlu0 %v187, 65
      %v2163 = vpop.permute.xlu0 %2162
      %2164 = vrot.lane.b32.xlu0 %v188, 65
      %v2165 = vpop.permute.xlu0 %2164
      %2166 = vrot.lane.b32.xlu0 %v189, 65
      %v2167 = vpop.permute.xlu0 %2166
      %vm2168 = vcmask 531456
      %v2169 = vsel %vm2168, %v2161, %v2163
      %v2170 = vsel %vm2168, %v2163, %v2165
      %v2171 = vsel %vm2168, %v2165, %v2167
      %v2173 = vsel %vm202, %v2159, 0
      %v2176 = vand.u32 %v2169, %v209
      %v2179 = vand.u32 %v2170, %v209
      %v2182 = vand.u32 %v2171, %v209
      %2184 = vmatprep.subr.bf16.mxu0 0
      %2185 = vmatpush1.bf16.msra.mxu0 0
      %2186 = vmatprep.subr.bf16.mxu0 0
      %2187 = vmatpush1.bf16.msra.mxu0 0
      %2188 = vmatprep.subr.bf16.mxu0 0
      %2189 = vmatpush1.bf16.msra.mxu0 0
      %2190 = vmatprep.subr.bf16.mxu0 0
      %2191 = vmatpush1.bf16.msra.mxu0 0
      %2192 = vmatprep.subr.bf16.mxu0 0
      %2193 = vmatpush1.bf16.msra.mxu0 0
      %2194 = vmatprep.subr.bf16.mxu0 0
      %2195 = vmatpush1.bf16.msra.mxu0 0
      %2196 = vmatprep.subr.bf16.mxu0 0
      %2197 = vmatpush1.bf16.msra.mxu0 0
      %2198 = vmatprep.subr.bf16.mxu0 %v2179
      %2199 = vmatpush1.bf16.msra.mxu0 %v2176
      %2200 = vmatprep.subr.bf16.mxu0 0
      %2201 = vmatpush2.bf16.msra.mxu0 0
      %2202 = vmatprep.subr.bf16.mxu0 0
      %2203 = vmatpush2.bf16.msra.mxu0 0
      %2204 = vmatprep.subr.bf16.mxu0 0
      %2205 = vmatpush2.bf16.msra.mxu0 0
      %2206 = vmatprep.subr.bf16.mxu0 0
      %2207 = vmatpush2.bf16.msra.mxu0 0
      %2208 = vmatprep.subr.bf16.mxu0 0
      %2209 = vmatpush2.bf16.msra.mxu0 0
      %2210 = vmatprep.subr.bf16.mxu0 0
      %2211 = vmatpush2.bf16.msra.mxu0 0
      %2212 = vmatprep.subr.bf16.mxu0 0
      %2213 = vmatpush2.bf16.msra.mxu0 0
      %2214 = vmatprep.subr.bf16.mxu0 0
      %2215 = vmatpush2.bf16.msra.mxu0 0
      %2216 = vmatprep.mubr.bf16.mxu0 0
      %2217 = vmatmul.mubr.bf16.gmra.mxu0 %v2173
      %v2218 = vpop.f32.mrf.mxu0
      %v2219 = vadd.f32 0.0, %v2218
      %v2220 = vpop.f32.mrf.mxu0
      %v2221 = vadd.f32 0.0, %v2220
      %v2222 = vpop.f32.mrf.mxu0
      %v2223 = vpop.f32.mrf.mxu0
      %2224 = vdwg.mxu0
      %2225 = vmatprep.subr.bf16.mxu0 0
      %2226 = vmatpush1.bf16.msra.mxu0 0
      %2227 = vmatprep.subr.bf16.mxu0 0
      %2228 = vmatpush1.bf16.msra.mxu0 0
      %2229 = vmatprep.subr.bf16.mxu0 0
      %2230 = vmatpush1.bf16.msra.mxu0 0
      %2231 = vmatprep.subr.bf16.mxu0 0
      %2232 = vmatpush1.bf16.msra.mxu0 0
      %2233 = vmatprep.subr.bf16.mxu0 0
      %2234 = vmatpush1.bf16.msra.mxu0 0
      %2235 = vmatprep.subr.bf16.mxu0 0
      %2236 = vmatpush1.bf16.msra.mxu0 0
      %2237 = vmatprep.subr.bf16.mxu0 0
      %2238 = vmatpush1.bf16.msra.mxu0 0
      %2239 = vmatprep.subr.bf16.mxu0 0
      %2240 = vmatpush1.bf16.msra.mxu0 %v2182
      %2241 = vmatprep.subr.bf16.mxu0 0
      %2242 = vmatpush2.bf16.msra.mxu0 0
      %2243 = vmatprep.subr.bf16.mxu0 0
      %2244 = vmatpush2.bf16.msra.mxu0 0
      %2245 = vmatprep.subr.bf16.mxu0 0
      %2246 = vmatpush2.bf16.msra.mxu0 0
      %2247 = vmatprep.subr.bf16.mxu0 0
      %2248 = vmatpush2.bf16.msra.mxu0 0
      %2249 = vmatprep.subr.bf16.mxu0 0
      %2250 = vmatpush2.bf16.msra.mxu0 0
      %2251 = vmatprep.subr.bf16.mxu0 0
      %2252 = vmatpush2.bf16.msra.mxu0 0
      %2253 = vmatprep.subr.bf16.mxu0 0
      %2254 = vmatpush2.bf16.msra.mxu0 0
      %2255 = vmatprep.subr.bf16.mxu0 0
      %2256 = vmatpush2.bf16.msra.mxu0 0
      %2257 = vmatprep.mubr.bf16.mxu0 0
      %2258 = vmatmul.mubr.bf16.gmra.mxu0 %v2173
      %v2259 = vpop.f32.mrf.mxu0
      %v2260 = vadd.f32 0.0, %v2259
      %v2261 = vpop.f32.mrf.mxu0
      %v2262 = vpop.f32.mrf.mxu0
      %v2263 = vpop.f32.mrf.mxu0
      %2264 = vdwg.mxu0
      %v2265 = vadd.f32 %v2155, %v2219
      %v2266 = vadd.f32 %v2156, %v2221
      %v2267 = vadd.f32 %v2157, %v2260
      %s2268 = scalar_lea.vmem %s158, 38
      %v2269 = vld [vmem:[%s2268] sm:$0x3]
      %2270 = vrot.lane.b32.xlu0 %v186, 64
      %v2271 = vpop.permute.xlu0 %2270
      %2272 = vrot.lane.b32.xlu0 %v187, 64
      %v2273 = vpop.permute.xlu0 %2272
      %2274 = vrot.lane.b32.xlu0 %v188, 64
      %v2275 = vpop.permute.xlu0 %2274
      %2276 = vrot.lane.b32.xlu0 %v189, 64
      %v2277 = vpop.permute.xlu0 %2276
      %vm2278 = vcmask 523264
      %v2279 = vsel %vm2278, %v2271, %v2273
      %v2280 = vsel %vm2278, %v2273, %v2275
      %v2281 = vsel %vm2278, %v2275, %v2277
      %v2283 = vsel %vm202, %v2269, 0
      %v2286 = vand.u32 %v2279, %v209
      %v2289 = vand.u32 %v2280, %v209
      %v2292 = vand.u32 %v2281, %v209
      %2294 = vmatprep.subr.bf16.mxu0 0
      %2295 = vmatpush1.bf16.msra.mxu0 0
      %2296 = vmatprep.subr.bf16.mxu0 0
      %2297 = vmatpush1.bf16.msra.mxu0 0
      %2298 = vmatprep.subr.bf16.mxu0 0
      %2299 = vmatpush1.bf16.msra.mxu0 0
      %2300 = vmatprep.subr.bf16.mxu0 0
      %2301 = vmatpush1.bf16.msra.mxu0 0
      %2302 = vmatprep.subr.bf16.mxu0 0
      %2303 = vmatpush1.bf16.msra.mxu0 0
      %2304 = vmatprep.subr.bf16.mxu0 0
      %2305 = vmatpush1.bf16.msra.mxu0 0
      %2306 = vmatprep.subr.bf16.mxu0 0
      %2307 = vmatpush1.bf16.msra.mxu0 0
      %2308 = vmatprep.subr.bf16.mxu0 %v2289
      %2309 = vmatpush1.bf16.msra.mxu0 %v2286
      %2310 = vmatprep.subr.bf16.mxu0 0
      %2311 = vmatpush2.bf16.msra.mxu0 0
      %2312 = vmatprep.subr.bf16.mxu0 0
      %2313 = vmatpush2.bf16.msra.mxu0 0
      %2314 = vmatprep.subr.bf16.mxu0 0
      %2315 = vmatpush2.bf16.msra.mxu0 0
      %2316 = vmatprep.subr.bf16.mxu0 0
      %2317 = vmatpush2.bf16.msra.mxu0 0
      %2318 = vmatprep.subr.bf16.mxu0 0
      %2319 = vmatpush2.bf16.msra.mxu0 0
      %2320 = vmatprep.subr.bf16.mxu0 0
      %2321 = vmatpush2.bf16.msra.mxu0 0
      %2322 = vmatprep.subr.bf16.mxu0 0
      %2323 = vmatpush2.bf16.msra.mxu0 0
      %2324 = vmatprep.subr.bf16.mxu0 0
      %2325 = vmatpush2.bf16.msra.mxu0 0
      %2326 = vmatprep.mubr.bf16.mxu0 0
      %2327 = vmatmul.mubr.bf16.gmra.mxu0 %v2283
      %v2328 = vpop.f32.mrf.mxu0
      %v2329 = vadd.f32 0.0, %v2328
      %v2330 = vpop.f32.mrf.mxu0
      %v2331 = vadd.f32 0.0, %v2330
      %v2332 = vpop.f32.mrf.mxu0
      %v2333 = vpop.f32.mrf.mxu0
      %2334 = vdwg.mxu0
      %2335 = vmatprep.subr.bf16.mxu0 0
      %2336 = vmatpush1.bf16.msra.mxu0 0
      %2337 = vmatprep.subr.bf16.mxu0 0
      %2338 = vmatpush1.bf16.msra.mxu0 0
      %2339 = vmatprep.subr.bf16.mxu0 0
      %2340 = vmatpush1.bf16.msra.mxu0 0
      %2341 = vmatprep.subr.bf16.mxu0 0
      %2342 = vmatpush1.bf16.msra.mxu0 0
      %2343 = vmatprep.subr.bf16.mxu0 0
      %2344 = vmatpush1.bf16.msra.mxu0 0
      %2345 = vmatprep.subr.bf16.mxu0 0
      %2346 = vmatpush1.bf16.msra.mxu0 0
      %2347 = vmatprep.subr.bf16.mxu0 0
      %2348 = vmatpush1.bf16.msra.mxu0 0
      %2349 = vmatprep.subr.bf16.mxu0 0
      %2350 = vmatpush1.bf16.msra.mxu0 %v2292
      %2351 = vmatprep.subr.bf16.mxu0 0
      %2352 = vmatpush2.bf16.msra.mxu0 0
      %2353 = vmatprep.subr.bf16.mxu0 0
      %2354 = vmatpush2.bf16.msra.mxu0 0
      %2355 = vmatprep.subr.bf16.mxu0 0
      %2356 = vmatpush2.bf16.msra.mxu0 0
      %2357 = vmatprep.subr.bf16.mxu0 0
      %2358 = vmatpush2.bf16.msra.mxu0 0
      %2359 = vmatprep.subr.bf16.mxu0 0
      %2360 = vmatpush2.bf16.msra.mxu0 0
      %2361 = vmatprep.subr.bf16.mxu0 0
      %2362 = vmatpush2.bf16.msra.mxu0 0
      %2363 = vmatprep.subr.bf16.mxu0 0
      %2364 = vmatpush2.bf16.msra.mxu0 0
      %2365 = vmatprep.subr.bf16.mxu0 0
      %2366 = vmatpush2.bf16.msra.mxu0 0
      %2367 = vmatprep.mubr.bf16.mxu0 0
      %2368 = vmatmul.mubr.bf16.gmra.mxu0 %v2283
      %v2369 = vpop.f32.mrf.mxu0
      %v2370 = vadd.f32 0.0, %v2369
      %v2371 = vpop.f32.mrf.mxu0
      %v2372 = vpop.f32.mrf.mxu0
      %v2373 = vpop.f32.mrf.mxu0
      %2374 = vdwg.mxu0
      %v2375 = vadd.f32 %v2265, %v2329
      %v2376 = vadd.f32 %v2266, %v2331
      %v2377 = vadd.f32 %v2267, %v2370
      %s2378 = scalar_lea.vmem %s158, 40
      %v2379 = vld [vmem:[%s2378] sm:$0x3]
      %2380 = vrot.lane.b32.xlu0 %v186, 48
      %v2381 = vpop.permute.xlu0 %2380
      %2382 = vrot.lane.b32.xlu0 %v187, 48
      %v2383 = vpop.permute.xlu0 %2382
      %2384 = vrot.lane.b32.xlu0 %v188, 48
      %v2385 = vpop.permute.xlu0 %2384
      %2386 = vrot.lane.b32.xlu0 %v189, 48
      %v2387 = vpop.permute.xlu0 %2386
      %vm2388 = vcmask 392192
      %v2389 = vsel %vm2388, %v2381, %v2383
      %v2390 = vsel %vm2388, %v2383, %v2385
      %v2391 = vsel %vm2388, %v2385, %v2387
      %v2393 = vsel %vm202, %v2379, 0
      %v2396 = vand.u32 %v2389, %v209
      %v2399 = vand.u32 %v2390, %v209
      %v2402 = vand.u32 %v2391, %v209
      %2404 = vmatprep.subr.bf16.mxu0 0
      %2405 = vmatpush1.bf16.msra.mxu0 0
      %2406 = vmatprep.subr.bf16.mxu0 0
      %2407 = vmatpush1.bf16.msra.mxu0 0
      %2408 = vmatprep.subr.bf16.mxu0 0
      %2409 = vmatpush1.bf16.msra.mxu0 0
      %2410 = vmatprep.subr.bf16.mxu0 0
      %2411 = vmatpush1.bf16.msra.mxu0 0
      %2412 = vmatprep.subr.bf16.mxu0 0
      %2413 = vmatpush1.bf16.msra.mxu0 0
      %2414 = vmatprep.subr.bf16.mxu0 0
      %2415 = vmatpush1.bf16.msra.mxu0 0
      %2416 = vmatprep.subr.bf16.mxu0 0
      %2417 = vmatpush1.bf16.msra.mxu0 0
      %2418 = vmatprep.subr.bf16.mxu0 %v2399
      %2419 = vmatpush1.bf16.msra.mxu0 %v2396
      %2420 = vmatprep.subr.bf16.mxu0 0
      %2421 = vmatpush2.bf16.msra.mxu0 0
      %2422 = vmatprep.subr.bf16.mxu0 0
      %2423 = vmatpush2.bf16.msra.mxu0 0
      %2424 = vmatprep.subr.bf16.mxu0 0
      %2425 = vmatpush2.bf16.msra.mxu0 0
      %2426 = vmatprep.subr.bf16.mxu0 0
      %2427 = vmatpush2.bf16.msra.mxu0 0
      %2428 = vmatprep.subr.bf16.mxu0 0
      %2429 = vmatpush2.bf16.msra.mxu0 0
      %2430 = vmatprep.subr.bf16.mxu0 0
      %2431 = vmatpush2.bf16.msra.mxu0 0
      %2432 = vmatprep.subr.bf16.mxu0 0
      %2433 = vmatpush2.bf16.msra.mxu0 0
      %2434 = vmatprep.subr.bf16.mxu0 0
      %2435 = vmatpush2.bf16.msra.mxu0 0
      %2436 = vmatprep.mubr.bf16.mxu0 0
      %2437 = vmatmul.mubr.bf16.gmra.mxu0 %v2393
      %v2438 = vpop.f32.mrf.mxu0
      %v2439 = vadd.f32 0.0, %v2438
      %v2440 = vpop.f32.mrf.mxu0
      %v2441 = vadd.f32 0.0, %v2440
      %v2442 = vpop.f32.mrf.mxu0
      %v2443 = vpop.f32.mrf.mxu0
      %2444 = vdwg.mxu0
      %2445 = vmatprep.subr.bf16.mxu0 0
      %2446 = vmatpush1.bf16.msra.mxu0 0
      %2447 = vmatprep.subr.bf16.mxu0 0
      %2448 = vmatpush1.bf16.msra.mxu0 0
      %2449 = vmatprep.subr.bf16.mxu0 0
      %2450 = vmatpush1.bf16.msra.mxu0 0
      %2451 = vmatprep.subr.bf16.mxu0 0
      %2452 = vmatpush1.bf16.msra.mxu0 0
      %2453 = vmatprep.subr.bf16.mxu0 0
      %2454 = vmatpush1.bf16.msra.mxu0 0
      %2455 = vmatprep.subr.bf16.mxu0 0
      %2456 = vmatpush1.bf16.msra.mxu0 0
      %2457 = vmatprep.subr.bf16.mxu0 0
      %2458 = vmatpush1.bf16.msra.mxu0 0
      %2459 = vmatprep.subr.bf16.mxu0 0
      %2460 = vmatpush1.bf16.msra.mxu0 %v2402
      %2461 = vmatprep.subr.bf16.mxu0 0
      %2462 = vmatpush2.bf16.msra.mxu0 0
      %2463 = vmatprep.subr.bf16.mxu0 0
      %2464 = vmatpush2.bf16.msra.mxu0 0
      %2465 = vmatprep.subr.bf16.mxu0 0
      %2466 = vmatpush2.bf16.msra.mxu0 0
      %2467 = vmatprep.subr.bf16.mxu0 0
      %2468 = vmatpush2.bf16.msra.mxu0 0
      %2469 = vmatprep.subr.bf16.mxu0 0
      %2470 = vmatpush2.bf16.msra.mxu0 0
      %2471 = vmatprep.subr.bf16.mxu0 0
      %2472 = vmatpush2.bf16.msra.mxu0 0
      %2473 = vmatprep.subr.bf16.mxu0 0
      %2474 = vmatpush2.bf16.msra.mxu0 0
      %2475 = vmatprep.subr.bf16.mxu0 0
      %2476 = vmatpush2.bf16.msra.mxu0 0
      %2477 = vmatprep.mubr.bf16.mxu0 0
      %2478 = vmatmul.mubr.bf16.gmra.mxu0 %v2393
      %v2479 = vpop.f32.mrf.mxu0
      %v2480 = vadd.f32 0.0, %v2479
      %v2481 = vpop.f32.mrf.mxu0
      %v2482 = vpop.f32.mrf.mxu0
      %v2483 = vpop.f32.mrf.mxu0
      %2484 = vdwg.mxu0
      %v2485 = vadd.f32 %v2375, %v2439
      %v2486 = vadd.f32 %v2376, %v2441
      %v2487 = vadd.f32 %v2377, %v2480
      %s2488 = scalar_lea.vmem %s158, 42
      %v2489 = vld [vmem:[%s2488] sm:$0x3]
      %2490 = vrot.lane.b32.xlu0 %v186, 47
      %v2491 = vpop.permute.xlu0 %2490
      %2492 = vrot.lane.b32.xlu0 %v187, 47
      %v2493 = vpop.permute.xlu0 %2492
      %2494 = vrot.lane.b32.xlu0 %v188, 47
      %v2495 = vpop.permute.xlu0 %2494
      %2496 = vrot.lane.b32.xlu0 %v189, 47
      %v2497 = vpop.permute.xlu0 %2496
      %vm2498 = vcmask 384000
      %v2499 = vsel %vm2498, %v2491, %v2493
      %v2500 = vsel %vm2498, %v2493, %v2495
      %v2501 = vsel %vm2498, %v2495, %v2497
      %v2503 = vsel %vm202, %v2489, 0
      %v2506 = vand.u32 %v2499, %v209
      %v2509 = vand.u32 %v2500, %v209
      %v2512 = vand.u32 %v2501, %v209
      %2514 = vmatprep.subr.bf16.mxu0 0
      %2515 = vmatpush1.bf16.msra.mxu0 0
      %2516 = vmatprep.subr.bf16.mxu0 0
      %2517 = vmatpush1.bf16.msra.mxu0 0
      %2518 = vmatprep.subr.bf16.mxu0 0
      %2519 = vmatpush1.bf16.msra.mxu0 0
      %2520 = vmatprep.subr.bf16.mxu0 0
      %2521 = vmatpush1.bf16.msra.mxu0 0
      %2522 = vmatprep.subr.bf16.mxu0 0
      %2523 = vmatpush1.bf16.msra.mxu0 0
      %2524 = vmatprep.subr.bf16.mxu0 0
      %2525 = vmatpush1.bf16.msra.mxu0 0
      %2526 = vmatprep.subr.bf16.mxu0 0
      %2527 = vmatpush1.bf16.msra.mxu0 0
      %2528 = vmatprep.subr.bf16.mxu0 %v2509
      %2529 = vmatpush1.bf16.msra.mxu0 %v2506
      %2530 = vmatprep.subr.bf16.mxu0 0
      %2531 = vmatpush2.bf16.msra.mxu0 0
      %2532 = vmatprep.subr.bf16.mxu0 0
      %2533 = vmatpush2.bf16.msra.mxu0 0
      %2534 = vmatprep.subr.bf16.mxu0 0
      %2535 = vmatpush2.bf16.msra.mxu0 0
      %2536 = vmatprep.subr.bf16.mxu0 0
      %2537 = vmatpush2.bf16.msra.mxu0 0
      %2538 = vmatprep.subr.bf16.mxu0 0
      %2539 = vmatpush2.bf16.msra.mxu0 0
      %2540 = vmatprep.subr.bf16.mxu0 0
      %2541 = vmatpush2.bf16.msra.mxu0 0
      %2542 = vmatprep.subr.bf16.mxu0 0
      %2543 = vmatpush2.bf16.msra.mxu0 0
      %2544 = vmatprep.subr.bf16.mxu0 0
      %2545 = vmatpush2.bf16.msra.mxu0 0
      %2546 = vmatprep.mubr.bf16.mxu0 0
      %2547 = vmatmul.mubr.bf16.gmra.mxu0 %v2503
      %v2548 = vpop.f32.mrf.mxu0
      %v2549 = vadd.f32 0.0, %v2548
      %v2550 = vpop.f32.mrf.mxu0
      %v2551 = vadd.f32 0.0, %v2550
      %v2552 = vpop.f32.mrf.mxu0
      %v2553 = vpop.f32.mrf.mxu0
      %2554 = vdwg.mxu0
      %2555 = vmatprep.subr.bf16.mxu0 0
      %2556 = vmatpush1.bf16.msra.mxu0 0
      %2557 = vmatprep.subr.bf16.mxu0 0
      %2558 = vmatpush1.bf16.msra.mxu0 0
      %2559 = vmatprep.subr.bf16.mxu0 0
      %2560 = vmatpush1.bf16.msra.mxu0 0
      %2561 = vmatprep.subr.bf16.mxu0 0
      %2562 = vmatpush1.bf16.msra.mxu0 0
      %2563 = vmatprep.subr.bf16.mxu0 0
      %2564 = vmatpush1.bf16.msra.mxu0 0
      %2565 = vmatprep.subr.bf16.mxu0 0
      %2566 = vmatpush1.bf16.msra.mxu0 0
      %2567 = vmatprep.subr.bf16.mxu0 0
      %2568 = vmatpush1.bf16.msra.mxu0 0
      %2569 = vmatprep.subr.bf16.mxu0 0
      %2570 = vmatpush1.bf16.msra.mxu0 %v2512
      %2571 = vmatprep.subr.bf16.mxu0 0
      %2572 = vmatpush2.bf16.msra.mxu0 0
      %2573 = vmatprep.subr.bf16.mxu0 0
      %2574 = vmatpush2.bf16.msra.mxu0 0
      %2575 = vmatprep.subr.bf16.mxu0 0
      %2576 = vmatpush2.bf16.msra.mxu0 0
      %2577 = vmatprep.subr.bf16.mxu0 0
      %2578 = vmatpush2.bf16.msra.mxu0 0
      %2579 = vmatprep.subr.bf16.mxu0 0
      %2580 = vmatpush2.bf16.msra.mxu0 0
      %2581 = vmatprep.subr.bf16.mxu0 0
      %2582 = vmatpush2.bf16.msra.mxu0 0
      %2583 = vmatprep.subr.bf16.mxu0 0
      %2584 = vmatpush2.bf16.msra.mxu0 0
      %2585 = vmatprep.subr.bf16.mxu0 0
      %2586 = vmatpush2.bf16.msra.mxu0 0
      %2587 = vmatprep.mubr.bf16.mxu0 0
      %2588 = vmatmul.mubr.bf16.gmra.mxu0 %v2503
      %v2589 = vpop.f32.mrf.mxu0
      %v2590 = vadd.f32 0.0, %v2589
      %v2591 = vpop.f32.mrf.mxu0
      %v2592 = vpop.f32.mrf.mxu0
      %v2593 = vpop.f32.mrf.mxu0
      %2594 = vdwg.mxu0
      %v2595 = vadd.f32 %v2485, %v2549
      %v2596 = vadd.f32 %v2486, %v2551
      %v2597 = vadd.f32 %v2487, %v2590
      %s2598 = scalar_lea.vmem %s158, 44
      %v2599 = vld [vmem:[%s2598] sm:$0x3]
      %2600 = vrot.lane.b32.xlu0 %v186, 46
      %v2601 = vpop.permute.xlu0 %2600
      %2602 = vrot.lane.b32.xlu0 %v187, 46
      %v2603 = vpop.permute.xlu0 %2602
      %2604 = vrot.lane.b32.xlu0 %v188, 46
      %v2605 = vpop.permute.xlu0 %2604
      %2606 = vrot.lane.b32.xlu0 %v189, 46
      %v2607 = vpop.permute.xlu0 %2606
      %vm2608 = vcmask 375808
      %v2609 = vsel %vm2608, %v2601, %v2603
      %v2610 = vsel %vm2608, %v2603, %v2605
      %v2611 = vsel %vm2608, %v2605, %v2607
      %v2613 = vsel %vm202, %v2599, 0
      %v2616 = vand.u32 %v2609, %v209
      %v2619 = vand.u32 %v2610, %v209
      %v2622 = vand.u32 %v2611, %v209
      %2624 = vmatprep.subr.bf16.mxu0 0
      %2625 = vmatpush1.bf16.msra.mxu0 0
      %2626 = vmatprep.subr.bf16.mxu0 0
      %2627 = vmatpush1.bf16.msra.mxu0 0
      %2628 = vmatprep.subr.bf16.mxu0 0
      %2629 = vmatpush1.bf16.msra.mxu0 0
      %2630 = vmatprep.subr.bf16.mxu0 0
      %2631 = vmatpush1.bf16.msra.mxu0 0
      %2632 = vmatprep.subr.bf16.mxu0 0
      %2633 = vmatpush1.bf16.msra.mxu0 0
      %2634 = vmatprep.subr.bf16.mxu0 0
      %2635 = vmatpush1.bf16.msra.mxu0 0
      %2636 = vmatprep.subr.bf16.mxu0 0
      %2637 = vmatpush1.bf16.msra.mxu0 0
      %2638 = vmatprep.subr.bf16.mxu0 %v2619
      %2639 = vmatpush1.bf16.msra.mxu0 %v2616
      %2640 = vmatprep.subr.bf16.mxu0 0
      %2641 = vmatpush2.bf16.msra.mxu0 0
      %2642 = vmatprep.subr.bf16.mxu0 0
      %2643 = vmatpush2.bf16.msra.mxu0 0
      %2644 = vmatprep.subr.bf16.mxu0 0
      %2645 = vmatpush2.bf16.msra.mxu0 0
      %2646 = vmatprep.subr.bf16.mxu0 0
      %2647 = vmatpush2.bf16.msra.mxu0 0
      %2648 = vmatprep.subr.bf16.mxu0 0
      %2649 = vmatpush2.bf16.msra.mxu0 0
      %2650 = vmatprep.subr.bf16.mxu0 0
      %2651 = vmatpush2.bf16.msra.mxu0 0
      %2652 = vmatprep.subr.bf16.mxu0 0
      %2653 = vmatpush2.bf16.msra.mxu0 0
      %2654 = vmatprep.subr.bf16.mxu0 0
      %2655 = vmatpush2.bf16.msra.mxu0 0
      %2656 = vmatprep.mubr.bf16.mxu0 0
      %2657 = vmatmul.mubr.bf16.gmra.mxu0 %v2613
      %v2658 = vpop.f32.mrf.mxu0
      %v2659 = vadd.f32 0.0, %v2658
      %v2660 = vpop.f32.mrf.mxu0
      %v2661 = vadd.f32 0.0, %v2660
      %v2662 = vpop.f32.mrf.mxu0
      %v2663 = vpop.f32.mrf.mxu0
      %2664 = vdwg.mxu0
      %2665 = vmatprep.subr.bf16.mxu0 0
      %2666 = vmatpush1.bf16.msra.mxu0 0
      %2667 = vmatprep.subr.bf16.mxu0 0
      %2668 = vmatpush1.bf16.msra.mxu0 0
      %2669 = vmatprep.subr.bf16.mxu0 0
      %2670 = vmatpush1.bf16.msra.mxu0 0
      %2671 = vmatprep.subr.bf16.mxu0 0
      %2672 = vmatpush1.bf16.msra.mxu0 0
      %2673 = vmatprep.subr.bf16.mxu0 0
      %2674 = vmatpush1.bf16.msra.mxu0 0
      %2675 = vmatprep.subr.bf16.mxu0 0
      %2676 = vmatpush1.bf16.msra.mxu0 0
      %2677 = vmatprep.subr.bf16.mxu0 0
      %2678 = vmatpush1.bf16.msra.mxu0 0
      %2679 = vmatprep.subr.bf16.mxu0 0
      %2680 = vmatpush1.bf16.msra.mxu0 %v2622
      %2681 = vmatprep.subr.bf16.mxu0 0
      %2682 = vmatpush2.bf16.msra.mxu0 0
      %2683 = vmatprep.subr.bf16.mxu0 0
      %2684 = vmatpush2.bf16.msra.mxu0 0
      %2685 = vmatprep.subr.bf16.mxu0 0
      %2686 = vmatpush2.bf16.msra.mxu0 0
      %2687 = vmatprep.subr.bf16.mxu0 0
      %2688 = vmatpush2.bf16.msra.mxu0 0
      %2689 = vmatprep.subr.bf16.mxu0 0
      %2690 = vmatpush2.bf16.msra.mxu0 0
      %2691 = vmatprep.subr.bf16.mxu0 0
      %2692 = vmatpush2.bf16.msra.mxu0 0
      %2693 = vmatprep.subr.bf16.mxu0 0
      %2694 = vmatpush2.bf16.msra.mxu0 0
      %2695 = vmatprep.subr.bf16.mxu0 0
      %2696 = vmatpush2.bf16.msra.mxu0 0
      %2697 = vmatprep.mubr.bf16.mxu0 0
      %2698 = vmatmul.mubr.bf16.gmra.mxu0 %v2613
      %v2699 = vpop.f32.mrf.mxu0
      %v2700 = vadd.f32 0.0, %v2699
      %v2701 = vpop.f32.mrf.mxu0
      %v2702 = vpop.f32.mrf.mxu0
      %v2703 = vpop.f32.mrf.mxu0
      %2704 = vdwg.mxu0
      %v2705 = vadd.f32 %v2595, %v2659
      %v2706 = vadd.f32 %v2596, %v2661
      %v2707 = vadd.f32 %v2597, %v2700
      %s2708 = scalar_lea.vmem %s158, 46
      %v2709 = vld [vmem:[%s2708] sm:$0x3]
      %2710 = vrot.lane.b32.xlu0 %v186, 45
      %v2711 = vpop.permute.xlu0 %2710
      %2712 = vrot.lane.b32.xlu0 %v187, 45
      %v2713 = vpop.permute.xlu0 %2712
      %2714 = vrot.lane.b32.xlu0 %v188, 45
      %v2715 = vpop.permute.xlu0 %2714
      %2716 = vrot.lane.b32.xlu0 %v189, 45
      %v2717 = vpop.permute.xlu0 %2716
      %vm2718 = vcmask 367616
      %v2719 = vsel %vm2718, %v2711, %v2713
      %v2720 = vsel %vm2718, %v2713, %v2715
      %v2721 = vsel %vm2718, %v2715, %v2717
      %v2723 = vsel %vm202, %v2709, 0
      %v2726 = vand.u32 %v2719, %v209
      %v2729 = vand.u32 %v2720, %v209
      %v2732 = vand.u32 %v2721, %v209
      %2734 = vmatprep.subr.bf16.mxu0 0
      %2735 = vmatpush1.bf16.msra.mxu0 0
      %2736 = vmatprep.subr.bf16.mxu0 0
      %2737 = vmatpush1.bf16.msra.mxu0 0
      %2738 = vmatprep.subr.bf16.mxu0 0
      %2739 = vmatpush1.bf16.msra.mxu0 0
      %2740 = vmatprep.subr.bf16.mxu0 0
      %2741 = vmatpush1.bf16.msra.mxu0 0
      %2742 = vmatprep.subr.bf16.mxu0 0
      %2743 = vmatpush1.bf16.msra.mxu0 0
      %2744 = vmatprep.subr.bf16.mxu0 0
      %2745 = vmatpush1.bf16.msra.mxu0 0
      %2746 = vmatprep.subr.bf16.mxu0 0
      %2747 = vmatpush1.bf16.msra.mxu0 0
      %2748 = vmatprep.subr.bf16.mxu0 %v2729
      %2749 = vmatpush1.bf16.msra.mxu0 %v2726
      %2750 = vmatprep.subr.bf16.mxu0 0
      %2751 = vmatpush2.bf16.msra.mxu0 0
      %2752 = vmatprep.subr.bf16.mxu0 0
      %2753 = vmatpush2.bf16.msra.mxu0 0
      %2754 = vmatprep.subr.bf16.mxu0 0
      %2755 = vmatpush2.bf16.msra.mxu0 0
      %2756 = vmatprep.subr.bf16.mxu0 0
      %2757 = vmatpush2.bf16.msra.mxu0 0
      %2758 = vmatprep.subr.bf16.mxu0 0
      %2759 = vmatpush2.bf16.msra.mxu0 0
      %2760 = vmatprep.subr.bf16.mxu0 0
      %2761 = vmatpush2.bf16.msra.mxu0 0
      %2762 = vmatprep.subr.bf16.mxu0 0
      %2763 = vmatpush2.bf16.msra.mxu0 0
      %2764 = vmatprep.subr.bf16.mxu0 0
      %2765 = vmatpush2.bf16.msra.mxu0 0
      %2766 = vmatprep.mubr.bf16.mxu0 0
      %2767 = vmatmul.mubr.bf16.gmra.mxu0 %v2723
      %v2768 = vpop.f32.mrf.mxu0
      %v2769 = vadd.f32 0.0, %v2768
      %v2770 = vpop.f32.mrf.mxu0
      %v2771 = vadd.f32 0.0, %v2770
      %v2772 = vpop.f32.mrf.mxu0
      %v2773 = vpop.f32.mrf.mxu0
      %2774 = vdwg.mxu0
      %2775 = vmatprep.subr.bf16.mxu0 0
      %2776 = vmatpush1.bf16.msra.mxu0 0
      %2777 = vmatprep.subr.bf16.mxu0 0
      %2778 = vmatpush1.bf16.msra.mxu0 0
      %2779 = vmatprep.subr.bf16.mxu0 0
      %2780 = vmatpush1.bf16.msra.mxu0 0
      %2781 = vmatprep.subr.bf16.mxu0 0
      %2782 = vmatpush1.bf16.msra.mxu0 0
      %2783 = vmatprep.subr.bf16.mxu0 0
      %2784 = vmatpush1.bf16.msra.mxu0 0
      %2785 = vmatprep.subr.bf16.mxu0 0
      %2786 = vmatpush1.bf16.msra.mxu0 0
      %2787 = vmatprep.subr.bf16.mxu0 0
      %2788 = vmatpush1.bf16.msra.mxu0 0
      %2789 = vmatprep.subr.bf16.mxu0 0
      %2790 = vmatpush1.bf16.msra.mxu0 %v2732
      %2791 = vmatprep.subr.bf16.mxu0 0
      %2792 = vmatpush2.bf16.msra.mxu0 0
      %2793 = vmatprep.subr.bf16.mxu0 0
      %2794 = vmatpush2.bf16.msra.mxu0 0
      %2795 = vmatprep.subr.bf16.mxu0 0
      %2796 = vmatpush2.bf16.msra.mxu0 0
      %2797 = vmatprep.subr.bf16.mxu0 0
      %2798 = vmatpush2.bf16.msra.mxu0 0
      %2799 = vmatprep.subr.bf16.mxu0 0
      %2800 = vmatpush2.bf16.msra.mxu0 0
      %2801 = vmatprep.subr.bf16.mxu0 0
      %2802 = vmatpush2.bf16.msra.mxu0 0
      %2803 = vmatprep.subr.bf16.mxu0 0
      %2804 = vmatpush2.bf16.msra.mxu0 0
      %2805 = vmatprep.subr.bf16.mxu0 0
      %2806 = vmatpush2.bf16.msra.mxu0 0
      %2807 = vmatprep.mubr.bf16.mxu0 0
      %2808 = vmatmul.mubr.bf16.gmra.mxu0 %v2723
      %v2809 = vpop.f32.mrf.mxu0
      %v2810 = vadd.f32 0.0, %v2809
      %v2811 = vpop.f32.mrf.mxu0
      %v2812 = vpop.f32.mrf.mxu0
      %v2813 = vpop.f32.mrf.mxu0
      %2814 = vdwg.mxu0
      %v2815 = vadd.f32 %v2705, %v2769
      %v2816 = vadd.f32 %v2706, %v2771
      %v2817 = vadd.f32 %v2707, %v2810
      %s2818 = scalar_lea.vmem %s158, 48
      %v2819 = vld [vmem:[%s2818] sm:$0x3]
      %2820 = vrot.lane.b32.xlu0 %v186, 44
      %v2821 = vpop.permute.xlu0 %2820
      %2822 = vrot.lane.b32.xlu0 %v187, 44
      %v2823 = vpop.permute.xlu0 %2822
      %2824 = vrot.lane.b32.xlu0 %v188, 44
      %v2825 = vpop.permute.xlu0 %2824
      %2826 = vrot.lane.b32.xlu0 %v189, 44
      %v2827 = vpop.permute.xlu0 %2826
      %vm2828 = vcmask 359424
      %v2829 = vsel %vm2828, %v2821, %v2823
      %v2830 = vsel %vm2828, %v2823, %v2825
      %v2831 = vsel %vm2828, %v2825, %v2827
      %v2833 = vsel %vm202, %v2819, 0
      %v2836 = vand.u32 %v2829, %v209
      %v2839 = vand.u32 %v2830, %v209
      %v2842 = vand.u32 %v2831, %v209
      %2844 = vmatprep.subr.bf16.mxu0 0
      %2845 = vmatpush1.bf16.msra.mxu0 0
      %2846 = vmatprep.subr.bf16.mxu0 0
      %2847 = vmatpush1.bf16.msra.mxu0 0
      %2848 = vmatprep.subr.bf16.mxu0 0
      %2849 = vmatpush1.bf16.msra.mxu0 0
      %2850 = vmatprep.subr.bf16.mxu0 0
      %2851 = vmatpush1.bf16.msra.mxu0 0
      %2852 = vmatprep.subr.bf16.mxu0 0
      %2853 = vmatpush1.bf16.msra.mxu0 0
      %2854 = vmatprep.subr.bf16.mxu0 0
      %2855 = vmatpush1.bf16.msra.mxu0 0
      %2856 = vmatprep.subr.bf16.mxu0 0
      %2857 = vmatpush1.bf16.msra.mxu0 0
      %2858 = vmatprep.subr.bf16.mxu0 %v2839
      %2859 = vmatpush1.bf16.msra.mxu0 %v2836
      %2860 = vmatprep.subr.bf16.mxu0 0
      %2861 = vmatpush2.bf16.msra.mxu0 0
      %2862 = vmatprep.subr.bf16.mxu0 0
      %2863 = vmatpush2.bf16.msra.mxu0 0
      %2864 = vmatprep.subr.bf16.mxu0 0
      %2865 = vmatpush2.bf16.msra.mxu0 0
      %2866 = vmatprep.subr.bf16.mxu0 0
      %2867 = vmatpush2.bf16.msra.mxu0 0
      %2868 = vmatprep.subr.bf16.mxu0 0
      %2869 = vmatpush2.bf16.msra.mxu0 0
      %2870 = vmatprep.subr.bf16.mxu0 0
      %2871 = vmatpush2.bf16.msra.mxu0 0
      %2872 = vmatprep.subr.bf16.mxu0 0
      %2873 = vmatpush2.bf16.msra.mxu0 0
      %2874 = vmatprep.subr.bf16.mxu0 0
      %2875 = vmatpush2.bf16.msra.mxu0 0
      %2876 = vmatprep.mubr.bf16.mxu0 0
      %2877 = vmatmul.mubr.bf16.gmra.mxu0 %v2833
      %v2878 = vpop.f32.mrf.mxu0
      %v2879 = vadd.f32 0.0, %v2878
      %v2880 = vpop.f32.mrf.mxu0
      %v2881 = vadd.f32 0.0, %v2880
      %v2882 = vpop.f32.mrf.mxu0
      %v2883 = vpop.f32.mrf.mxu0
      %2884 = vdwg.mxu0
      %2885 = vmatprep.subr.bf16.mxu0 0
      %2886 = vmatpush1.bf16.msra.mxu0 0
      %2887 = vmatprep.subr.bf16.mxu0 0
      %2888 = vmatpush1.bf16.msra.mxu0 0
      %2889 = vmatprep.subr.bf16.mxu0 0
      %2890 = vmatpush1.bf16.msra.mxu0 0
      %2891 = vmatprep.subr.bf16.mxu0 0
      %2892 = vmatpush1.bf16.msra.mxu0 0
      %2893 = vmatprep.subr.bf16.mxu0 0
      %2894 = vmatpush1.bf16.msra.mxu0 0
      %2895 = vmatprep.subr.bf16.mxu0 0
      %2896 = vmatpush1.bf16.msra.mxu0 0
      %2897 = vmatprep.subr.bf16.mxu0 0
      %2898 = vmatpush1.bf16.msra.mxu0 0
      %2899 = vmatprep.subr.bf16.mxu0 0
      %2900 = vmatpush1.bf16.msra.mxu0 %v2842
      %2901 = vmatprep.subr.bf16.mxu0 0
      %2902 = vmatpush2.bf16.msra.mxu0 0
      %2903 = vmatprep.subr.bf16.mxu0 0
      %2904 = vmatpush2.bf16.msra.mxu0 0
      %2905 = vmatprep.subr.bf16.mxu0 0
      %2906 = vmatpush2.bf16.msra.mxu0 0
      %2907 = vmatprep.subr.bf16.mxu0 0
      %2908 = vmatpush2.bf16.msra.mxu0 0
      %2909 = vmatprep.subr.bf16.mxu0 0
      %2910 = vmatpush2.bf16.msra.mxu0 0
      %2911 = vmatprep.subr.bf16.mxu0 0
      %2912 = vmatpush2.bf16.msra.mxu0 0
      %2913 = vmatprep.subr.bf16.mxu0 0
      %2914 = vmatpush2.bf16.msra.mxu0 0
      %2915 = vmatprep.subr.bf16.mxu0 0
      %2916 = vmatpush2.bf16.msra.mxu0 0
      %2917 = vmatprep.mubr.bf16.mxu0 0
      %2918 = vmatmul.mubr.bf16.gmra.mxu0 %v2833
      %v2919 = vpop.f32.mrf.mxu0
      %v2920 = vadd.f32 0.0, %v2919
      %v2921 = vpop.f32.mrf.mxu0
      %v2922 = vpop.f32.mrf.mxu0
      %v2923 = vpop.f32.mrf.mxu0
      %2924 = vdwg.mxu0
      %v2925 = vadd.f32 %v2815, %v2879
      %v2926 = vadd.f32 %v2816, %v2881
      %v2927 = vadd.f32 %v2817, %v2920
      %v2930 = vcombine.low %v2925, %v2926
      %2932 = vst [vmem:[%s163] sm:$0x77] %v2930
      %2933 = vst [vmem:[%s163 + $0x8] sm:$0x7] %v2927
      %p2934 = scmp.lt.s32.totalorder %s13, 1
      %s2935 = scalar_select %p2934, %s13, 1
      %s2936 = smul.addr %s2935, 3
      %s2937 = smul.addr %s2936, 4
      %s2938 = scalar_lea.vmem %s2, %s2937
      // Predicated region
      $region29: #{tpu_custom_call.1} parent=27 // pred_check
        %p2939 = pneg %p83
      $region30: #{tpu_custom_call.1} parent=27 // pred_check_branch
        %2941 = sbr.rel (%p2939) target = $region32
      $region31: #{tpu_custom_call.1} parent=27 // pred_region
        _
      $region32: #{tpu_custom_call.1} parent=27 // pred_fallthru
        _
    $region28: #{tpu_custom_call.1} parent=5 // pred_fallthru
      _
    %p2942 = scmp.le.s32.totalorder 2, %s8
    // Predicated region
    $region33: #{tpu_custom_call.1} parent=5 // pred_check
      %p2943 = pneg %p2942
    $region34: #{tpu_custom_call.1} parent=5 // pred_check_branch
      %2945 = sbr.rel (%p2943) target = $region36
    $region35: #{tpu_custom_call.1} parent=5 // pred_region
      %s2946 = ssub.s32 %s8, 2
      // Predicated region
      $region37: #{tpu_custom_call.1} parent=35 // pred_check
        %p2947 = pneg %p89
      $region38: #{tpu_custom_call.1} parent=35 // pred_check_branch
        %2949 = sbr.rel (%p2947) target = $region40
      $region39: #{tpu_custom_call.1} parent=35 // pred_region
        %p2950 = scmp.lt.s32.totalorder %s14, 1
        %s2951 = scalar_select %p2950, %s14, 1
        %s2952 = smul.addr %s2951, 3
        %s2953 = smul.addr %s2952, 4
        %s2954 = scalar_lea.vmem %s2, %s2953
      $region40: #{tpu_custom_call.1} parent=35 // pred_fallthru
        _
    $region36: #{tpu_custom_call.1} parent=5 // pred_fallthru
      _
  $region6: #{tpu_custom_call.1} parent=0 // loop_footer
    %s12 = sadd.s32 1, %s8
  $region7: #{tpu_custom_call.1} parent=0 // loop_footer_branch
    %7 = sbr.rel target = $region3
  $region8: #{tpu_custom_call.1} parent=0 // loop_exit
    _

</llo_original>
